<compile_context>
chip_gen: v7x
topology: tpu7x:2x2x1
jax: 0.10.0
libtpu: 0.0.40
codegen_flags: <defaults>
</compile_context>

<pallas_src>
import jax
import jax.numpy as jnp
from jax import lax
from jax.experimental import pallas as pl
from jax.experimental.pallas import tpu as pltpu

VMEM = pltpu.MemorySpace.VMEM

# ------------------------------------------------------------------ static config
# Synthetic processors (deterministic, baked in):
#   s_P: categorical(tgt_len=3, not missing), continuous(2)           -> tgt_dim=5
#   d_P: continuous(2, missing), categorical(4, missing), continuous(1)
#        -> tgt_dim=7, miss_dim=2, s_dim=6, use_pri=None
STATICS_DIM, DYNAMICS_DIM, S_DIM, MISS_DIM = 5, 7, 6, 2
SEG_S = ((0, 3, 'softmax'), (3, 5, 'sigmoid'))
SEG_D = ((0, 2, 'sigmoid'), (2, 5, 'softmax'), (5, 6, 'sigmoid'), (6, 7, 'sigmoid'))

HIDDEN = 16
LAYERS = 3
INPUT_DIM = STATICS_DIM + DYNAMICS_DIM + S_DIM + MISS_DIM     # 20
OUT_F = 1 + MISS_DIM + DYNAMICS_DIM                           # [time | mask | dyn] = 10

BP = 8                            # batch rows padded to one sublane tile
H = HIDDEN
H2, H3 = 2 * H, 3 * H

# ---- packed slab layout (wrapper builds, kernel slices; keep in sync) -----------
# W_pre (40,128): rows 0:20  cols   0:32  emb_w       | row 20  cols 32:64  pos_w
#                 rows 0:32  cols  64:112 wih0 (miss_rnn L0 input)
#                 rows 0:4   cols 112:128 decay_w
#                 row  32:   biases [emb_b | pos_b | bih0 | decay_b]
XIN_W, DEC_W = 32, 8              # lane-padded widths of the two data slabs
PRE_ROWS, PRE_COLS, PRE_BIAS_R = 40, 128, 32
# W_step (80,240): X = [h0 | h1 | hd | out0_prev | y_prev] -> G = [gh0|gh1|ghd|gx1|gxd]
STEP_ROWS, STEP_COLS = 5 * H, 15 * H
# W_post (56,64):  rows 0:16  cols 0:5   statics_w    | cols 5:53  wihd_glob
#                  rows 16:32 cols 53:54 time_w       | cols 54:56 miss_w
#                  rows 32:48 cols 56:63 dynamics_w
#                  row  48:   biases [stat_b | time_b | miss_b | dyn_b]
POST_ROWS, POST_COLS = 56, 64
POST_GX_C0 = STATICS_DIM                      # 5
POST_HEAD_C0 = STATICS_DIM + H3               # 53
POST_BIAS_R = 48


# ------------------------------------------------------------------ kernel helpers
def _masked_seg_activation(x, segments, offset=0):
    """apply_activation without lane slicing/concat: whole-row sigmoid + a
    lane-mask softmax per softmax segment (iota compare keeps it on VPU/EUP)."""
    col = lax.broadcasted_iota(jnp.int32, x.shape, 1)
    out = jax.nn.sigmoid(x)
    for st, ed, kind in segments:
        if kind != 'softmax':
            continue
        m = (col >= st + offset) & (col < ed + offset)
        mx = jnp.max(jnp.where(m, x, -jnp.inf), axis=-1, keepdims=True)
        e = jnp.exp(x - mx)
        s = jnp.sum(jnp.where(m, e, 0.0), axis=-1, keepdims=True)
        out = jnp.where(m, e / s, out)          # exact division (off the hot path)
    return out


def _gru_gates(gx, gh, h):
    """PyTorch GRU cell, gate order [r, z, n]; all biases already folded in."""
    r = jax.nn.sigmoid(gx[:, 0:H] + gh[:, 0:H])
    u = jax.nn.sigmoid(gx[:, H:H2] + gh[:, H:H2])
    n = jnp.tanh(gx[:, H2:H3] + r * gh[:, H2:H3])
    return (1.0 - u) * n + u * h


# ------------------------------------------------------------------ fused kernel
def decoder_kernel(xin_ref, dec_ref, zlen_ref, wpre_ref, wstep_ref, bstep_ref,
                   wpost_ref, sta_out_ref, seq_out_ref,
                   gx0_s, beta_s, out1_s, outd_s):
    TB = xin_ref.shape[0]
    T = TB // BP
    f32 = jnp.float32

    glob = zlen_ref[:, 0:H]                     # (BP, H)
    h0 = zlen_ref[:, H:H2]                      # miss_rnn layer 0 init
    h1 = zlen_ref[:, H2:H3]                     # miss_rnn layer 1 init
    hd = zlen_ref[:, H3:4 * H]                  # dec rnn init
    lens = zlen_ref[:, 4 * H:4 * H + 1]         # (BP, 1) seq lengths (float, exact ints)

    # ---------- statics head + glob->dec-rnn constant: one MXU call --------------
    gg = jnp.dot(glob, wpost_ref[0:H, 0:POST_HEAD_C0], preferred_element_type=f32)
    stat_raw = gg[:, 0:STATICS_DIM] + wpost_ref[POST_BIAS_R:POST_BIAS_R + 1,
                                                0:STATICS_DIM]
    sta_out_ref[...] = _masked_seg_activation(stat_raw, SEG_S)
    gxd_c = gg[:, POST_GX_C0:POST_GX_C0 + H3]   # glob @ wihd[H:2H]   (BP, 3H)

    # ---------- hoisted over-time projections (all off the serial chain) ---------
    # Embedding: fc([sta|pad_dyn|pad_priv|pad_mask]) + TimeEncoding(pad_times)
    embte = (jnp.dot(xin_ref[...], wpre_ref[0:XIN_W, 0:2 * H2],
                     preferred_element_type=f32)
             + wpre_ref[PRE_BIAS_R:PRE_BIAS_R + 1, 0:2 * H2])        # (T*BP, 4H)
    emb = embte[:, 0:H2]
    te = embte[:, H2:2 * H2]
    tcol = lax.broadcasted_iota(jnp.int32, te.shape, 1)
    emb = emb + jnp.where(tcol == 0, te, jnp.sin(te))                # (T*BP, 2H)
    # miss_rnn layer-0 input projection (sta term + bih0 already inside)
    gx0_s[...] = (jnp.dot(emb, wpre_ref[0:H2, 2 * H2:2 * H2 + H3],
                          preferred_element_type=f32)
                  + wpre_ref[PRE_BIAS_R:PRE_BIAS_R + 1, 2 * H2:2 * H2 + H3])
    # decay gate: beta = exp(-relu([mask|lag] @ decay_w + decay_b))
    dec = (jnp.dot(dec_ref[...], wpre_ref[0:DEC_W, 2 * H2 + H3:PRE_COLS],
                   preferred_element_type=f32)
           + wpre_ref[PRE_BIAS_R:PRE_BIAS_R + 1, 2 * H2 + H3:PRE_COLS])
    beta_s[...] = jnp.exp(-jnp.maximum(dec, 0.0))

    # constant-over-step additive term of the fused per-step matmul:
    # [bhh0 | bhh1 | bhhd | bih1 | bihd + glob@wihd_glob]
    cstep = bstep_ref[...] + jnp.concatenate(
        [jnp.zeros((BP, 4 * H3), f32), gxd_c], axis=1)               # (BP, 15H)
    w_step = wstep_ref[...]                                          # (5H, 15H)

    # ---------- skewed / fused recurrence ----------------------------------------
    # Combined step s: miss_rnn-L0 computes t=s, miss_rnn-L1 computes t=s-1,
    # dec-rnn computes t=s-2.  All h-dependent projections are one MXU call.
    prev0 = jnp.zeros((BP, H), f32)      # out0[t-1]   (masked L0 output)
    prevy = jnp.zeros((BP, H), f32)      # beta[t-2] * out1[t-2]
    for s in range(T + 2):
        x_s = jnp.concatenate([h0, h1, hd, prev0, prevy], axis=1)        # (BP, 5H)
        g = jnp.dot(x_s, w_step, preferred_element_type=f32) + cstep     # (BP, 15H)

        if s < T:                                    # miss_rnn layer 0, t = s
            gx = gx0_s[s * BP:(s + 1) * BP, :]
            hn = _gru_gates(gx, g[:, 0:H3], h0)
            v = lens > float(s)
            prev0_n = jnp.where(v, hn, 0.0)
            h0 = jnp.where(v, hn, h0)
        else:
            prev0_n = prev0

        if 1 <= s <= T:                              # miss_rnn layer 1, t = s-1
            t = s - 1
            hn = _gru_gates(g[:, 3 * H3:4 * H3], g[:, H3:2 * H3], h1)
            v = lens > float(t)
            o1 = jnp.where(v, hn, 0.0)
            h1 = jnp.where(v, hn, h1)
            out1_s[t * BP:(t + 1) * BP, :] = o1             # 8-aligned, off chain
            prevy_n = beta_s[t * BP:(t + 1) * BP, :] * o1
        else:
            prevy_n = prevy

        if 2 <= s <= T + 1:                          # dec rnn, t = s-2
            t = s - 2
            hn = _gru_gates(g[:, 4 * H3:5 * H3], g[:, 2 * H3:3 * H3], hd)
            v = lens > float(t)
            hd = jnp.where(v, hn, hd)
            outd_s[t * BP:(t + 1) * BP, :] = jnp.where(v, hn, 0.0)

        prev0 = prev0_n
        prevy = prevy_n

    # ---------- heads on the full sequences: one MXU call -------------------------
    big = jnp.concatenate([out1_s[...], outd_s[...]], axis=1)            # (T*BP, 2H)
    raw = (jnp.dot(big, wpost_ref[H:H3, POST_HEAD_C0:POST_HEAD_C0 + OUT_F],
                   preferred_element_type=f32)
           + wpost_ref[POST_BIAS_R:POST_BIAS_R + 1,
                       POST_HEAD_C0:POST_HEAD_C0 + OUT_F])               # (T*BP, 10)
    # sigmoid on time/mask/dyn-sigmoid lanes, masked softmax on d_P categorical
    act = _masked_seg_activation(raw, SEG_D, offset=1 + MISS_DIM)
    ocol = lax.broadcasted_iota(jnp.int32, act.shape, 1)
    ptimes = xin_ref[:, INPUT_DIM:INPUT_DIM + 1]                         # pad_times
    seq_out_ref[...] = act + jnp.where(ocol == 0, ptimes, 0.0)


# ------------------------------------------------------------------ wrapper
def pad_zero(x):
    return jnp.concatenate([jnp.zeros_like(x[:, :1, :]), x[:, :-1, :]], axis=1)


def _pack_weights(params):
    f32 = jnp.float32
    mr0, mr1, dr = params['miss_rnn'][0], params['miss_rnn'][1], params['dec_rnn']

    wpre = jnp.zeros((PRE_ROWS, PRE_COLS), f32)
    wpre = wpre.at[0:INPUT_DIM, 0:H2].set(params['emb_w'])
    wpre = wpre.at[INPUT_DIM:INPUT_DIM + 1, H2:2 * H2].set(params['pos_w'])
    wpre = wpre.at[0:H2, 2 * H2:2 * H2 + H3].set(mr0['wih'])
    wpre = wpre.at[0:2 * MISS_DIM, 2 * H2 + H3:PRE_COLS].set(params['decay_w'])
    wpre = wpre.at[PRE_BIAS_R, 0:H2].set(params['emb_b'][0])
    wpre = wpre.at[PRE_BIAS_R, H2:2 * H2].set(params['pos_b'][0])
    wpre = wpre.at[PRE_BIAS_R, 2 * H2:2 * H2 + H3].set(mr0['bih'][0])
    wpre = wpre.at[PRE_BIAS_R, 2 * H2 + H3:PRE_COLS].set(params['decay_b'][0])

    wstep = jnp.zeros((STEP_ROWS, STEP_COLS), f32)
    wstep = wstep.at[0:H, 0:H3].set(mr0['whh'])
    wstep = wstep.at[H:H2, H3:2 * H3].set(mr1['whh'])
    wstep = wstep.at[H2:H3, 2 * H3:3 * H3].set(dr['whh'])
    wstep = wstep.at[H3:4 * H, 3 * H3:4 * H3].set(mr1['wih'])
    wstep = wstep.at[4 * H:5 * H, 4 * H3:5 * H3].set(dr['wih'][0:H])
    bstep = jnp.concatenate(
        [mr0['bhh'], mr1['bhh'], dr['bhh'], mr1['bih'], dr['bih']], axis=1)

    wpost = jnp.zeros((POST_ROWS, POST_COLS), f32)
    wpost = wpost.at[0:H, 0:STATICS_DIM].set(params['statics_w'])
    wpost = wpost.at[0:H, POST_GX_C0:POST_GX_C0 + H3].set(dr['wih'][H:H2])
    wpost = wpost.at[H:H2, POST_HEAD_C0:POST_HEAD_C0 + 1].set(params['time_w'])
    wpost = wpost.at[H:H2, POST_HEAD_C0 + 1:POST_HEAD_C0 + 1 + MISS_DIM].set(
        params['miss_w'])
    wpost = wpost.at[H2:H3, POST_HEAD_C0 + 1 + MISS_DIM:POST_HEAD_C0 + OUT_F].set(
        params['dynamics_w'])
    wpost = wpost.at[POST_BIAS_R, 0:STATICS_DIM].set(params['statics_b'][0])
    wpost = wpost.at[POST_BIAS_R, POST_HEAD_C0:POST_HEAD_C0 + 1].set(params['time_b'][0])
    wpost = wpost.at[POST_BIAS_R, POST_HEAD_C0 + 1:POST_HEAD_C0 + 1 + MISS_DIM].set(
        params['miss_b'][0])
    wpost = wpost.at[POST_BIAS_R, POST_HEAD_C0 + 1 + MISS_DIM:POST_HEAD_C0 + OUT_F].set(
        params['dynamics_b'][0])
    return wpre, wstep, bstep, wpost


def decoder_forward(params, embed, sta, dynamics, lag, mask, priv, times, seq_len):
    """Decoder.forward(embed, sta, dynamics, lag, mask, priv, times, seq_len, forcing>=1)."""
    z, mu, logvar = embed
    B, T, dyn_dim = dynamics.shape
    assert B <= BP and dyn_dim == DYNAMICS_DIM
    # TODO(synk): for B > 8 add a batch grid (dimension_semantics=("parallel",))
    # so both v7x TensorCores get work; a single program suffices at these sizes.
    miss = mask.shape[-1]

    def tmj(x):   # (B,T,F) -> time-major, batch padded to BP sublanes: (T*BP, F)
        xt = jnp.transpose(x, (1, 0, 2))
        xt = jnp.pad(xt, ((0, 0), (0, BP - B), (0, 0)))
        return xt.reshape(T * BP, x.shape[-1])

    sta_e = jnp.broadcast_to(sta[:, None, :], (B, T, STATICS_DIM))
    x_cat = jnp.concatenate(
        [sta_e, pad_zero(dynamics), pad_zero(priv), pad_zero(mask), pad_zero(times)],
        axis=-1)                                                        # (B,T,21)
    x_in = jnp.pad(tmj(x_cat), ((0, 0), (0, XIN_W - (INPUT_DIM + 1))))  # (T*BP,32)
    dec_in = jnp.pad(tmj(jnp.concatenate([mask, lag], axis=-1)),
                     ((0, 0), (0, DEC_W - 2 * miss)))                   # (T*BP,8)
    zlen = jnp.zeros((BP, 4 * H + 1), jnp.float32)
    zlen = zlen.at[:B, 0:4 * H].set(z)
    zlen = zlen.at[:B, 4 * H].set(seq_len.astype(jnp.float32))

    wpre, wstep, bstep, wpost = _pack_weights(params)

    vspec = pl.BlockSpec(memory_space=VMEM)
    sta_out, slab = pl.pallas_call(
        decoder_kernel,
        out_shape=(jax.ShapeDtypeStruct((BP, STATICS_DIM), jnp.float32),
                   jax.ShapeDtypeStruct((T * BP, OUT_F), jnp.float32)),
        in_specs=[vspec] * 7,
        out_specs=(vspec, vspec),
        scratch_shapes=[pltpu.VMEM((T * BP, H3), jnp.float32),   # hoisted gx0
                        pltpu.VMEM((T * BP, H), jnp.float32),    # hoisted beta
                        pltpu.VMEM((T * BP, H), jnp.float32),    # miss_rnn outputs
                        pltpu.VMEM((T * BP, H), jnp.float32)],   # dec rnn outputs
        compiler_params=pltpu.CompilerParams(vmem_limit_bytes=32 * 1024 * 1024),
        cost_estimate=pl.CostEstimate(flops=4_000_000, transcendentals=40_000,
                                      bytes_accessed=200_000),
    )(x_in, dec_in, zlen, wpre, wstep, bstep, wpost)

    gen_sta = sta_out[:B]
    slab = jnp.transpose(slab.reshape(T, BP, OUT_F)[:, :B], (1, 0, 2))  # (B,T,10)
    gen_times = slab[..., 0:1]
    gen_mask = slab[..., 1:1 + MISS_DIM]
    dyn_out = slab[..., 1 + MISS_DIM:]
    return gen_sta, dyn_out, gen_mask, gen_times, mu, logvar


# ------------------------------------------------------------------ pure-JAX reference
def _apply_activation_ref(x, segments):
    parts = []
    for st, ed, kind in segments:
        seg = x[:, st:ed]
        parts.append(jax.nn.softmax(seg, axis=-1) if kind == 'softmax'
                     else jax.nn.sigmoid(seg))
    return jnp.concatenate(parts, axis=-1)


def decoder_reference(params, embed, sta, dynamics, lag, mask, priv, times, seq_len):
    """Line-by-line port of the PyTorch forward (forcing >= 1, eval mode)."""
    z, mu, logvar = embed
    B, T, _ = dynamics.shape
    glob = z[:, :H]
    gen_sta = _apply_activation_ref(glob @ params['statics_w'] + params['statics_b'],
                                    SEG_S)
    h0, h1, hd = z[:, H:H2], z[:, H2:H3], z[:, H3:4 * H]

    pad_times = pad_zero(times)
    sta_e = jnp.broadcast_to(sta[:, None, :], (B, T, STATICS_DIM))
    x = jnp.concatenate([sta_e, pad_zero(dynamics), pad_zero(priv), pad_zero(mask)],
                        axis=-1)
    x = x @ params['emb_w'] + params['emb_b']
    te = pad_times @ params['pos_w'] + params['pos_b']
    x = x + jnp.concatenate([te[:, :, 0:1], jnp.sin(te[:, :, 1:])], axis=-1)

    def gru_layer(xseq, h, p):
        outs = []
        for t in range(T):
            gx = xseq[:, t] @ p['wih'] + p['bih']
            gh = h @ p['whh'] + p['bhh']
            r = jax.nn.sigmoid(gx[:, 0:H] + gh[:, 0:H])
            u = jax.nn.sigmoid(gx[:, H:H2] + gh[:, H:H2])
            n = jnp.tanh(gx[:, H2:H3] + r * gh[:, H2:H3])
            hn = (1.0 - u) * n + u * h
            v = (seq_len > t)[:, None]
            outs.append(jnp.where(v, hn, 0.0))
            h = jnp.where(v, hn, h)
        return jnp.stack(outs, axis=1)

    o0 = gru_layer(x, h0, params['miss_rnn'][0])
    out = gru_layer(o0, h1, params['miss_rnn'][1])
    gen_times = jax.nn.sigmoid(out @ params['time_w'] + params['time_b']) + pad_times
    gen_mask = jax.nn.sigmoid(out @ params['miss_w'] + params['miss_b'])
    beta = jnp.exp(-jnp.maximum(
        jnp.concatenate([mask, lag], axis=-1) @ params['decay_w'] + params['decay_b'],
        0.0))
    y = jnp.concatenate([beta * out,
                         jnp.broadcast_to(glob[:, None, :], (B, T, H))], axis=-1)
    o1 = gru_layer(y, hd, params['dec_rnn'])
    dyn = o1 @ params['dynamics_w'] + params['dynamics_b']
    dyn = _apply_activation_ref(dyn.reshape(-1, DYNAMICS_DIM),
                                SEG_D).reshape(B, T, DYNAMICS_DIM)
    return gen_sta, dyn, gen_mask, gen_times, mu, logvar


# ------------------------------------------------------------------ params
def make_params(key, hidden=HIDDEN, layers=LAYERS):
    keys = iter(jax.random.split(key, 48))

    def p(shape):
        return jax.random.uniform(next(keys), shape, jnp.float32, -0.2, 0.2)

    D2 = 2 * hidden
    return {
        # Embedding(20, 2H) + TimeEncoding(2H)
        'emb_w': p((INPUT_DIM, D2)), 'emb_b': p((1, D2)),
        'pos_w': p((1, D2)), 'pos_b': p((1, D2)),
        # miss_rnn GRU(2H, H, layers-1) — PyTorch gate order [r, z, n]
        'miss_rnn': [dict(wih=p((D2 if l == 0 else hidden, 3 * hidden)),
                          whh=p((hidden, 3 * hidden)),
                          bih=p((1, 3 * hidden)), bhh=p((1, 3 * hidden)))
                     for l in range(layers - 1)],
        # rnn GRU(2H, H, 1)
        'dec_rnn': dict(wih=p((D2, 3 * hidden)), whh=p((hidden, 3 * hidden)),
                        bih=p((1, 3 * hidden)), bhh=p((1, 3 * hidden))),
        'statics_w': p((hidden, STATICS_DIM)), 'statics_b': p((1, STATICS_DIM)),
        'dynamics_w': p((hidden, DYNAMICS_DIM)), 'dynamics_b': p((1, DYNAMICS_DIM)),
        'decay_w': p((2 * MISS_DIM, hidden)), 'decay_b': p((1, hidden)),
        'miss_w': p((hidden, MISS_DIM)), 'miss_b': p((1, MISS_DIM)),
        'time_w': p((hidden, 1)), 'time_b': p((1, 1)),
    }


# ------------------------------------------------------------------ main
if __name__ == "__main__":
    B, T = 2, 8
    key = jax.random.PRNGKey(0)
    kp, kz, kmu, klv, k1, k2, k3, k4, k5, k6 = jax.random.split(key, 10)
    params = make_params(kp)

    z = jax.random.normal(kz, (B, (LAYERS + 1) * H), jnp.float32)       # (B, 4H)
    mu = jax.random.normal(kmu, (B, (LAYERS + 1) * H), jnp.float32)
    logvar = jax.random.normal(klv, (B, (LAYERS + 1) * H), jnp.float32)
    sta = jax.random.uniform(k1, (B, STATICS_DIM), jnp.float32)
    dyn = jax.random.uniform(k2, (B, T, DYNAMICS_DIM), jnp.float32)
    lag = jax.random.uniform(k3, (B, T, MISS_DIM), jnp.float32)
    mask = (jax.random.uniform(k4, (B, T, MISS_DIM)) > 0.5).astype(jnp.float32)
    priv = jax.random.uniform(k5, (B, T, S_DIM), jnp.float32)
    times = jnp.cumsum(jax.random.uniform(k6, (B, T, 1), jnp.float32), axis=1)
    seq_len = jnp.array([T, 5], jnp.int32)   # max(seq_len) == T (pack/pad contract)

    fwd = jax.jit(decoder_forward)
    outs = jax.block_until_ready(
        fwd(params, (z, mu, logvar), sta, dyn, lag, mask, priv, times, seq_len))
    gen_sta, dyn_out, gen_mask, gen_times, mu_o, logvar_o = outs

    assert gen_sta.shape == (B, STATICS_DIM)
    assert dyn_out.shape == (B, T, DYNAMICS_DIM)
    assert gen_mask.shape == (B, T, MISS_DIM)
    assert gen_times.shape == (B, T, 1)
    assert mu_o.shape == mu.shape and logvar_o.shape == logvar.shape

    with jax.default_matmul_precision("highest"):
        ref = decoder_reference(params, (z, mu, logvar), sta, dyn, lag, mask, priv,
                                times, seq_len)
    ref = jax.block_until_ready(ref)
    for got, want, name in zip(outs[:4], ref[:4],
                               ("gen_sta", "dyn", "gen_mask", "gen_times")):
        assert bool(jnp.all(jnp.isfinite(got))), name
        err = float(jnp.max(jnp.abs(got - want)))
        assert err < 1e-3, f"{name} mismatch vs reference: max|diff|={err:.3e}"
    print("KERNEL_OK")
</pallas_src>

<mosaic_0001>
module attributes {stable_mosaic.version = 11 : i64} {
  func.func @decoder_kernel(%arg0: memref<64x32xf32, #tpu.memory_space<vmem>>, %arg1: memref<64x8xf32, #tpu.memory_space<vmem>>, %arg2: memref<8x65xf32, #tpu.memory_space<vmem>>, %arg3: memref<40x128xf32, #tpu.memory_space<vmem>>, %arg4: memref<80x240xf32, #tpu.memory_space<vmem>>, %arg5: memref<1x240xf32, #tpu.memory_space<vmem>>, %arg6: memref<56x64xf32, #tpu.memory_space<vmem>>, %arg7: memref<8x5xf32, #tpu.memory_space<vmem>>, %arg8: memref<64x10xf32, #tpu.memory_space<vmem>>, %arg9: memref<64x48xf32, #tpu.memory_space<vmem>>, %arg10: memref<64x16xf32, #tpu.memory_space<vmem>>, %arg11: memref<64x16xf32, #tpu.memory_space<vmem>>, %arg12: memref<64x16xf32, #tpu.memory_space<vmem>>) attributes {dimension_semantics = [], scalar_prefetch = 0 : i64, scratch_operands = 4 : i64, tpu.core_type = #tpu.core_type<tc>} {
    %c0 = arith.constant 0 : index
    %c0_0 = arith.constant 0 : index
    %0 = vector.load %arg2[%c0, %c0_0] : memref<8x65xf32, #tpu.memory_space<vmem>>, vector<8x16xf32>
    %c0_1 = arith.constant 0 : index
    %c16 = arith.constant 16 : index
    %1 = vector.load %arg2[%c0_1, %c16] : memref<8x65xf32, #tpu.memory_space<vmem>>, vector<8x16xf32>
    %c0_2 = arith.constant 0 : index
    %c32 = arith.constant 32 : index
    %2 = vector.load %arg2[%c0_2, %c32] : memref<8x65xf32, #tpu.memory_space<vmem>>, vector<8x16xf32>
    %c0_3 = arith.constant 0 : index
    %c48 = arith.constant 48 : index
    %3 = vector.load %arg2[%c0_3, %c48] : memref<8x65xf32, #tpu.memory_space<vmem>>, vector<8x16xf32>
    %c0_4 = arith.constant 0 : index
    %c64 = arith.constant 64 : index
    %4 = vector.load %arg2[%c0_4, %c64] : memref<8x65xf32, #tpu.memory_space<vmem>>, vector<8x1xf32>
    %c0_5 = arith.constant 0 : index
    %c0_6 = arith.constant 0 : index
    %5 = vector.load %arg6[%c0_5, %c0_6] : memref<56x64xf32, #tpu.memory_space<vmem>>, vector<16x53xf32>
    %cst = arith.constant dense<0.000000e+00> : vector<8x53xf32>
    %6 = tpu.matmul %0, %5, %cst {dimension_numbers = #tpu.dot_dimension_numbers<[1], [0], [0], [1], [0, 0, 1, 1], [], []>} : vector<8x16xf32>, vector<16x53xf32>, vector<8x53xf32> -> vector<8x53xf32>
    %7 = vector.extract_strided_slice %6 {offsets = [0, 0], sizes = [8, 5], strides = [1, 1]} : vector<8x53xf32> to vector<8x5xf32>
    %c48_7 = arith.constant 48 : index
    %c0_8 = arith.constant 0 : index
    %8 = vector.load %arg6[%c48_7, %c0_8] : memref<56x64xf32, #tpu.memory_space<vmem>>, vector<1x5xf32>
    %9 = vector.broadcast %8 : vector<1x5xf32> to vector<8x5xf32>
    %10 = arith.addf %7, %9 : vector<8x5xf32>
    %11 = tpu.iota {dimensions = array<i32: 1>} : vector<8x5xi32>
    %12 = arith.negf %10 : vector<8x5xf32>
    %13 = math.exp %12 : vector<8x5xf32>
    %cst_9 = arith.constant 1.000000e+00 : f32
    %14 = vector.broadcast %cst_9 : f32 to vector<8x5xf32>
    %15 = arith.addf %14, %13 : vector<8x5xf32>
    %16 = arith.divf %14, %15 : vector<8x5xf32>
    %c0_i32 = arith.constant 0 : i32
    %17 = vector.broadcast %c0_i32 : i32 to vector<8x5xi32>
    %18 = arith.cmpi sge, %11, %17 : vector<8x5xi32>
    %c3_i32 = arith.constant 3 : i32
    %19 = vector.broadcast %c3_i32 : i32 to vector<8x5xi32>
    %20 = arith.cmpi slt, %11, %19 : vector<8x5xi32>
    %21 = arith.andi %18, %20 : vector<8x5xi1>
    %cst_10 = arith.constant 0xFF800000 : f32
    %22 = vector.broadcast %cst_10 : f32 to vector<8x5xf32>
    %23 = arith.select %21, %10, %22 : vector<8x5xi1>, vector<8x5xf32>
    %cst_11 = arith.constant dense<0xFF800000> : vector<8xf32>
    %24 = vector.multi_reduction <maximumf>, %23, %cst_11 [1] : vector<8x5xf32> to vector<8xf32>
    %25 = vector.shape_cast %24 : vector<8xf32> to vector<8x1xf32>
    %26 = vector.broadcast %25 : vector<8x1xf32> to vector<8x5xf32>
    %27 = arith.subf %10, %26 : vector<8x5xf32>
    %28 = math.exp %27 : vector<8x5xf32>
    %cst_12 = arith.constant 0.000000e+00 : f32
    %29 = vector.broadcast %cst_12 : f32 to vector<8x5xf32>
    %30 = arith.select %21, %28, %29 : vector<8x5xi1>, vector<8x5xf32>
    %cst_13 = arith.constant dense<0.000000e+00> : vector<8xf32>
    %31 = vector.multi_reduction <add>, %30, %cst_13 [1] : vector<8x5xf32> to vector<8xf32>
    %32 = vector.shape_cast %31 : vector<8xf32> to vector<8x1xf32>
    %33 = vector.broadcast %32 : vector<8x1xf32> to vector<8x5xf32>
    %34 = arith.divf %28, %33 : vector<8x5xf32>
    %35 = arith.select %21, %34, %16 : vector<8x5xi1>, vector<8x5xf32>
    %c0_14 = arith.constant 0 : index
    %c0_15 = arith.constant 0 : index
    %36 = vector.load %arg7[%c0_14, %c0_15] : memref<8x5xf32, #tpu.memory_space<vmem>>, vector<8x5xf32>
    tpu.vector_store %arg7[%c0_14, %c0_15], %35 {strides = array<i32>} : memref<8x5xf32, #tpu.memory_space<vmem>>, vector<8x5xf32>,
    %37 = vector.extract_strided_slice %6 {offsets = [0, 5], sizes = [8, 48], strides = [1, 1]} : vector<8x53xf32> to vector<8x48xf32>
    %c0_16 = arith.constant 0 : index
    %c0_17 = arith.constant 0 : index
    %38 = vector.load %arg0[%c0_16, %c0_17] : memref<64x32xf32, #tpu.memory_space<vmem>>, vector<64x32xf32>
    %c0_18 = arith.constant 0 : index
    %c0_19 = arith.constant 0 : index
    %39 = vector.load %arg3[%c0_18, %c0_19] : memref<40x128xf32, #tpu.memory_space<vmem>>, vector<32x64xf32>
    %cst_20 = arith.constant dense<0.000000e+00> : vector<64x64xf32>
    %40 = tpu.matmul %38, %39, %cst_20 {dimension_numbers = #tpu.dot_dimension_numbers<[1], [0], [0], [1], [0, 0, 1, 1], [], []>} : vector<64x32xf32>, vector<32x64xf32>, vector<64x64xf32> -> vector<64x64xf32>
    %c32_21 = arith.constant 32 : index
    %c0_22 = arith.constant 0 : index
    %41 = vector.load %arg3[%c32_21, %c0_22] : memref<40x128xf32, #tpu.memory_space<vmem>>, vector<1x64xf32>
    %42 = vector.broadcast %41 : vector<1x64xf32> to vector<64x64xf32>
    %43 = arith.addf %40, %42 : vector<64x64xf32>
    %44 = vector.extract_strided_slice %43 {offsets = [0, 0], sizes = [64, 32], strides = [1, 1]} : vector<64x64xf32> to vector<64x32xf32>
    %45 = vector.extract_strided_slice %43 {offsets = [0, 32], sizes = [64, 32], strides = [1, 1]} : vector<64x64xf32> to vector<64x32xf32>
    %46 = tpu.iota {dimensions = array<i32: 1>} : vector<64x32xi32>
    %c0_i32_23 = arith.constant 0 : i32
    %47 = vector.broadcast %c0_i32_23 : i32 to vector<64x32xi32>
    %48 = arith.cmpi eq, %46, %47 : vector<64x32xi32>
    %49 = math.sin %45 : vector<64x32xf32>
    %50 = arith.select %48, %45, %49 : vector<64x32xi1>, vector<64x32xf32>
    %51 = arith.addf %44, %50 : vector<64x32xf32>
    %c0_24 = arith.constant 0 : index
    %c64_25 = arith.constant 64 : index
    %52 = vector.load %arg3[%c0_24, %c64_25] : memref<40x128xf32, #tpu.memory_space<vmem>>, vector<32x48xf32>
    %cst_26 = arith.constant dense<0.000000e+00> : vector<64x48xf32>
    %53 = tpu.matmul %51, %52, %cst_26 {dimension_numbers = #tpu.dot_dimension_numbers<[1], [0], [0], [1], [0, 0, 1, 1], [], []>} : vector<64x32xf32>, vector<32x48xf32>, vector<64x48xf32> -> vector<64x48xf32>
    %c32_27 = arith.constant 32 : index
    %c64_28 = arith.constant 64 : index
    %54 = vector.load %arg3[%c32_27, %c64_28] : memref<40x128xf32, #tpu.memory_space<vmem>>, vector<1x48xf32>
    %55 = vector.broadcast %54 : vector<1x48xf32> to vector<64x48xf32>
    %56 = arith.addf %53, %55 : vector<64x48xf32>
    %c0_29 = arith.constant 0 : index
    %c0_30 = arith.constant 0 : index
    %57 = vector.load %arg9[%c0_29, %c0_30] : memref<64x48xf32, #tpu.memory_space<vmem>>, vector<64x48xf32>
    tpu.vector_store %arg9[%c0_29, %c0_30], %56 {strides = array<i32>} : memref<64x48xf32, #tpu.memory_space<vmem>>, vector<64x48xf32>,
    %c0_31 = arith.constant 0 : index
    %c0_32 = arith.constant 0 : index
    %58 = vector.load %arg1[%c0_31, %c0_32] : memref<64x8xf32, #tpu.memory_space<vmem>>, vector<64x8xf32>
    %c0_33 = arith.constant 0 : index
    %c112 = arith.constant 112 : index
    %59 = vector.load %arg3[%c0_33, %c112] : memref<40x128xf32, #tpu.memory_space<vmem>>, vector<8x16xf32>
    %cst_34 = arith.constant dense<0.000000e+00> : vector<64x16xf32>
    %60 = tpu.matmul %58, %59, %cst_34 {dimension_numbers = #tpu.dot_dimension_numbers<[1], [0], [0], [1], [0, 0, 1, 1], [], []>} : vector<64x8xf32>, vector<8x16xf32>, vector<64x16xf32> -> vector<64x16xf32>
    %c32_35 = arith.constant 32 : index
    %c112_36 = arith.constant 112 : index
    %61 = vector.load %arg3[%c32_35, %c112_36] : memref<40x128xf32, #tpu.memory_space<vmem>>, vector<1x16xf32>
    %62 = vector.broadcast %61 : vector<1x16xf32> to vector<64x16xf32>
    %63 = arith.addf %60, %62 : vector<64x16xf32>
    %cst_37 = arith.constant 0.000000e+00 : f32
    %64 = vector.broadcast %cst_37 : f32 to vector<64x16xf32>
    %65 = arith.maximumf %63, %64 : vector<64x16xf32>
    %cst_38 = arith.constant 0.000000e+00 : f32
    %66 = vector.broadcast %cst_38 : f32 to vector<64x16xf32>
    %67 = arith.subf %66, %65 : vector<64x16xf32>
    %68 = math.exp %67 : vector<64x16xf32>
    %c0_39 = arith.constant 0 : index
    %c0_40 = arith.constant 0 : index
    %69 = vector.load %arg10[%c0_39, %c0_40] : memref<64x16xf32, #tpu.memory_space<vmem>>, vector<64x16xf32>
    tpu.vector_store %arg10[%c0_39, %c0_40], %68 {strides = array<i32>} : memref<64x16xf32, #tpu.memory_space<vmem>>, vector<64x16xf32>,
    %c0_41 = arith.constant 0 : index
    %c0_42 = arith.constant 0 : index
    %70 = vector.load %arg5[%c0_41, %c0_42] : memref<1x240xf32, #tpu.memory_space<vmem>>, vector<1x240xf32>
    %cst_43 = arith.constant 0.000000e+00 : f32
    %71 = vector.broadcast %cst_43 : f32 to vector<8x192xf32>
    %72 = tpu.concatenate %71, %37 in 1 : vector<8x192xf32>, vector<8x48xf32> -> vector<8x240xf32>
    %73 = vector.broadcast %70 : vector<1x240xf32> to vector<8x240xf32>
    %74 = arith.addf %73, %72 : vector<8x240xf32>
    %c0_44 = arith.constant 0 : index
    %c0_45 = arith.constant 0 : index
    %75 = vector.load %arg4[%c0_44, %c0_45] : memref<80x240xf32, #tpu.memory_space<vmem>>, vector<80x240xf32>
    %cst_46 = arith.constant 0.000000e+00 : f32
    %76 = vector.broadcast %cst_46 : f32 to vector<8x16xf32>
    %cst_47 = arith.constant 0.000000e+00 : f32
    %77 = vector.broadcast %cst_47 : f32 to vector<8x16xf32>
    %78 = tpu.concatenate %1, %2, %3, %76, %77 in 1 : vector<8x16xf32>, vector<8x16xf32>, vector<8x16xf32>, vector<8x16xf32>, vector<8x16xf32> -> vector<8x80xf32>
    %cst_48 = arith.constant dense<0.000000e+00> : vector<8x240xf32>
    %79 = tpu.matmul %78, %75, %cst_48 {dimension_numbers = #tpu.dot_dimension_numbers<[1], [0], [0], [1], [0, 0, 1, 1], [], []>} : vector<8x80xf32>, vector<80x240xf32>, vector<8x240xf32> -> vector<8x240xf32>
    %80 = arith.addf %79, %74 : vector<8x240xf32>
    %c0_49 = arith.constant 0 : index
    %c0_50 = arith.constant 0 : index
    %81 = vector.load %arg9[%c0_49, %c0_50] : memref<64x48xf32, #tpu.memory_space<vmem>>, vector<8x48xf32>
    %82 = vector.extract_strided_slice %80 {offsets = [0, 0], sizes = [8, 48], strides = [1, 1]} : vector<8x240xf32> to vector<8x48xf32>
    %83 = vector.extract_strided_slice %81 {offsets = [0, 0], sizes = [8, 16], strides = [1, 1]} : vector<8x48xf32> to vector<8x16xf32>
    %84 = vector.extract_strided_slice %82 {offsets = [0, 0], sizes = [8, 16], strides = [1, 1]} : vector<8x48xf32> to vector<8x16xf32>
    %85 = arith.addf %83, %84 : vector<8x16xf32>
    %86 = arith.negf %85 : vector<8x16xf32>
    %87 = math.exp %86 : vector<8x16xf32>
    %cst_51 = arith.constant 1.000000e+00 : f32
    %88 = vector.broadcast %cst_51 : f32 to vector<8x16xf32>
    %89 = arith.addf %88, %87 : vector<8x16xf32>
    %90 = arith.divf %88, %89 : vector<8x16xf32>
    %91 = vector.extract_strided_slice %81 {offsets = [0, 16], sizes = [8, 16], strides = [1, 1]} : vector<8x48xf32> to vector<8x16xf32>
    %92 = vector.extract_strided_slice %82 {offsets = [0, 16], sizes = [8, 16], strides = [1, 1]} : vector<8x48xf32> to vector<8x16xf32>
    %93 = arith.addf %91, %92 : vector<8x16xf32>
    %94 = arith.negf %93 : vector<8x16xf32>
    %95 = math.exp %94 : vector<8x16xf32>
    %cst_52 = arith.constant 1.000000e+00 : f32
    %96 = vector.broadcast %cst_52 : f32 to vector<8x16xf32>
    %97 = arith.addf %96, %95 : vector<8x16xf32>
    %98 = arith.divf %96, %97 : vector<8x16xf32>
    %99 = vector.extract_strided_slice %81 {offsets = [0, 32], sizes = [8, 16], strides = [1, 1]} : vector<8x48xf32> to vector<8x16xf32>
    %100 = vector.extract_strided_slice %82 {offsets = [0, 32], sizes = [8, 16], strides = [1, 1]} : vector<8x48xf32> to vector<8x16xf32>
    %101 = arith.mulf %90, %100 : vector<8x16xf32>
    %102 = arith.addf %99, %101 : vector<8x16xf32>
    %103 = math.tanh %102 : vector<8x16xf32>
    %cst_53 = arith.constant 1.000000e+00 : f32
    %104 = vector.broadcast %cst_53 : f32 to vector<8x16xf32>
    %105 = arith.subf %104, %98 : vector<8x16xf32>
    %106 = arith.mulf %105, %103 : vector<8x16xf32>
    %107 = arith.mulf %98, %1 : vector<8x16xf32>
    %108 = arith.addf %106, %107 : vector<8x16xf32>
    %cst_54 = arith.constant 0.000000e+00 : f32
    %109 = vector.broadcast %cst_54 : f32 to vector<8x1xf32>
    %110 = arith.cmpf ogt, %4, %109 : vector<8x1xf32>
    %cst_55 = arith.constant 0.000000e+00 : f32
    %111 = vector.shape_cast %110 : vector<8x1xi1> to vector<8x1xi1>
    %112 = vector.broadcast %111 : vector<8x1xi1> to vector<8x16xi1>
    %113 = vector.broadcast %cst_55 : f32 to vector<8x16xf32>
    %114 = arith.select %112, %108, %113 : vector<8x16xi1>, vector<8x16xf32>
    %115 = vector.shape_cast %110 : vector<8x1xi1> to vector<8x1xi1>
    %116 = vector.broadcast %115 : vector<8x1xi1> to vector<8x16xi1>
    %117 = arith.select %116, %108, %1 : vector<8x16xi1>, vector<8x16xf32>
    %118 = tpu.concatenate %117, %2, %3, %114, %77 in 1 : vector<8x16xf32>, vector<8x16xf32>, vector<8x16xf32>, vector<8x16xf32>, vector<8x16xf32> -> vector<8x80xf32>
    %cst_56 = arith.constant dense<0.000000e+00> : vector<8x240xf32>
    %119 = tpu.matmul %118, %75, %cst_56 {dimension_numbers = #tpu.dot_dimension_numbers<[1], [0], [0], [1], [0, 0, 1, 1], [], []>} : vector<8x80xf32>, vector<80x240xf32>, vector<8x240xf32> -> vector<8x240xf32>
    %120 = arith.addf %119, %74 : vector<8x240xf32>
    %c8 = arith.constant 8 : index
    %c0_57 = arith.constant 0 : index
    %121 = vector.load %arg9[%c8, %c0_57] : memref<64x48xf32, #tpu.memory_space<vmem>>, vector<8x48xf32>
    %122 = vector.extract_strided_slice %120 {offsets = [0, 0], sizes = [8, 48], strides = [1, 1]} : vector<8x240xf32> to vector<8x48xf32>
    %123 = vector.extract_strided_slice %121 {offsets = [0, 0], sizes = [8, 16], strides = [1, 1]} : vector<8x48xf32> to vector<8x16xf32>
    %124 = vector.extract_strided_slice %122 {offsets = [0, 0], sizes = [8, 16], strides = [1, 1]} : vector<8x48xf32> to vector<8x16xf32>
    %125 = arith.addf %123, %124 : vector<8x16xf32>
    %126 = arith.negf %125 : vector<8x16xf32>
    %127 = math.exp %126 : vector<8x16xf32>
    %cst_58 = arith.constant 1.000000e+00 : f32
    %128 = vector.broadcast %cst_58 : f32 to vector<8x16xf32>
    %129 = arith.addf %128, %127 : vector<8x16xf32>
    %130 = arith.divf %128, %129 : vector<8x16xf32>
    %131 = vector.extract_strided_slice %121 {offsets = [0, 16], sizes = [8, 16], strides = [1, 1]} : vector<8x48xf32> to vector<8x16xf32>
    %132 = vector.extract_strided_slice %122 {offsets = [0, 16], sizes = [8, 16], strides = [1, 1]} : vector<8x48xf32> to vector<8x16xf32>
    %133 = arith.addf %131, %132 : vector<8x16xf32>
    %134 = arith.negf %133 : vector<8x16xf32>
    %135 = math.exp %134 : vector<8x16xf32>
    %cst_59 = arith.constant 1.000000e+00 : f32
    %136 = vector.broadcast %cst_59 : f32 to vector<8x16xf32>
    %137 = arith.addf %136, %135 : vector<8x16xf32>
    %138 = arith.divf %136, %137 : vector<8x16xf32>
    %139 = vector.extract_strided_slice %121 {offsets = [0, 32], sizes = [8, 16], strides = [1, 1]} : vector<8x48xf32> to vector<8x16xf32>
    %140 = vector.extract_strided_slice %122 {offsets = [0, 32], sizes = [8, 16], strides = [1, 1]} : vector<8x48xf32> to vector<8x16xf32>
    %141 = arith.mulf %130, %140 : vector<8x16xf32>
    %142 = arith.addf %139, %141 : vector<8x16xf32>
    %143 = math.tanh %142 : vector<8x16xf32>
    %cst_60 = arith.constant 1.000000e+00 : f32
    %144 = vector.broadcast %cst_60 : f32 to vector<8x16xf32>
    %145 = arith.subf %144, %138 : vector<8x16xf32>
    %146 = arith.mulf %145, %143 : vector<8x16xf32>
    %147 = arith.mulf %138, %117 : vector<8x16xf32>
    %148 = arith.addf %146, %147 : vector<8x16xf32>
    %cst_61 = arith.constant 1.000000e+00 : f32
    %149 = vector.broadcast %cst_61 : f32 to vector<8x1xf32>
    %150 = arith.cmpf ogt, %4, %149 : vector<8x1xf32>
    %cst_62 = arith.constant 0.000000e+00 : f32
    %151 = vector.shape_cast %150 : vector<8x1xi1> to vector<8x1xi1>
    %152 = vector.broadcast %151 : vector<8x1xi1> to vector<8x16xi1>
    %153 = vector.broadcast %cst_62 : f32 to vector<8x16xf32>
    %154 = arith.select %152, %148, %153 : vector<8x16xi1>, vector<8x16xf32>
    %155 = vector.shape_cast %150 : vector<8x1xi1> to vector<8x1xi1>
    %156 = vector.broadcast %155 : vector<8x1xi1> to vector<8x16xi1>
    %157 = arith.select %156, %148, %117 : vector<8x16xi1>, vector<8x16xf32>
    %158 = vector.extract_strided_slice %120 {offsets = [0, 144], sizes = [8, 48], strides = [1, 1]} : vector<8x240xf32> to vector<8x48xf32>
    %159 = vector.extract_strided_slice %120 {offsets = [0, 48], sizes = [8, 48], strides = [1, 1]} : vector<8x240xf32> to vector<8x48xf32>
    %160 = vector.extract_strided_slice %158 {offsets = [0, 0], sizes = [8, 16], strides = [1, 1]} : vector<8x48xf32> to vector<8x16xf32>
    %161 = vector.extract_strided_slice %159 {offsets = [0, 0], sizes = [8, 16], strides = [1, 1]} : vector<8x48xf32> to vector<8x16xf32>
    %162 = arith.addf %160, %161 : vector<8x16xf32>
    %163 = arith.negf %162 : vector<8x16xf32>
    %164 = math.exp %163 : vector<8x16xf32>
    %cst_63 = arith.constant 1.000000e+00 : f32
    %165 = vector.broadcast %cst_63 : f32 to vector<8x16xf32>
    %166 = arith.addf %165, %164 : vector<8x16xf32>
    %167 = arith.divf %165, %166 : vector<8x16xf32>
    %168 = vector.extract_strided_slice %158 {offsets = [0, 16], sizes = [8, 16], strides = [1, 1]} : vector<8x48xf32> to vector<8x16xf32>
    %169 = vector.extract_strided_slice %159 {offsets = [0, 16], sizes = [8, 16], strides = [1, 1]} : vector<8x48xf32> to vector<8x16xf32>
    %170 = arith.addf %168, %169 : vector<8x16xf32>
    %171 = arith.negf %170 : vector<8x16xf32>
    %172 = math.exp %171 : vector<8x16xf32>
    %cst_64 = arith.constant 1.000000e+00 : f32
    %173 = vector.broadcast %cst_64 : f32 to vector<8x16xf32>
    %174 = arith.addf %173, %172 : vector<8x16xf32>
    %175 = arith.divf %173, %174 : vector<8x16xf32>
    %176 = vector.extract_strided_slice %158 {offsets = [0, 32], sizes = [8, 16], strides = [1, 1]} : vector<8x48xf32> to vector<8x16xf32>
    %177 = vector.extract_strided_slice %159 {offsets = [0, 32], sizes = [8, 16], strides = [1, 1]} : vector<8x48xf32> to vector<8x16xf32>
    %178 = arith.mulf %167, %177 : vector<8x16xf32>
    %179 = arith.addf %176, %178 : vector<8x16xf32>
    %180 = math.tanh %179 : vector<8x16xf32>
    %cst_65 = arith.constant 1.000000e+00 : f32
    %181 = vector.broadcast %cst_65 : f32 to vector<8x16xf32>
    %182 = arith.subf %181, %175 : vector<8x16xf32>
    %183 = arith.mulf %182, %180 : vector<8x16xf32>
    %184 = arith.mulf %175, %2 : vector<8x16xf32>
    %185 = arith.addf %183, %184 : vector<8x16xf32>
    %cst_66 = arith.constant 0.000000e+00 : f32
    %186 = vector.broadcast %cst_66 : f32 to vector<8x1xf32>
    %187 = arith.cmpf ogt, %4, %186 : vector<8x1xf32>
    %cst_67 = arith.constant 0.000000e+00 : f32
    %188 = vector.shape_cast %187 : vector<8x1xi1> to vector<8x1xi1>
    %189 = vector.broadcast %188 : vector<8x1xi1> to vector<8x16xi1>
    %190 = vector.broadcast %cst_67 : f32 to vector<8x16xf32>
    %191 = arith.select %189, %185, %190 : vector<8x16xi1>, vector<8x16xf32>
    %192 = vector.shape_cast %187 : vector<8x1xi1> to vector<8x1xi1>
    %193 = vector.broadcast %192 : vector<8x1xi1> to vector<8x16xi1>
    %194 = arith.select %193, %185, %2 : vector<8x16xi1>, vector<8x16xf32>
    %c0_68 = arith.constant 0 : index
    %c0_69 = arith.constant 0 : index
    %195 = vector.load %arg11[%c0_68, %c0_69] : memref<64x16xf32, #tpu.memory_space<vmem>>, vector<8x16xf32>
    tpu.vector_store %arg11[%c0_68, %c0_69], %191 {strides = array<i32>} : memref<64x16xf32, #tpu.memory_space<vmem>>, vector<8x16xf32>,
    %c0_70 = arith.constant 0 : index
    %c0_71 = arith.constant 0 : index
    %196 = vector.load %arg10[%c0_70, %c0_71] : memref<64x16xf32, #tpu.memory_space<vmem>>, vector<8x16xf32>
    %197 = arith.mulf %196, %191 : vector<8x16xf32>
    %198 = tpu.concatenate %157, %194, %3, %154, %197 in 1 : vector<8x16xf32>, vector<8x16xf32>, vector<8x16xf32>, vector<8x16xf32>, vector<8x16xf32> -> vector<8x80xf32>
    %cst_72 = arith.constant dense<0.000000e+00> : vector<8x240xf32>
    %199 = tpu.matmul %198, %75, %cst_72 {dimension_numbers = #tpu.dot_dimension_numbers<[1], [0], [0], [1], [0, 0, 1, 1], [], []>} : vector<8x80xf32>, vector<80x240xf32>, vector<8x240xf32> -> vector<8x240xf32>
    %200 = arith.addf %199, %74 : vector<8x240xf32>
    %c16_73 = arith.constant 16 : index
    %c0_74 = arith.constant 0 : index
    %201 = vector.load %arg9[%c16_73, %c0_74] : memref<64x48xf32, #tpu.memory_space<vmem>>, vector<8x48xf32>
    %202 = vector.extract_strided_slice %200 {offsets = [0, 0], sizes = [8, 48], strides = [1, 1]} : vector<8x240xf32> to vector<8x48xf32>
    %203 = vector.extract_strided_slice %201 {offsets = [0, 0], sizes = [8, 16], strides = [1, 1]} : vector<8x48xf32> to vector<8x16xf32>
    %204 = vector.extract_strided_slice %202 {offsets = [0, 0], sizes = [8, 16], strides = [1, 1]} : vector<8x48xf32> to vector<8x16xf32>
    %205 = arith.addf %203, %204 : vector<8x16xf32>
    %206 = arith.negf %205 : vector<8x16xf32>
    %207 = math.exp %206 : vector<8x16xf32>
    %cst_75 = arith.constant 1.000000e+00 : f32
    %208 = vector.broadcast %cst_75 : f32 to vector<8x16xf32>
    %209 = arith.addf %208, %207 : vector<8x16xf32>
    %210 = arith.divf %208, %209 : vector<8x16xf32>
    %211 = vector.extract_strided_slice %201 {offsets = [0, 16], sizes = [8, 16], strides = [1, 1]} : vector<8x48xf32> to vector<8x16xf32>
    %212 = vector.extract_strided_slice %202 {offsets = [0, 16], sizes = [8, 16], strides = [1, 1]} : vector<8x48xf32> to vector<8x16xf32>
    %213 = arith.addf %211, %212 : vector<8x16xf32>
    %214 = arith.negf %213 : vector<8x16xf32>
    %215 = math.exp %214 : vector<8x16xf32>
    %cst_76 = arith.constant 1.000000e+00 : f32
    %216 = vector.broadcast %cst_76 : f32 to vector<8x16xf32>
    %217 = arith.addf %216, %215 : vector<8x16xf32>
    %218 = arith.divf %216, %217 : vector<8x16xf32>
    %219 = vector.extract_strided_slice %201 {offsets = [0, 32], sizes = [8, 16], strides = [1, 1]} : vector<8x48xf32> to vector<8x16xf32>
    %220 = vector.extract_strided_slice %202 {offsets = [0, 32], sizes = [8, 16], strides = [1, 1]} : vector<8x48xf32> to vector<8x16xf32>
    %221 = arith.mulf %210, %220 : vector<8x16xf32>
    %222 = arith.addf %219, %221 : vector<8x16xf32>
    %223 = math.tanh %222 : vector<8x16xf32>
    %cst_77 = arith.constant 1.000000e+00 : f32
    %224 = vector.broadcast %cst_77 : f32 to vector<8x16xf32>
    %225 = arith.subf %224, %218 : vector<8x16xf32>
    %226 = arith.mulf %225, %223 : vector<8x16xf32>
    %227 = arith.mulf %218, %157 : vector<8x16xf32>
    %228 = arith.addf %226, %227 : vector<8x16xf32>
    %cst_78 = arith.constant 2.000000e+00 : f32
    %229 = vector.broadcast %cst_78 : f32 to vector<8x1xf32>
    %230 = arith.cmpf ogt, %4, %229 : vector<8x1xf32>
    %cst_79 = arith.constant 0.000000e+00 : f32
    %231 = vector.shape_cast %230 : vector<8x1xi1> to vector<8x1xi1>
    %232 = vector.broadcast %231 : vector<8x1xi1> to vector<8x16xi1>
    %233 = vector.broadcast %cst_79 : f32 to vector<8x16xf32>
    %234 = arith.select %232, %228, %233 : vector<8x16xi1>, vector<8x16xf32>
    %235 = vector.shape_cast %230 : vector<8x1xi1> to vector<8x1xi1>
    %236 = vector.broadcast %235 : vector<8x1xi1> to vector<8x16xi1>
    %237 = arith.select %236, %228, %157 : vector<8x16xi1>, vector<8x16xf32>
    %238 = vector.extract_strided_slice %200 {offsets = [0, 144], sizes = [8, 48], strides = [1, 1]} : vector<8x240xf32> to vector<8x48xf32>
    %239 = vector.extract_strided_slice %200 {offsets = [0, 48], sizes = [8, 48], strides = [1, 1]} : vector<8x240xf32> to vector<8x48xf32>
    %240 = vector.extract_strided_slice %238 {offsets = [0, 0], sizes = [8, 16], strides = [1, 1]} : vector<8x48xf32> to vector<8x16xf32>
    %241 = vector.extract_strided_slice %239 {offsets = [0, 0], sizes = [8, 16], strides = [1, 1]} : vector<8x48xf32> to vector<8x16xf32>
    %242 = arith.addf %240, %241 : vector<8x16xf32>
    %243 = arith.negf %242 : vector<8x16xf32>
    %244 = math.exp %243 : vector<8x16xf32>
    %cst_80 = arith.constant 1.000000e+00 : f32
    %245 = vector.broadcast %cst_80 : f32 to vector<8x16xf32>
    %246 = arith.addf %245, %244 : vector<8x16xf32>
    %247 = arith.divf %245, %246 : vector<8x16xf32>
    %248 = vector.extract_strided_slice %238 {offsets = [0, 16], sizes = [8, 16], strides = [1, 1]} : vector<8x48xf32> to vector<8x16xf32>
    %249 = vector.extract_strided_slice %239 {offsets = [0, 16], sizes = [8, 16], strides = [1, 1]} : vector<8x48xf32> to vector<8x16xf32>
    %250 = arith.addf %248, %249 : vector<8x16xf32>
    %251 = arith.negf %250 : vector<8x16xf32>
    %252 = math.exp %251 : vector<8x16xf32>
    %cst_81 = arith.constant 1.000000e+00 : f32
    %253 = vector.broadcast %cst_81 : f32 to vector<8x16xf32>
    %254 = arith.addf %253, %252 : vector<8x16xf32>
    %255 = arith.divf %253, %254 : vector<8x16xf32>
    %256 = vector.extract_strided_slice %238 {offsets = [0, 32], sizes = [8, 16], strides = [1, 1]} : vector<8x48xf32> to vector<8x16xf32>
    %257 = vector.extract_strided_slice %239 {offsets = [0, 32], sizes = [8, 16], strides = [1, 1]} : vector<8x48xf32> to vector<8x16xf32>
    %258 = arith.mulf %247, %257 : vector<8x16xf32>
    %259 = arith.addf %256, %258 : vector<8x16xf32>
    %260 = math.tanh %259 : vector<8x16xf32>
    %cst_82 = arith.constant 1.000000e+00 : f32
    %261 = vector.broadcast %cst_82 : f32 to vector<8x16xf32>
    %262 = arith.subf %261, %255 : vector<8x16xf32>
    %263 = arith.mulf %262, %260 : vector<8x16xf32>
    %264 = arith.mulf %255, %194 : vector<8x16xf32>
    %265 = arith.addf %263, %264 : vector<8x16xf32>
    %cst_83 = arith.constant 1.000000e+00 : f32
    %266 = vector.broadcast %cst_83 : f32 to vector<8x1xf32>
    %267 = arith.cmpf ogt, %4, %266 : vector<8x1xf32>
    %cst_84 = arith.constant 0.000000e+00 : f32
    %268 = vector.shape_cast %267 : vector<8x1xi1> to vector<8x1xi1>
    %269 = vector.broadcast %268 : vector<8x1xi1> to vector<8x16xi1>
    %270 = vector.broadcast %cst_84 : f32 to vector<8x16xf32>
    %271 = arith.select %269, %265, %270 : vector<8x16xi1>, vector<8x16xf32>
    %272 = vector.shape_cast %267 : vector<8x1xi1> to vector<8x1xi1>
    %273 = vector.broadcast %272 : vector<8x1xi1> to vector<8x16xi1>
    %274 = arith.select %273, %265, %194 : vector<8x16xi1>, vector<8x16xf32>
    %c8_85 = arith.constant 8 : index
    %c0_86 = arith.constant 0 : index
    %275 = vector.load %arg11[%c8_85, %c0_86] : memref<64x16xf32, #tpu.memory_space<vmem>>, vector<8x16xf32>
    tpu.vector_store %arg11[%c8_85, %c0_86], %271 {strides = array<i32>} : memref<64x16xf32, #tpu.memory_space<vmem>>, vector<8x16xf32>,
    %c8_87 = arith.constant 8 : index
    %c0_88 = arith.constant 0 : index
    %276 = vector.load %arg10[%c8_87, %c0_88] : memref<64x16xf32, #tpu.memory_space<vmem>>, vector<8x16xf32>
    %277 = arith.mulf %276, %271 : vector<8x16xf32>
    %278 = vector.extract_strided_slice %200 {offsets = [0, 192], sizes = [8, 48], strides = [1, 1]} : vector<8x240xf32> to vector<8x48xf32>
    %279 = vector.extract_strided_slice %200 {offsets = [0, 96], sizes = [8, 48], strides = [1, 1]} : vector<8x240xf32> to vector<8x48xf32>
    %280 = vector.extract_strided_slice %278 {offsets = [0, 0], sizes = [8, 16], strides = [1, 1]} : vector<8x48xf32> to vector<8x16xf32>
    %281 = vector.extract_strided_slice %279 {offsets = [0, 0], sizes = [8, 16], strides = [1, 1]} : vector<8x48xf32> to vector<8x16xf32>
    %282 = arith.addf %280, %281 : vector<8x16xf32>
    %283 = arith.negf %282 : vector<8x16xf32>
    %284 = math.exp %283 : vector<8x16xf32>
    %cst_89 = arith.constant 1.000000e+00 : f32
    %285 = vector.broadcast %cst_89 : f32 to vector<8x16xf32>
    %286 = arith.addf %285, %284 : vector<8x16xf32>
    %287 = arith.divf %285, %286 : vector<8x16xf32>
    %288 = vector.extract_strided_slice %278 {offsets = [0, 16], sizes = [8, 16], strides = [1, 1]} : vector<8x48xf32> to vector<8x16xf32>
    %289 = vector.extract_strided_slice %279 {offsets = [0, 16], sizes = [8, 16], strides = [1, 1]} : vector<8x48xf32> to vector<8x16xf32>
    %290 = arith.addf %288, %289 : vector<8x16xf32>
    %291 = arith.negf %290 : vector<8x16xf32>
    %292 = math.exp %291 : vector<8x16xf32>
    %cst_90 = arith.constant 1.000000e+00 : f32
    %293 = vector.broadcast %cst_90 : f32 to vector<8x16xf32>
    %294 = arith.addf %293, %292 : vector<8x16xf32>
    %295 = arith.divf %293, %294 : vector<8x16xf32>
    %296 = vector.extract_strided_slice %278 {offsets = [0, 32], sizes = [8, 16], strides = [1, 1]} : vector<8x48xf32> to vector<8x16xf32>
    %297 = vector.extract_strided_slice %279 {offsets = [0, 32], sizes = [8, 16], strides = [1, 1]} : vector<8x48xf32> to vector<8x16xf32>
    %298 = arith.mulf %287, %297 : vector<8x16xf32>
    %299 = arith.addf %296, %298 : vector<8x16xf32>
    %300 = math.tanh %299 : vector<8x16xf32>
    %cst_91 = arith.constant 1.000000e+00 : f32
    %301 = vector.broadcast %cst_91 : f32 to vector<8x16xf32>
    %302 = arith.subf %301, %295 : vector<8x16xf32>
    %303 = arith.mulf %302, %300 : vector<8x16xf32>
    %304 = arith.mulf %295, %3 : vector<8x16xf32>
    %305 = arith.addf %303, %304 : vector<8x16xf32>
    %cst_92 = arith.constant 0.000000e+00 : f32
    %306 = vector.broadcast %cst_92 : f32 to vector<8x1xf32>
    %307 = arith.cmpf ogt, %4, %306 : vector<8x1xf32>
    %308 = vector.shape_cast %307 : vector<8x1xi1> to vector<8x1xi1>
    %309 = vector.broadcast %308 : vector<8x1xi1> to vector<8x16xi1>
    %310 = arith.select %309, %305, %3 : vector<8x16xi1>, vector<8x16xf32>
    %cst_93 = arith.constant 0.000000e+00 : f32
    %311 = vector.shape_cast %307 : vector<8x1xi1> to vector<8x1xi1>
    %312 = vector.broadcast %311 : vector<8x1xi1> to vector<8x16xi1>
    %313 = vector.broadcast %cst_93 : f32 to vector<8x16xf32>
    %314 = arith.select %312, %305, %313 : vector<8x16xi1>, vector<8x16xf32>
    %c0_94 = arith.constant 0 : index
    %c0_95 = arith.constant 0 : index
    %315 = vector.load %arg12[%c0_94, %c0_95] : memref<64x16xf32, #tpu.memory_space<vmem>>, vector<8x16xf32>
    tpu.vector_store %arg12[%c0_94, %c0_95], %314 {strides = array<i32>} : memref<64x16xf32, #tpu.memory_space<vmem>>, vector<8x16xf32>,
    %316 = tpu.concatenate %237, %274, %310, %234, %277 in 1 : vector<8x16xf32>, vector<8x16xf32>, vector<8x16xf32>, vector<8x16xf32>, vector<8x16xf32> -> vector<8x80xf32>
    %cst_96 = arith.constant dense<0.000000e+00> : vector<8x240xf32>
    %317 = tpu.matmul %316, %75, %cst_96 {dimension_numbers = #tpu.dot_dimension_numbers<[1], [0], [0], [1], [0, 0, 1, 1], [], []>} : vector<8x80xf32>, vector<80x240xf32>, vector<8x240xf32> -> vector<8x240xf32>
    %318 = arith.addf %317, %74 : vector<8x240xf32>
    %c24 = arith.constant 24 : index
    %c0_97 = arith.constant 0 : index
    %319 = vector.load %arg9[%c24, %c0_97] : memref<64x48xf32, #tpu.memory_space<vmem>>, vector<8x48xf32>
    %320 = vector.extract_strided_slice %318 {offsets = [0, 0], sizes = [8, 48], strides = [1, 1]} : vector<8x240xf32> to vector<8x48xf32>
    %321 = vector.extract_strided_slice %319 {offsets = [0, 0], sizes = [8, 16], strides = [1, 1]} : vector<8x48xf32> to vector<8x16xf32>
    %322 = vector.extract_strided_slice %320 {offsets = [0, 0], sizes = [8, 16], strides = [1, 1]} : vector<8x48xf32> to vector<8x16xf32>
    %323 = arith.addf %321, %322 : vector<8x16xf32>
    %324 = arith.negf %323 : vector<8x16xf32>
    %325 = math.exp %324 : vector<8x16xf32>
    %cst_98 = arith.constant 1.000000e+00 : f32
    %326 = vector.broadcast %cst_98 : f32 to vector<8x16xf32>
    %327 = arith.addf %326, %325 : vector<8x16xf32>
    %328 = arith.divf %326, %327 : vector<8x16xf32>
    %329 = vector.extract_strided_slice %319 {offsets = [0, 16], sizes = [8, 16], strides = [1, 1]} : vector<8x48xf32> to vector<8x16xf32>
    %330 = vector.extract_strided_slice %320 {offsets = [0, 16], sizes = [8, 16], strides = [1, 1]} : vector<8x48xf32> to vector<8x16xf32>
    %331 = arith.addf %329, %330 : vector<8x16xf32>
    %332 = arith.negf %331 : vector<8x16xf32>
    %333 = math.exp %332 : vector<8x16xf32>
    %cst_99 = arith.constant 1.000000e+00 : f32
    %334 = vector.broadcast %cst_99 : f32 to vector<8x16xf32>
    %335 = arith.addf %334, %333 : vector<8x16xf32>
    %336 = arith.divf %334, %335 : vector<8x16xf32>
    %337 = vector.extract_strided_slice %319 {offsets = [0, 32], sizes = [8, 16], strides = [1, 1]} : vector<8x48xf32> to vector<8x16xf32>
    %338 = vector.extract_strided_slice %320 {offsets = [0, 32], sizes = [8, 16], strides = [1, 1]} : vector<8x48xf32> to vector<8x16xf32>
    %339 = arith.mulf %328, %338 : vector<8x16xf32>
    %340 = arith.addf %337, %339 : vector<8x16xf32>
    %341 = math.tanh %340 : vector<8x16xf32>
    %cst_100 = arith.constant 1.000000e+00 : f32
    %342 = vector.broadcast %cst_100 : f32 to vector<8x16xf32>
    %343 = arith.subf %342, %336 : vector<8x16xf32>
    %344 = arith.mulf %343, %341 : vector<8x16xf32>
    %345 = arith.mulf %336, %237 : vector<8x16xf32>
    %346 = arith.addf %344, %345 : vector<8x16xf32>
    %cst_101 = arith.constant 3.000000e+00 : f32
    %347 = vector.broadcast %cst_101 : f32 to vector<8x1xf32>
    %348 = arith.cmpf ogt, %4, %347 : vector<8x1xf32>
    %cst_102 = arith.constant 0.000000e+00 : f32
    %349 = vector.shape_cast %348 : vector<8x1xi1> to vector<8x1xi1>
    %350 = vector.broadcast %349 : vector<8x1xi1> to vector<8x16xi1>
    %351 = vector.broadcast %cst_102 : f32 to vector<8x16xf32>
    %352 = arith.select %350, %346, %351 : vector<8x16xi1>, vector<8x16xf32>
    %353 = vector.shape_cast %348 : vector<8x1xi1> to vector<8x1xi1>
    %354 = vector.broadcast %353 : vector<8x1xi1> to vector<8x16xi1>
    %355 = arith.select %354, %346, %237 : vector<8x16xi1>, vector<8x16xf32>
    %356 = vector.extract_strided_slice %318 {offsets = [0, 144], sizes = [8, 48], strides = [1, 1]} : vector<8x240xf32> to vector<8x48xf32>
    %357 = vector.extract_strided_slice %318 {offsets = [0, 48], sizes = [8, 48], strides = [1, 1]} : vector<8x240xf32> to vector<8x48xf32>
    %358 = vector.extract_strided_slice %356 {offsets = [0, 0], sizes = [8, 16], strides = [1, 1]} : vector<8x48xf32> to vector<8x16xf32>
    %359 = vector.extract_strided_slice %357 {offsets = [0, 0], sizes = [8, 16], strides = [1, 1]} : vector<8x48xf32> to vector<8x16xf32>
    %360 = arith.addf %358, %359 : vector<8x16xf32>
    %361 = arith.negf %360 : vector<8x16xf32>
    %362 = math.exp %361 : vector<8x16xf32>
    %cst_103 = arith.constant 1.000000e+00 : f32
    %363 = vector.broadcast %cst_103 : f32 to vector<8x16xf32>
    %364 = arith.addf %363, %362 : vector<8x16xf32>
    %365 = arith.divf %363, %364 : vector<8x16xf32>
    %366 = vector.extract_strided_slice %356 {offsets = [0, 16], sizes = [8, 16], strides = [1, 1]} : vector<8x48xf32> to vector<8x16xf32>
    %367 = vector.extract_strided_slice %357 {offsets = [0, 16], sizes = [8, 16], strides = [1, 1]} : vector<8x48xf32> to vector<8x16xf32>
    %368 = arith.addf %366, %367 : vector<8x16xf32>
    %369 = arith.negf %368 : vector<8x16xf32>
    %370 = math.exp %369 : vector<8x16xf32>
    %cst_104 = arith.constant 1.000000e+00 : f32
    %371 = vector.broadcast %cst_104 : f32 to vector<8x16xf32>
    %372 = arith.addf %371, %370 : vector<8x16xf32>
    %373 = arith.divf %371, %372 : vector<8x16xf32>
    %374 = vector.extract_strided_slice %356 {offsets = [0, 32], sizes = [8, 16], strides = [1, 1]} : vector<8x48xf32> to vector<8x16xf32>
    %375 = vector.extract_strided_slice %357 {offsets = [0, 32], sizes = [8, 16], strides = [1, 1]} : vector<8x48xf32> to vector<8x16xf32>
    %376 = arith.mulf %365, %375 : vector<8x16xf32>
    %377 = arith.addf %374, %376 : vector<8x16xf32>
    %378 = math.tanh %377 : vector<8x16xf32>
    %cst_105 = arith.constant 1.000000e+00 : f32
    %379 = vector.broadcast %cst_105 : f32 to vector<8x16xf32>
    %380 = arith.subf %379, %373 : vector<8x16xf32>
    %381 = arith.mulf %380, %378 : vector<8x16xf32>
    %382 = arith.mulf %373, %274 : vector<8x16xf32>
    %383 = arith.addf %381, %382 : vector<8x16xf32>
    %cst_106 = arith.constant 2.000000e+00 : f32
    %384 = vector.broadcast %cst_106 : f32 to vector<8x1xf32>
    %385 = arith.cmpf ogt, %4, %384 : vector<8x1xf32>
    %cst_107 = arith.constant 0.000000e+00 : f32
    %386 = vector.shape_cast %385 : vector<8x1xi1> to vector<8x1xi1>
    %387 = vector.broadcast %386 : vector<8x1xi1> to vector<8x16xi1>
    %388 = vector.broadcast %cst_107 : f32 to vector<8x16xf32>
    %389 = arith.select %387, %383, %388 : vector<8x16xi1>, vector<8x16xf32>
    %390 = vector.shape_cast %385 : vector<8x1xi1> to vector<8x1xi1>
    %391 = vector.broadcast %390 : vector<8x1xi1> to vector<8x16xi1>
    %392 = arith.select %391, %383, %274 : vector<8x16xi1>, vector<8x16xf32>
    %c16_108 = arith.constant 16 : index
    %c0_109 = arith.constant 0 : index
    %393 = vector.load %arg11[%c16_108, %c0_109] : memref<64x16xf32, #tpu.memory_space<vmem>>, vector<8x16xf32>
    tpu.vector_store %arg11[%c16_108, %c0_109], %389 {strides = array<i32>} : memref<64x16xf32, #tpu.memory_space<vmem>>, vector<8x16xf32>,
    %c16_110 = arith.constant 16 : index
    %c0_111 = arith.constant 0 : index
    %394 = vector.load %arg10[%c16_110, %c0_111] : memref<64x16xf32, #tpu.memory_space<vmem>>, vector<8x16xf32>
    %395 = arith.mulf %394, %389 : vector<8x16xf32>
    %396 = vector.extract_strided_slice %318 {offsets = [0, 192], sizes = [8, 48], strides = [1, 1]} : vector<8x240xf32> to vector<8x48xf32>
    %397 = vector.extract_strided_slice %318 {offsets = [0, 96], sizes = [8, 48], strides = [1, 1]} : vector<8x240xf32> to vector<8x48xf32>
    %398 = vector.extract_strided_slice %396 {offsets = [0, 0], sizes = [8, 16], strides = [1, 1]} : vector<8x48xf32> to vector<8x16xf32>
    %399 = vector.extract_strided_slice %397 {offsets = [0, 0], sizes = [8, 16], strides = [1, 1]} : vector<8x48xf32> to vector<8x16xf32>
    %400 = arith.addf %398, %399 : vector<8x16xf32>
    %401 = arith.negf %400 : vector<8x16xf32>
    %402 = math.exp %401 : vector<8x16xf32>
    %cst_112 = arith.constant 1.000000e+00 : f32
    %403 = vector.broadcast %cst_112 : f32 to vector<8x16xf32>
    %404 = arith.addf %403, %402 : vector<8x16xf32>
    %405 = arith.divf %403, %404 : vector<8x16xf32>
    %406 = vector.extract_strided_slice %396 {offsets = [0, 16], sizes = [8, 16], strides = [1, 1]} : vector<8x48xf32> to vector<8x16xf32>
    %407 = vector.extract_strided_slice %397 {offsets = [0, 16], sizes = [8, 16], strides = [1, 1]} : vector<8x48xf32> to vector<8x16xf32>
    %408 = arith.addf %406, %407 : vector<8x16xf32>
    %409 = arith.negf %408 : vector<8x16xf32>
    %410 = math.exp %409 : vector<8x16xf32>
    %cst_113 = arith.constant 1.000000e+00 : f32
    %411 = vector.broadcast %cst_113 : f32 to vector<8x16xf32>
    %412 = arith.addf %411, %410 : vector<8x16xf32>
    %413 = arith.divf %411, %412 : vector<8x16xf32>
    %414 = vector.extract_strided_slice %396 {offsets = [0, 32], sizes = [8, 16], strides = [1, 1]} : vector<8x48xf32> to vector<8x16xf32>
    %415 = vector.extract_strided_slice %397 {offsets = [0, 32], sizes = [8, 16], strides = [1, 1]} : vector<8x48xf32> to vector<8x16xf32>
    %416 = arith.mulf %405, %415 : vector<8x16xf32>
    %417 = arith.addf %414, %416 : vector<8x16xf32>
    %418 = math.tanh %417 : vector<8x16xf32>
    %cst_114 = arith.constant 1.000000e+00 : f32
    %419 = vector.broadcast %cst_114 : f32 to vector<8x16xf32>
    %420 = arith.subf %419, %413 : vector<8x16xf32>
    %421 = arith.mulf %420, %418 : vector<8x16xf32>
    %422 = arith.mulf %413, %310 : vector<8x16xf32>
    %423 = arith.addf %421, %422 : vector<8x16xf32>
    %cst_115 = arith.constant 1.000000e+00 : f32
    %424 = vector.broadcast %cst_115 : f32 to vector<8x1xf32>
    %425 = arith.cmpf ogt, %4, %424 : vector<8x1xf32>
    %426 = vector.shape_cast %425 : vector<8x1xi1> to vector<8x1xi1>
    %427 = vector.broadcast %426 : vector<8x1xi1> to vector<8x16xi1>
    %428 = arith.select %427, %423, %310 : vector<8x16xi1>, vector<8x16xf32>
    %cst_116 = arith.constant 0.000000e+00 : f32
    %429 = vector.shape_cast %425 : vector<8x1xi1> to vector<8x1xi1>
    %430 = vector.broadcast %429 : vector<8x1xi1> to vector<8x16xi1>
    %431 = vector.broadcast %cst_116 : f32 to vector<8x16xf32>
    %432 = arith.select %430, %423, %431 : vector<8x16xi1>, vector<8x16xf32>
    %c8_117 = arith.constant 8 : index
    %c0_118 = arith.constant 0 : index
    %433 = vector.load %arg12[%c8_117, %c0_118] : memref<64x16xf32, #tpu.memory_space<vmem>>, vector<8x16xf32>
    tpu.vector_store %arg12[%c8_117, %c0_118], %432 {strides = array<i32>} : memref<64x16xf32, #tpu.memory_space<vmem>>, vector<8x16xf32>,
    %434 = tpu.concatenate %355, %392, %428, %352, %395 in 1 : vector<8x16xf32>, vector<8x16xf32>, vector<8x16xf32>, vector<8x16xf32>, vector<8x16xf32> -> vector<8x80xf32>
    %cst_119 = arith.constant dense<0.000000e+00> : vector<8x240xf32>
    %435 = tpu.matmul %434, %75, %cst_119 {dimension_numbers = #tpu.dot_dimension_numbers<[1], [0], [0], [1], [0, 0, 1, 1], [], []>} : vector<8x80xf32>, vector<80x240xf32>, vector<8x240xf32> -> vector<8x240xf32>
    %436 = arith.addf %435, %74 : vector<8x240xf32>
    %c32_120 = arith.constant 32 : index
    %c0_121 = arith.constant 0 : index
    %437 = vector.load %arg9[%c32_120, %c0_121] : memref<64x48xf32, #tpu.memory_space<vmem>>, vector<8x48xf32>
    %438 = vector.extract_strided_slice %436 {offsets = [0, 0], sizes = [8, 48], strides = [1, 1]} : vector<8x240xf32> to vector<8x48xf32>
    %439 = vector.extract_strided_slice %437 {offsets = [0, 0], sizes = [8, 16], strides = [1, 1]} : vector<8x48xf32> to vector<8x16xf32>
    %440 = vector.extract_strided_slice %438 {offsets = [0, 0], sizes = [8, 16], strides = [1, 1]} : vector<8x48xf32> to vector<8x16xf32>
    %441 = arith.addf %439, %440 : vector<8x16xf32>
    %442 = arith.negf %441 : vector<8x16xf32>
    %443 = math.exp %442 : vector<8x16xf32>
    %cst_122 = arith.constant 1.000000e+00 : f32
    %444 = vector.broadcast %cst_122 : f32 to vector<8x16xf32>
    %445 = arith.addf %444, %443 : vector<8x16xf32>
    %446 = arith.divf %444, %445 : vector<8x16xf32>
    %447 = vector.extract_strided_slice %437 {offsets = [0, 16], sizes = [8, 16], strides = [1, 1]} : vector<8x48xf32> to vector<8x16xf32>
    %448 = vector.extract_strided_slice %438 {offsets = [0, 16], sizes = [8, 16], strides = [1, 1]} : vector<8x48xf32> to vector<8x16xf32>
    %449 = arith.addf %447, %448 : vector<8x16xf32>
    %450 = arith.negf %449 : vector<8x16xf32>
    %451 = math.exp %450 : vector<8x16xf32>
    %cst_123 = arith.constant 1.000000e+00 : f32
    %452 = vector.broadcast %cst_123 : f32 to vector<8x16xf32>
    %453 = arith.addf %452, %451 : vector<8x16xf32>
    %454 = arith.divf %452, %453 : vector<8x16xf32>
    %455 = vector.extract_strided_slice %437 {offsets = [0, 32], sizes = [8, 16], strides = [1, 1]} : vector<8x48xf32> to vector<8x16xf32>
    %456 = vector.extract_strided_slice %438 {offsets = [0, 32], sizes = [8, 16], strides = [1, 1]} : vector<8x48xf32> to vector<8x16xf32>
    %457 = arith.mulf %446, %456 : vector<8x16xf32>
    %458 = arith.addf %455, %457 : vector<8x16xf32>
    %459 = math.tanh %458 : vector<8x16xf32>
    %cst_124 = arith.constant 1.000000e+00 : f32
    %460 = vector.broadcast %cst_124 : f32 to vector<8x16xf32>
    %461 = arith.subf %460, %454 : vector<8x16xf32>
    %462 = arith.mulf %461, %459 : vector<8x16xf32>
    %463 = arith.mulf %454, %355 : vector<8x16xf32>
    %464 = arith.addf %462, %463 : vector<8x16xf32>
    %cst_125 = arith.constant 4.000000e+00 : f32
    %465 = vector.broadcast %cst_125 : f32 to vector<8x1xf32>
    %466 = arith.cmpf ogt, %4, %465 : vector<8x1xf32>
    %cst_126 = arith.constant 0.000000e+00 : f32
    %467 = vector.shape_cast %466 : vector<8x1xi1> to vector<8x1xi1>
    %468 = vector.broadcast %467 : vector<8x1xi1> to vector<8x16xi1>
    %469 = vector.broadcast %cst_126 : f32 to vector<8x16xf32>
    %470 = arith.select %468, %464, %469 : vector<8x16xi1>, vector<8x16xf32>
    %471 = vector.shape_cast %466 : vector<8x1xi1> to vector<8x1xi1>
    %472 = vector.broadcast %471 : vector<8x1xi1> to vector<8x16xi1>
    %473 = arith.select %472, %464, %355 : vector<8x16xi1>, vector<8x16xf32>
    %474 = vector.extract_strided_slice %436 {offsets = [0, 144], sizes = [8, 48], strides = [1, 1]} : vector<8x240xf32> to vector<8x48xf32>
    %475 = vector.extract_strided_slice %436 {offsets = [0, 48], sizes = [8, 48], strides = [1, 1]} : vector<8x240xf32> to vector<8x48xf32>
    %476 = vector.extract_strided_slice %474 {offsets = [0, 0], sizes = [8, 16], strides = [1, 1]} : vector<8x48xf32> to vector<8x16xf32>
    %477 = vector.extract_strided_slice %475 {offsets = [0, 0], sizes = [8, 16], strides = [1, 1]} : vector<8x48xf32> to vector<8x16xf32>
    %478 = arith.addf %476, %477 : vector<8x16xf32>
    %479 = arith.negf %478 : vector<8x16xf32>
    %480 = math.exp %479 : vector<8x16xf32>
    %cst_127 = arith.constant 1.000000e+00 : f32
    %481 = vector.broadcast %cst_127 : f32 to vector<8x16xf32>
    %482 = arith.addf %481, %480 : vector<8x16xf32>
    %483 = arith.divf %481, %482 : vector<8x16xf32>
    %484 = vector.extract_strided_slice %474 {offsets = [0, 16], sizes = [8, 16], strides = [1, 1]} : vector<8x48xf32> to vector<8x16xf32>
    %485 = vector.extract_strided_slice %475 {offsets = [0, 16], sizes = [8, 16], strides = [1, 1]} : vector<8x48xf32> to vector<8x16xf32>
    %486 = arith.addf %484, %485 : vector<8x16xf32>
    %487 = arith.negf %486 : vector<8x16xf32>
    %488 = math.exp %487 : vector<8x16xf32>
    %cst_128 = arith.constant 1.000000e+00 : f32
    %489 = vector.broadcast %cst_128 : f32 to vector<8x16xf32>
    %490 = arith.addf %489, %488 : vector<8x16xf32>
    %491 = arith.divf %489, %490 : vector<8x16xf32>
    %492 = vector.extract_strided_slice %474 {offsets = [0, 32], sizes = [8, 16], strides = [1, 1]} : vector<8x48xf32> to vector<8x16xf32>
    %493 = vector.extract_strided_slice %475 {offsets = [0, 32], sizes = [8, 16], strides = [1, 1]} : vector<8x48xf32> to vector<8x16xf32>
    %494 = arith.mulf %483, %493 : vector<8x16xf32>
    %495 = arith.addf %492, %494 : vector<8x16xf32>
    %496 = math.tanh %495 : vector<8x16xf32>
    %cst_129 = arith.constant 1.000000e+00 : f32
    %497 = vector.broadcast %cst_129 : f32 to vector<8x16xf32>
    %498 = arith.subf %497, %491 : vector<8x16xf32>
    %499 = arith.mulf %498, %496 : vector<8x16xf32>
    %500 = arith.mulf %491, %392 : vector<8x16xf32>
    %501 = arith.addf %499, %500 : vector<8x16xf32>
    %cst_130 = arith.constant 3.000000e+00 : f32
    %502 = vector.broadcast %cst_130 : f32 to vector<8x1xf32>
    %503 = arith.cmpf ogt, %4, %502 : vector<8x1xf32>
    %cst_131 = arith.constant 0.000000e+00 : f32
    %504 = vector.shape_cast %503 : vector<8x1xi1> to vector<8x1xi1>
    %505 = vector.broadcast %504 : vector<8x1xi1> to vector<8x16xi1>
    %506 = vector.broadcast %cst_131 : f32 to vector<8x16xf32>
    %507 = arith.select %505, %501, %506 : vector<8x16xi1>, vector<8x16xf32>
    %508 = vector.shape_cast %503 : vector<8x1xi1> to vector<8x1xi1>
    %509 = vector.broadcast %508 : vector<8x1xi1> to vector<8x16xi1>
    %510 = arith.select %509, %501, %392 : vector<8x16xi1>, vector<8x16xf32>
    %c24_132 = arith.constant 24 : index
    %c0_133 = arith.constant 0 : index
    %511 = vector.load %arg11[%c24_132, %c0_133] : memref<64x16xf32, #tpu.memory_space<vmem>>, vector<8x16xf32>
    tpu.vector_store %arg11[%c24_132, %c0_133], %507 {strides = array<i32>} : memref<64x16xf32, #tpu.memory_space<vmem>>, vector<8x16xf32>,
    %c24_134 = arith.constant 24 : index
    %c0_135 = arith.constant 0 : index
    %512 = vector.load %arg10[%c24_134, %c0_135] : memref<64x16xf32, #tpu.memory_space<vmem>>, vector<8x16xf32>
    %513 = arith.mulf %512, %507 : vector<8x16xf32>
    %514 = vector.extract_strided_slice %436 {offsets = [0, 192], sizes = [8, 48], strides = [1, 1]} : vector<8x240xf32> to vector<8x48xf32>
    %515 = vector.extract_strided_slice %436 {offsets = [0, 96], sizes = [8, 48], strides = [1, 1]} : vector<8x240xf32> to vector<8x48xf32>
    %516 = vector.extract_strided_slice %514 {offsets = [0, 0], sizes = [8, 16], strides = [1, 1]} : vector<8x48xf32> to vector<8x16xf32>
    %517 = vector.extract_strided_slice %515 {offsets = [0, 0], sizes = [8, 16], strides = [1, 1]} : vector<8x48xf32> to vector<8x16xf32>
    %518 = arith.addf %516, %517 : vector<8x16xf32>
    %519 = arith.negf %518 : vector<8x16xf32>
    %520 = math.exp %519 : vector<8x16xf32>
    %cst_136 = arith.constant 1.000000e+00 : f32
    %521 = vector.broadcast %cst_136 : f32 to vector<8x16xf32>
    %522 = arith.addf %521, %520 : vector<8x16xf32>
    %523 = arith.divf %521, %522 : vector<8x16xf32>
    %524 = vector.extract_strided_slice %514 {offsets = [0, 16], sizes = [8, 16], strides = [1, 1]} : vector<8x48xf32> to vector<8x16xf32>
    %525 = vector.extract_strided_slice %515 {offsets = [0, 16], sizes = [8, 16], strides = [1, 1]} : vector<8x48xf32> to vector<8x16xf32>
    %526 = arith.addf %524, %525 : vector<8x16xf32>
    %527 = arith.negf %526 : vector<8x16xf32>
    %528 = math.exp %527 : vector<8x16xf32>
    %cst_137 = arith.constant 1.000000e+00 : f32
    %529 = vector.broadcast %cst_137 : f32 to vector<8x16xf32>
    %530 = arith.addf %529, %528 : vector<8x16xf32>
    %531 = arith.divf %529, %530 : vector<8x16xf32>
    %532 = vector.extract_strided_slice %514 {offsets = [0, 32], sizes = [8, 16], strides = [1, 1]} : vector<8x48xf32> to vector<8x16xf32>
    %533 = vector.extract_strided_slice %515 {offsets = [0, 32], sizes = [8, 16], strides = [1, 1]} : vector<8x48xf32> to vector<8x16xf32>
    %534 = arith.mulf %523, %533 : vector<8x16xf32>
    %535 = arith.addf %532, %534 : vector<8x16xf32>
    %536 = math.tanh %535 : vector<8x16xf32>
    %cst_138 = arith.constant 1.000000e+00 : f32
    %537 = vector.broadcast %cst_138 : f32 to vector<8x16xf32>
    %538 = arith.subf %537, %531 : vector<8x16xf32>
    %539 = arith.mulf %538, %536 : vector<8x16xf32>
    %540 = arith.mulf %531, %428 : vector<8x16xf32>
    %541 = arith.addf %539, %540 : vector<8x16xf32>
    %cst_139 = arith.constant 2.000000e+00 : f32
    %542 = vector.broadcast %cst_139 : f32 to vector<8x1xf32>
    %543 = arith.cmpf ogt, %4, %542 : vector<8x1xf32>
    %544 = vector.shape_cast %543 : vector<8x1xi1> to vector<8x1xi1>
    %545 = vector.broadcast %544 : vector<8x1xi1> to vector<8x16xi1>
    %546 = arith.select %545, %541, %428 : vector<8x16xi1>, vector<8x16xf32>
    %cst_140 = arith.constant 0.000000e+00 : f32
    %547 = vector.shape_cast %543 : vector<8x1xi1> to vector<8x1xi1>
    %548 = vector.broadcast %547 : vector<8x1xi1> to vector<8x16xi1>
    %549 = vector.broadcast %cst_140 : f32 to vector<8x16xf32>
    %550 = arith.select %548, %541, %549 : vector<8x16xi1>, vector<8x16xf32>
    %c16_141 = arith.constant 16 : index
    %c0_142 = arith.constant 0 : index
    %551 = vector.load %arg12[%c16_141, %c0_142] : memref<64x16xf32, #tpu.memory_space<vmem>>, vector<8x16xf32>
    tpu.vector_store %arg12[%c16_141, %c0_142], %550 {strides = array<i32>} : memref<64x16xf32, #tpu.memory_space<vmem>>, vector<8x16xf32>,
    %552 = tpu.concatenate %473, %510, %546, %470, %513 in 1 : vector<8x16xf32>, vector<8x16xf32>, vector<8x16xf32>, vector<8x16xf32>, vector<8x16xf32> -> vector<8x80xf32>
    %cst_143 = arith.constant dense<0.000000e+00> : vector<8x240xf32>
    %553 = tpu.matmul %552, %75, %cst_143 {dimension_numbers = #tpu.dot_dimension_numbers<[1], [0], [0], [1], [0, 0, 1, 1], [], []>} : vector<8x80xf32>, vector<80x240xf32>, vector<8x240xf32> -> vector<8x240xf32>
    %554 = arith.addf %553, %74 : vector<8x240xf32>
    %c40 = arith.constant 40 : index
    %c0_144 = arith.constant 0 : index
    %555 = vector.load %arg9[%c40, %c0_144] : memref<64x48xf32, #tpu.memory_space<vmem>>, vector<8x48xf32>
    %556 = vector.extract_strided_slice %554 {offsets = [0, 0], sizes = [8, 48], strides = [1, 1]} : vector<8x240xf32> to vector<8x48xf32>
    %557 = vector.extract_strided_slice %555 {offsets = [0, 0], sizes = [8, 16], strides = [1, 1]} : vector<8x48xf32> to vector<8x16xf32>
    %558 = vector.extract_strided_slice %556 {offsets = [0, 0], sizes = [8, 16], strides = [1, 1]} : vector<8x48xf32> to vector<8x16xf32>
    %559 = arith.addf %557, %558 : vector<8x16xf32>
    %560 = arith.negf %559 : vector<8x16xf32>
    %561 = math.exp %560 : vector<8x16xf32>
    %cst_145 = arith.constant 1.000000e+00 : f32
    %562 = vector.broadcast %cst_145 : f32 to vector<8x16xf32>
    %563 = arith.addf %562, %561 : vector<8x16xf32>
    %564 = arith.divf %562, %563 : vector<8x16xf32>
    %565 = vector.extract_strided_slice %555 {offsets = [0, 16], sizes = [8, 16], strides = [1, 1]} : vector<8x48xf32> to vector<8x16xf32>
    %566 = vector.extract_strided_slice %556 {offsets = [0, 16], sizes = [8, 16], strides = [1, 1]} : vector<8x48xf32> to vector<8x16xf32>
    %567 = arith.addf %565, %566 : vector<8x16xf32>
    %568 = arith.negf %567 : vector<8x16xf32>
    %569 = math.exp %568 : vector<8x16xf32>
    %cst_146 = arith.constant 1.000000e+00 : f32
    %570 = vector.broadcast %cst_146 : f32 to vector<8x16xf32>
    %571 = arith.addf %570, %569 : vector<8x16xf32>
    %572 = arith.divf %570, %571 : vector<8x16xf32>
    %573 = vector.extract_strided_slice %555 {offsets = [0, 32], sizes = [8, 16], strides = [1, 1]} : vector<8x48xf32> to vector<8x16xf32>
    %574 = vector.extract_strided_slice %556 {offsets = [0, 32], sizes = [8, 16], strides = [1, 1]} : vector<8x48xf32> to vector<8x16xf32>
    %575 = arith.mulf %564, %574 : vector<8x16xf32>
    %576 = arith.addf %573, %575 : vector<8x16xf32>
    %577 = math.tanh %576 : vector<8x16xf32>
    %cst_147 = arith.constant 1.000000e+00 : f32
    %578 = vector.broadcast %cst_147 : f32 to vector<8x16xf32>
    %579 = arith.subf %578, %572 : vector<8x16xf32>
    %580 = arith.mulf %579, %577 : vector<8x16xf32>
    %581 = arith.mulf %572, %473 : vector<8x16xf32>
    %582 = arith.addf %580, %581 : vector<8x16xf32>
    %cst_148 = arith.constant 5.000000e+00 : f32
    %583 = vector.broadcast %cst_148 : f32 to vector<8x1xf32>
    %584 = arith.cmpf ogt, %4, %583 : vector<8x1xf32>
    %cst_149 = arith.constant 0.000000e+00 : f32
    %585 = vector.shape_cast %584 : vector<8x1xi1> to vector<8x1xi1>
    %586 = vector.broadcast %585 : vector<8x1xi1> to vector<8x16xi1>
    %587 = vector.broadcast %cst_149 : f32 to vector<8x16xf32>
    %588 = arith.select %586, %582, %587 : vector<8x16xi1>, vector<8x16xf32>
    %589 = vector.shape_cast %584 : vector<8x1xi1> to vector<8x1xi1>
    %590 = vector.broadcast %589 : vector<8x1xi1> to vector<8x16xi1>
    %591 = arith.select %590, %582, %473 : vector<8x16xi1>, vector<8x16xf32>
    %592 = vector.extract_strided_slice %554 {offsets = [0, 144], sizes = [8, 48], strides = [1, 1]} : vector<8x240xf32> to vector<8x48xf32>
    %593 = vector.extract_strided_slice %554 {offsets = [0, 48], sizes = [8, 48], strides = [1, 1]} : vector<8x240xf32> to vector<8x48xf32>
    %594 = vector.extract_strided_slice %592 {offsets = [0, 0], sizes = [8, 16], strides = [1, 1]} : vector<8x48xf32> to vector<8x16xf32>
    %595 = vector.extract_strided_slice %593 {offsets = [0, 0], sizes = [8, 16], strides = [1, 1]} : vector<8x48xf32> to vector<8x16xf32>
    %596 = arith.addf %594, %595 : vector<8x16xf32>
    %597 = arith.negf %596 : vector<8x16xf32>
    %598 = math.exp %597 : vector<8x16xf32>
    %cst_150 = arith.constant 1.000000e+00 : f32
    %599 = vector.broadcast %cst_150 : f32 to vector<8x16xf32>
    %600 = arith.addf %599, %598 : vector<8x16xf32>
    %601 = arith.divf %599, %600 : vector<8x16xf32>
    %602 = vector.extract_strided_slice %592 {offsets = [0, 16], sizes = [8, 16], strides = [1, 1]} : vector<8x48xf32> to vector<8x16xf32>
    %603 = vector.extract_strided_slice %593 {offsets = [0, 16], sizes = [8, 16], strides = [1, 1]} : vector<8x48xf32> to vector<8x16xf32>
    %604 = arith.addf %602, %603 : vector<8x16xf32>
    %605 = arith.negf %604 : vector<8x16xf32>
    %606 = math.exp %605 : vector<8x16xf32>
    %cst_151 = arith.constant 1.000000e+00 : f32
    %607 = vector.broadcast %cst_151 : f32 to vector<8x16xf32>
    %608 = arith.addf %607, %606 : vector<8x16xf32>
    %609 = arith.divf %607, %608 : vector<8x16xf32>
    %610 = vector.extract_strided_slice %592 {offsets = [0, 32], sizes = [8, 16], strides = [1, 1]} : vector<8x48xf32> to vector<8x16xf32>
    %611 = vector.extract_strided_slice %593 {offsets = [0, 32], sizes = [8, 16], strides = [1, 1]} : vector<8x48xf32> to vector<8x16xf32>
    %612 = arith.mulf %601, %611 : vector<8x16xf32>
    %613 = arith.addf %610, %612 : vector<8x16xf32>
    %614 = math.tanh %613 : vector<8x16xf32>
    %cst_152 = arith.constant 1.000000e+00 : f32
    %615 = vector.broadcast %cst_152 : f32 to vector<8x16xf32>
    %616 = arith.subf %615, %609 : vector<8x16xf32>
    %617 = arith.mulf %616, %614 : vector<8x16xf32>
    %618 = arith.mulf %609, %510 : vector<8x16xf32>
    %619 = arith.addf %617, %618 : vector<8x16xf32>
    %cst_153 = arith.constant 4.000000e+00 : f32
    %620 = vector.broadcast %cst_153 : f32 to vector<8x1xf32>
    %621 = arith.cmpf ogt, %4, %620 : vector<8x1xf32>
    %cst_154 = arith.constant 0.000000e+00 : f32
    %622 = vector.shape_cast %621 : vector<8x1xi1> to vector<8x1xi1>
    %623 = vector.broadcast %622 : vector<8x1xi1> to vector<8x16xi1>
    %624 = vector.broadcast %cst_154 : f32 to vector<8x16xf32>
    %625 = arith.select %623, %619, %624 : vector<8x16xi1>, vector<8x16xf32>
    %626 = vector.shape_cast %621 : vector<8x1xi1> to vector<8x1xi1>
    %627 = vector.broadcast %626 : vector<8x1xi1> to vector<8x16xi1>
    %628 = arith.select %627, %619, %510 : vector<8x16xi1>, vector<8x16xf32>
    %c32_155 = arith.constant 32 : index
    %c0_156 = arith.constant 0 : index
    %629 = vector.load %arg11[%c32_155, %c0_156] : memref<64x16xf32, #tpu.memory_space<vmem>>, vector<8x16xf32>
    tpu.vector_store %arg11[%c32_155, %c0_156], %625 {strides = array<i32>} : memref<64x16xf32, #tpu.memory_space<vmem>>, vector<8x16xf32>,
    %c32_157 = arith.constant 32 : index
    %c0_158 = arith.constant 0 : index
    %630 = vector.load %arg10[%c32_157, %c0_158] : memref<64x16xf32, #tpu.memory_space<vmem>>, vector<8x16xf32>
    %631 = arith.mulf %630, %625 : vector<8x16xf32>
    %632 = vector.extract_strided_slice %554 {offsets = [0, 192], sizes = [8, 48], strides = [1, 1]} : vector<8x240xf32> to vector<8x48xf32>
    %633 = vector.extract_strided_slice %554 {offsets = [0, 96], sizes = [8, 48], strides = [1, 1]} : vector<8x240xf32> to vector<8x48xf32>
    %634 = vector.extract_strided_slice %632 {offsets = [0, 0], sizes = [8, 16], strides = [1, 1]} : vector<8x48xf32> to vector<8x16xf32>
    %635 = vector.extract_strided_slice %633 {offsets = [0, 0], sizes = [8, 16], strides = [1, 1]} : vector<8x48xf32> to vector<8x16xf32>
    %636 = arith.addf %634, %635 : vector<8x16xf32>
    %637 = arith.negf %636 : vector<8x16xf32>
    %638 = math.exp %637 : vector<8x16xf32>
    %cst_159 = arith.constant 1.000000e+00 : f32
    %639 = vector.broadcast %cst_159 : f32 to vector<8x16xf32>
    %640 = arith.addf %639, %638 : vector<8x16xf32>
    %641 = arith.divf %639, %640 : vector<8x16xf32>
    %642 = vector.extract_strided_slice %632 {offsets = [0, 16], sizes = [8, 16], strides = [1, 1]} : vector<8x48xf32> to vector<8x16xf32>
    %643 = vector.extract_strided_slice %633 {offsets = [0, 16], sizes = [8, 16], strides = [1, 1]} : vector<8x48xf32> to vector<8x16xf32>
    %644 = arith.addf %642, %643 : vector<8x16xf32>
    %645 = arith.negf %644 : vector<8x16xf32>
    %646 = math.exp %645 : vector<8x16xf32>
    %cst_160 = arith.constant 1.000000e+00 : f32
    %647 = vector.broadcast %cst_160 : f32 to vector<8x16xf32>
    %648 = arith.addf %647, %646 : vector<8x16xf32>
    %649 = arith.divf %647, %648 : vector<8x16xf32>
    %650 = vector.extract_strided_slice %632 {offsets = [0, 32], sizes = [8, 16], strides = [1, 1]} : vector<8x48xf32> to vector<8x16xf32>
    %651 = vector.extract_strided_slice %633 {offsets = [0, 32], sizes = [8, 16], strides = [1, 1]} : vector<8x48xf32> to vector<8x16xf32>
    %652 = arith.mulf %641, %651 : vector<8x16xf32>
    %653 = arith.addf %650, %652 : vector<8x16xf32>
    %654 = math.tanh %653 : vector<8x16xf32>
    %cst_161 = arith.constant 1.000000e+00 : f32
    %655 = vector.broadcast %cst_161 : f32 to vector<8x16xf32>
    %656 = arith.subf %655, %649 : vector<8x16xf32>
    %657 = arith.mulf %656, %654 : vector<8x16xf32>
    %658 = arith.mulf %649, %546 : vector<8x16xf32>
    %659 = arith.addf %657, %658 : vector<8x16xf32>
    %cst_162 = arith.constant 3.000000e+00 : f32
    %660 = vector.broadcast %cst_162 : f32 to vector<8x1xf32>
    %661 = arith.cmpf ogt, %4, %660 : vector<8x1xf32>
    %662 = vector.shape_cast %661 : vector<8x1xi1> to vector<8x1xi1>
    %663 = vector.broadcast %662 : vector<8x1xi1> to vector<8x16xi1>
    %664 = arith.select %663, %659, %546 : vector<8x16xi1>, vector<8x16xf32>
    %cst_163 = arith.constant 0.000000e+00 : f32
    %665 = vector.shape_cast %661 : vector<8x1xi1> to vector<8x1xi1>
    %666 = vector.broadcast %665 : vector<8x1xi1> to vector<8x16xi1>
    %667 = vector.broadcast %cst_163 : f32 to vector<8x16xf32>
    %668 = arith.select %666, %659, %667 : vector<8x16xi1>, vector<8x16xf32>
    %c24_164 = arith.constant 24 : index
    %c0_165 = arith.constant 0 : index
    %669 = vector.load %arg12[%c24_164, %c0_165] : memref<64x16xf32, #tpu.memory_space<vmem>>, vector<8x16xf32>
    tpu.vector_store %arg12[%c24_164, %c0_165], %668 {strides = array<i32>} : memref<64x16xf32, #tpu.memory_space<vmem>>, vector<8x16xf32>,
    %670 = tpu.concatenate %591, %628, %664, %588, %631 in 1 : vector<8x16xf32>, vector<8x16xf32>, vector<8x16xf32>, vector<8x16xf32>, vector<8x16xf32> -> vector<8x80xf32>
    %cst_166 = arith.constant dense<0.000000e+00> : vector<8x240xf32>
    %671 = tpu.matmul %670, %75, %cst_166 {dimension_numbers = #tpu.dot_dimension_numbers<[1], [0], [0], [1], [0, 0, 1, 1], [], []>} : vector<8x80xf32>, vector<80x240xf32>, vector<8x240xf32> -> vector<8x240xf32>
    %672 = arith.addf %671, %74 : vector<8x240xf32>
    %c48_167 = arith.constant 48 : index
    %c0_168 = arith.constant 0 : index
    %673 = vector.load %arg9[%c48_167, %c0_168] : memref<64x48xf32, #tpu.memory_space<vmem>>, vector<8x48xf32>
    %674 = vector.extract_strided_slice %672 {offsets = [0, 0], sizes = [8, 48], strides = [1, 1]} : vector<8x240xf32> to vector<8x48xf32>
    %675 = vector.extract_strided_slice %673 {offsets = [0, 0], sizes = [8, 16], strides = [1, 1]} : vector<8x48xf32> to vector<8x16xf32>
    %676 = vector.extract_strided_slice %674 {offsets = [0, 0], sizes = [8, 16], strides = [1, 1]} : vector<8x48xf32> to vector<8x16xf32>
    %677 = arith.addf %675, %676 : vector<8x16xf32>
    %678 = arith.negf %677 : vector<8x16xf32>
    %679 = math.exp %678 : vector<8x16xf32>
    %cst_169 = arith.constant 1.000000e+00 : f32
    %680 = vector.broadcast %cst_169 : f32 to vector<8x16xf32>
    %681 = arith.addf %680, %679 : vector<8x16xf32>
    %682 = arith.divf %680, %681 : vector<8x16xf32>
    %683 = vector.extract_strided_slice %673 {offsets = [0, 16], sizes = [8, 16], strides = [1, 1]} : vector<8x48xf32> to vector<8x16xf32>
    %684 = vector.extract_strided_slice %674 {offsets = [0, 16], sizes = [8, 16], strides = [1, 1]} : vector<8x48xf32> to vector<8x16xf32>
    %685 = arith.addf %683, %684 : vector<8x16xf32>
    %686 = arith.negf %685 : vector<8x16xf32>
    %687 = math.exp %686 : vector<8x16xf32>
    %cst_170 = arith.constant 1.000000e+00 : f32
    %688 = vector.broadcast %cst_170 : f32 to vector<8x16xf32>
    %689 = arith.addf %688, %687 : vector<8x16xf32>
    %690 = arith.divf %688, %689 : vector<8x16xf32>
    %691 = vector.extract_strided_slice %673 {offsets = [0, 32], sizes = [8, 16], strides = [1, 1]} : vector<8x48xf32> to vector<8x16xf32>
    %692 = vector.extract_strided_slice %674 {offsets = [0, 32], sizes = [8, 16], strides = [1, 1]} : vector<8x48xf32> to vector<8x16xf32>
    %693 = arith.mulf %682, %692 : vector<8x16xf32>
    %694 = arith.addf %691, %693 : vector<8x16xf32>
    %695 = math.tanh %694 : vector<8x16xf32>
    %cst_171 = arith.constant 1.000000e+00 : f32
    %696 = vector.broadcast %cst_171 : f32 to vector<8x16xf32>
    %697 = arith.subf %696, %690 : vector<8x16xf32>
    %698 = arith.mulf %697, %695 : vector<8x16xf32>
    %699 = arith.mulf %690, %591 : vector<8x16xf32>
    %700 = arith.addf %698, %699 : vector<8x16xf32>
    %cst_172 = arith.constant 6.000000e+00 : f32
    %701 = vector.broadcast %cst_172 : f32 to vector<8x1xf32>
    %702 = arith.cmpf ogt, %4, %701 : vector<8x1xf32>
    %cst_173 = arith.constant 0.000000e+00 : f32
    %703 = vector.shape_cast %702 : vector<8x1xi1> to vector<8x1xi1>
    %704 = vector.broadcast %703 : vector<8x1xi1> to vector<8x16xi1>
    %705 = vector.broadcast %cst_173 : f32 to vector<8x16xf32>
    %706 = arith.select %704, %700, %705 : vector<8x16xi1>, vector<8x16xf32>
    %707 = vector.shape_cast %702 : vector<8x1xi1> to vector<8x1xi1>
    %708 = vector.broadcast %707 : vector<8x1xi1> to vector<8x16xi1>
    %709 = arith.select %708, %700, %591 : vector<8x16xi1>, vector<8x16xf32>
    %710 = vector.extract_strided_slice %672 {offsets = [0, 144], sizes = [8, 48], strides = [1, 1]} : vector<8x240xf32> to vector<8x48xf32>
    %711 = vector.extract_strided_slice %672 {offsets = [0, 48], sizes = [8, 48], strides = [1, 1]} : vector<8x240xf32> to vector<8x48xf32>
    %712 = vector.extract_strided_slice %710 {offsets = [0, 0], sizes = [8, 16], strides = [1, 1]} : vector<8x48xf32> to vector<8x16xf32>
    %713 = vector.extract_strided_slice %711 {offsets = [0, 0], sizes = [8, 16], strides = [1, 1]} : vector<8x48xf32> to vector<8x16xf32>
    %714 = arith.addf %712, %713 : vector<8x16xf32>
    %715 = arith.negf %714 : vector<8x16xf32>
    %716 = math.exp %715 : vector<8x16xf32>
    %cst_174 = arith.constant 1.000000e+00 : f32
    %717 = vector.broadcast %cst_174 : f32 to vector<8x16xf32>
    %718 = arith.addf %717, %716 : vector<8x16xf32>
    %719 = arith.divf %717, %718 : vector<8x16xf32>
    %720 = vector.extract_strided_slice %710 {offsets = [0, 16], sizes = [8, 16], strides = [1, 1]} : vector<8x48xf32> to vector<8x16xf32>
    %721 = vector.extract_strided_slice %711 {offsets = [0, 16], sizes = [8, 16], strides = [1, 1]} : vector<8x48xf32> to vector<8x16xf32>
    %722 = arith.addf %720, %721 : vector<8x16xf32>
    %723 = arith.negf %722 : vector<8x16xf32>
    %724 = math.exp %723 : vector<8x16xf32>
    %cst_175 = arith.constant 1.000000e+00 : f32
    %725 = vector.broadcast %cst_175 : f32 to vector<8x16xf32>
    %726 = arith.addf %725, %724 : vector<8x16xf32>
    %727 = arith.divf %725, %726 : vector<8x16xf32>
    %728 = vector.extract_strided_slice %710 {offsets = [0, 32], sizes = [8, 16], strides = [1, 1]} : vector<8x48xf32> to vector<8x16xf32>
    %729 = vector.extract_strided_slice %711 {offsets = [0, 32], sizes = [8, 16], strides = [1, 1]} : vector<8x48xf32> to vector<8x16xf32>
    %730 = arith.mulf %719, %729 : vector<8x16xf32>
    %731 = arith.addf %728, %730 : vector<8x16xf32>
    %732 = math.tanh %731 : vector<8x16xf32>
    %cst_176 = arith.constant 1.000000e+00 : f32
    %733 = vector.broadcast %cst_176 : f32 to vector<8x16xf32>
    %734 = arith.subf %733, %727 : vector<8x16xf32>
    %735 = arith.mulf %734, %732 : vector<8x16xf32>
    %736 = arith.mulf %727, %628 : vector<8x16xf32>
    %737 = arith.addf %735, %736 : vector<8x16xf32>
    %cst_177 = arith.constant 5.000000e+00 : f32
    %738 = vector.broadcast %cst_177 : f32 to vector<8x1xf32>
    %739 = arith.cmpf ogt, %4, %738 : vector<8x1xf32>
    %cst_178 = arith.constant 0.000000e+00 : f32
    %740 = vector.shape_cast %739 : vector<8x1xi1> to vector<8x1xi1>
    %741 = vector.broadcast %740 : vector<8x1xi1> to vector<8x16xi1>
    %742 = vector.broadcast %cst_178 : f32 to vector<8x16xf32>
    %743 = arith.select %741, %737, %742 : vector<8x16xi1>, vector<8x16xf32>
    %744 = vector.shape_cast %739 : vector<8x1xi1> to vector<8x1xi1>
    %745 = vector.broadcast %744 : vector<8x1xi1> to vector<8x16xi1>
    %746 = arith.select %745, %737, %628 : vector<8x16xi1>, vector<8x16xf32>
    %c40_179 = arith.constant 40 : index
    %c0_180 = arith.constant 0 : index
    %747 = vector.load %arg11[%c40_179, %c0_180] : memref<64x16xf32, #tpu.memory_space<vmem>>, vector<8x16xf32>
    tpu.vector_store %arg11[%c40_179, %c0_180], %743 {strides = array<i32>} : memref<64x16xf32, #tpu.memory_space<vmem>>, vector<8x16xf32>,
    %c40_181 = arith.constant 40 : index
    %c0_182 = arith.constant 0 : index
    %748 = vector.load %arg10[%c40_181, %c0_182] : memref<64x16xf32, #tpu.memory_space<vmem>>, vector<8x16xf32>
    %749 = arith.mulf %748, %743 : vector<8x16xf32>
    %750 = vector.extract_strided_slice %672 {offsets = [0, 192], sizes = [8, 48], strides = [1, 1]} : vector<8x240xf32> to vector<8x48xf32>
    %751 = vector.extract_strided_slice %672 {offsets = [0, 96], sizes = [8, 48], strides = [1, 1]} : vector<8x240xf32> to vector<8x48xf32>
    %752 = vector.extract_strided_slice %750 {offsets = [0, 0], sizes = [8, 16], strides = [1, 1]} : vector<8x48xf32> to vector<8x16xf32>
    %753 = vector.extract_strided_slice %751 {offsets = [0, 0], sizes = [8, 16], strides = [1, 1]} : vector<8x48xf32> to vector<8x16xf32>
    %754 = arith.addf %752, %753 : vector<8x16xf32>
    %755 = arith.negf %754 : vector<8x16xf32>
    %756 = math.exp %755 : vector<8x16xf32>
    %cst_183 = arith.constant 1.000000e+00 : f32
    %757 = vector.broadcast %cst_183 : f32 to vector<8x16xf32>
    %758 = arith.addf %757, %756 : vector<8x16xf32>
    %759 = arith.divf %757, %758 : vector<8x16xf32>
    %760 = vector.extract_strided_slice %750 {offsets = [0, 16], sizes = [8, 16], strides = [1, 1]} : vector<8x48xf32> to vector<8x16xf32>
    %761 = vector.extract_strided_slice %751 {offsets = [0, 16], sizes = [8, 16], strides = [1, 1]} : vector<8x48xf32> to vector<8x16xf32>
    %762 = arith.addf %760, %761 : vector<8x16xf32>
    %763 = arith.negf %762 : vector<8x16xf32>
    %764 = math.exp %763 : vector<8x16xf32>
    %cst_184 = arith.constant 1.000000e+00 : f32
    %765 = vector.broadcast %cst_184 : f32 to vector<8x16xf32>
    %766 = arith.addf %765, %764 : vector<8x16xf32>
    %767 = arith.divf %765, %766 : vector<8x16xf32>
    %768 = vector.extract_strided_slice %750 {offsets = [0, 32], sizes = [8, 16], strides = [1, 1]} : vector<8x48xf32> to vector<8x16xf32>
    %769 = vector.extract_strided_slice %751 {offsets = [0, 32], sizes = [8, 16], strides = [1, 1]} : vector<8x48xf32> to vector<8x16xf32>
    %770 = arith.mulf %759, %769 : vector<8x16xf32>
    %771 = arith.addf %768, %770 : vector<8x16xf32>
    %772 = math.tanh %771 : vector<8x16xf32>
    %cst_185 = arith.constant 1.000000e+00 : f32
    %773 = vector.broadcast %cst_185 : f32 to vector<8x16xf32>
    %774 = arith.subf %773, %767 : vector<8x16xf32>
    %775 = arith.mulf %774, %772 : vector<8x16xf32>
    %776 = arith.mulf %767, %664 : vector<8x16xf32>
    %777 = arith.addf %775, %776 : vector<8x16xf32>
    %cst_186 = arith.constant 4.000000e+00 : f32
    %778 = vector.broadcast %cst_186 : f32 to vector<8x1xf32>
    %779 = arith.cmpf ogt, %4, %778 : vector<8x1xf32>
    %780 = vector.shape_cast %779 : vector<8x1xi1> to vector<8x1xi1>
    %781 = vector.broadcast %780 : vector<8x1xi1> to vector<8x16xi1>
    %782 = arith.select %781, %777, %664 : vector<8x16xi1>, vector<8x16xf32>
    %cst_187 = arith.constant 0.000000e+00 : f32
    %783 = vector.shape_cast %779 : vector<8x1xi1> to vector<8x1xi1>
    %784 = vector.broadcast %783 : vector<8x1xi1> to vector<8x16xi1>
    %785 = vector.broadcast %cst_187 : f32 to vector<8x16xf32>
    %786 = arith.select %784, %777, %785 : vector<8x16xi1>, vector<8x16xf32>
    %c32_188 = arith.constant 32 : index
    %c0_189 = arith.constant 0 : index
    %787 = vector.load %arg12[%c32_188, %c0_189] : memref<64x16xf32, #tpu.memory_space<vmem>>, vector<8x16xf32>
    tpu.vector_store %arg12[%c32_188, %c0_189], %786 {strides = array<i32>} : memref<64x16xf32, #tpu.memory_space<vmem>>, vector<8x16xf32>,
    %788 = tpu.concatenate %709, %746, %782, %706, %749 in 1 : vector<8x16xf32>, vector<8x16xf32>, vector<8x16xf32>, vector<8x16xf32>, vector<8x16xf32> -> vector<8x80xf32>
    %cst_190 = arith.constant dense<0.000000e+00> : vector<8x240xf32>
    %789 = tpu.matmul %788, %75, %cst_190 {dimension_numbers = #tpu.dot_dimension_numbers<[1], [0], [0], [1], [0, 0, 1, 1], [], []>} : vector<8x80xf32>, vector<80x240xf32>, vector<8x240xf32> -> vector<8x240xf32>
    %790 = arith.addf %789, %74 : vector<8x240xf32>
    %c56 = arith.constant 56 : index
    %c0_191 = arith.constant 0 : index
    %791 = vector.load %arg9[%c56, %c0_191] : memref<64x48xf32, #tpu.memory_space<vmem>>, vector<8x48xf32>
    %792 = vector.extract_strided_slice %790 {offsets = [0, 0], sizes = [8, 48], strides = [1, 1]} : vector<8x240xf32> to vector<8x48xf32>
    %793 = vector.extract_strided_slice %791 {offsets = [0, 0], sizes = [8, 16], strides = [1, 1]} : vector<8x48xf32> to vector<8x16xf32>
    %794 = vector.extract_strided_slice %792 {offsets = [0, 0], sizes = [8, 16], strides = [1, 1]} : vector<8x48xf32> to vector<8x16xf32>
    %795 = arith.addf %793, %794 : vector<8x16xf32>
    %796 = arith.negf %795 : vector<8x16xf32>
    %797 = math.exp %796 : vector<8x16xf32>
    %cst_192 = arith.constant 1.000000e+00 : f32
    %798 = vector.broadcast %cst_192 : f32 to vector<8x16xf32>
    %799 = arith.addf %798, %797 : vector<8x16xf32>
    %800 = arith.divf %798, %799 : vector<8x16xf32>
    %801 = vector.extract_strided_slice %791 {offsets = [0, 16], sizes = [8, 16], strides = [1, 1]} : vector<8x48xf32> to vector<8x16xf32>
    %802 = vector.extract_strided_slice %792 {offsets = [0, 16], sizes = [8, 16], strides = [1, 1]} : vector<8x48xf32> to vector<8x16xf32>
    %803 = arith.addf %801, %802 : vector<8x16xf32>
    %804 = arith.negf %803 : vector<8x16xf32>
    %805 = math.exp %804 : vector<8x16xf32>
    %cst_193 = arith.constant 1.000000e+00 : f32
    %806 = vector.broadcast %cst_193 : f32 to vector<8x16xf32>
    %807 = arith.addf %806, %805 : vector<8x16xf32>
    %808 = arith.divf %806, %807 : vector<8x16xf32>
    %809 = vector.extract_strided_slice %791 {offsets = [0, 32], sizes = [8, 16], strides = [1, 1]} : vector<8x48xf32> to vector<8x16xf32>
    %810 = vector.extract_strided_slice %792 {offsets = [0, 32], sizes = [8, 16], strides = [1, 1]} : vector<8x48xf32> to vector<8x16xf32>
    %811 = arith.mulf %800, %810 : vector<8x16xf32>
    %812 = arith.addf %809, %811 : vector<8x16xf32>
    %813 = math.tanh %812 : vector<8x16xf32>
    %cst_194 = arith.constant 1.000000e+00 : f32
    %814 = vector.broadcast %cst_194 : f32 to vector<8x16xf32>
    %815 = arith.subf %814, %808 : vector<8x16xf32>
    %816 = arith.mulf %815, %813 : vector<8x16xf32>
    %817 = arith.mulf %808, %709 : vector<8x16xf32>
    %818 = arith.addf %816, %817 : vector<8x16xf32>
    %cst_195 = arith.constant 7.000000e+00 : f32
    %819 = vector.broadcast %cst_195 : f32 to vector<8x1xf32>
    %820 = arith.cmpf ogt, %4, %819 : vector<8x1xf32>
    %cst_196 = arith.constant 0.000000e+00 : f32
    %821 = vector.shape_cast %820 : vector<8x1xi1> to vector<8x1xi1>
    %822 = vector.broadcast %821 : vector<8x1xi1> to vector<8x16xi1>
    %823 = vector.broadcast %cst_196 : f32 to vector<8x16xf32>
    %824 = arith.select %822, %818, %823 : vector<8x16xi1>, vector<8x16xf32>
    %825 = vector.shape_cast %820 : vector<8x1xi1> to vector<8x1xi1>
    %826 = vector.broadcast %825 : vector<8x1xi1> to vector<8x16xi1>
    %827 = arith.select %826, %818, %709 : vector<8x16xi1>, vector<8x16xf32>
    %828 = vector.extract_strided_slice %790 {offsets = [0, 144], sizes = [8, 48], strides = [1, 1]} : vector<8x240xf32> to vector<8x48xf32>
    %829 = vector.extract_strided_slice %790 {offsets = [0, 48], sizes = [8, 48], strides = [1, 1]} : vector<8x240xf32> to vector<8x48xf32>
    %830 = vector.extract_strided_slice %828 {offsets = [0, 0], sizes = [8, 16], strides = [1, 1]} : vector<8x48xf32> to vector<8x16xf32>
    %831 = vector.extract_strided_slice %829 {offsets = [0, 0], sizes = [8, 16], strides = [1, 1]} : vector<8x48xf32> to vector<8x16xf32>
    %832 = arith.addf %830, %831 : vector<8x16xf32>
    %833 = arith.negf %832 : vector<8x16xf32>
    %834 = math.exp %833 : vector<8x16xf32>
    %cst_197 = arith.constant 1.000000e+00 : f32
    %835 = vector.broadcast %cst_197 : f32 to vector<8x16xf32>
    %836 = arith.addf %835, %834 : vector<8x16xf32>
    %837 = arith.divf %835, %836 : vector<8x16xf32>
    %838 = vector.extract_strided_slice %828 {offsets = [0, 16], sizes = [8, 16], strides = [1, 1]} : vector<8x48xf32> to vector<8x16xf32>
    %839 = vector.extract_strided_slice %829 {offsets = [0, 16], sizes = [8, 16], strides = [1, 1]} : vector<8x48xf32> to vector<8x16xf32>
    %840 = arith.addf %838, %839 : vector<8x16xf32>
    %841 = arith.negf %840 : vector<8x16xf32>
    %842 = math.exp %841 : vector<8x16xf32>
    %cst_198 = arith.constant 1.000000e+00 : f32
    %843 = vector.broadcast %cst_198 : f32 to vector<8x16xf32>
    %844 = arith.addf %843, %842 : vector<8x16xf32>
    %845 = arith.divf %843, %844 : vector<8x16xf32>
    %846 = vector.extract_strided_slice %828 {offsets = [0, 32], sizes = [8, 16], strides = [1, 1]} : vector<8x48xf32> to vector<8x16xf32>
    %847 = vector.extract_strided_slice %829 {offsets = [0, 32], sizes = [8, 16], strides = [1, 1]} : vector<8x48xf32> to vector<8x16xf32>
    %848 = arith.mulf %837, %847 : vector<8x16xf32>
    %849 = arith.addf %846, %848 : vector<8x16xf32>
    %850 = math.tanh %849 : vector<8x16xf32>
    %cst_199 = arith.constant 1.000000e+00 : f32
    %851 = vector.broadcast %cst_199 : f32 to vector<8x16xf32>
    %852 = arith.subf %851, %845 : vector<8x16xf32>
    %853 = arith.mulf %852, %850 : vector<8x16xf32>
    %854 = arith.mulf %845, %746 : vector<8x16xf32>
    %855 = arith.addf %853, %854 : vector<8x16xf32>
    %cst_200 = arith.constant 6.000000e+00 : f32
    %856 = vector.broadcast %cst_200 : f32 to vector<8x1xf32>
    %857 = arith.cmpf ogt, %4, %856 : vector<8x1xf32>
    %cst_201 = arith.constant 0.000000e+00 : f32
    %858 = vector.shape_cast %857 : vector<8x1xi1> to vector<8x1xi1>
    %859 = vector.broadcast %858 : vector<8x1xi1> to vector<8x16xi1>
    %860 = vector.broadcast %cst_201 : f32 to vector<8x16xf32>
    %861 = arith.select %859, %855, %860 : vector<8x16xi1>, vector<8x16xf32>
    %862 = vector.shape_cast %857 : vector<8x1xi1> to vector<8x1xi1>
    %863 = vector.broadcast %862 : vector<8x1xi1> to vector<8x16xi1>
    %864 = arith.select %863, %855, %746 : vector<8x16xi1>, vector<8x16xf32>
    %c48_202 = arith.constant 48 : index
    %c0_203 = arith.constant 0 : index
    %865 = vector.load %arg11[%c48_202, %c0_203] : memref<64x16xf32, #tpu.memory_space<vmem>>, vector<8x16xf32>
    tpu.vector_store %arg11[%c48_202, %c0_203], %861 {strides = array<i32>} : memref<64x16xf32, #tpu.memory_space<vmem>>, vector<8x16xf32>,
    %c48_204 = arith.constant 48 : index
    %c0_205 = arith.constant 0 : index
    %866 = vector.load %arg10[%c48_204, %c0_205] : memref<64x16xf32, #tpu.memory_space<vmem>>, vector<8x16xf32>
    %867 = arith.mulf %866, %861 : vector<8x16xf32>
    %868 = vector.extract_strided_slice %790 {offsets = [0, 192], sizes = [8, 48], strides = [1, 1]} : vector<8x240xf32> to vector<8x48xf32>
    %869 = vector.extract_strided_slice %790 {offsets = [0, 96], sizes = [8, 48], strides = [1, 1]} : vector<8x240xf32> to vector<8x48xf32>
    %870 = vector.extract_strided_slice %868 {offsets = [0, 0], sizes = [8, 16], strides = [1, 1]} : vector<8x48xf32> to vector<8x16xf32>
    %871 = vector.extract_strided_slice %869 {offsets = [0, 0], sizes = [8, 16], strides = [1, 1]} : vector<8x48xf32> to vector<8x16xf32>
    %872 = arith.addf %870, %871 : vector<8x16xf32>
    %873 = arith.negf %872 : vector<8x16xf32>
    %874 = math.exp %873 : vector<8x16xf32>
    %cst_206 = arith.constant 1.000000e+00 : f32
    %875 = vector.broadcast %cst_206 : f32 to vector<8x16xf32>
    %876 = arith.addf %875, %874 : vector<8x16xf32>
    %877 = arith.divf %875, %876 : vector<8x16xf32>
    %878 = vector.extract_strided_slice %868 {offsets = [0, 16], sizes = [8, 16], strides = [1, 1]} : vector<8x48xf32> to vector<8x16xf32>
    %879 = vector.extract_strided_slice %869 {offsets = [0, 16], sizes = [8, 16], strides = [1, 1]} : vector<8x48xf32> to vector<8x16xf32>
    %880 = arith.addf %878, %879 : vector<8x16xf32>
    %881 = arith.negf %880 : vector<8x16xf32>
    %882 = math.exp %881 : vector<8x16xf32>
    %cst_207 = arith.constant 1.000000e+00 : f32
    %883 = vector.broadcast %cst_207 : f32 to vector<8x16xf32>
    %884 = arith.addf %883, %882 : vector<8x16xf32>
    %885 = arith.divf %883, %884 : vector<8x16xf32>
    %886 = vector.extract_strided_slice %868 {offsets = [0, 32], sizes = [8, 16], strides = [1, 1]} : vector<8x48xf32> to vector<8x16xf32>
    %887 = vector.extract_strided_slice %869 {offsets = [0, 32], sizes = [8, 16], strides = [1, 1]} : vector<8x48xf32> to vector<8x16xf32>
    %888 = arith.mulf %877, %887 : vector<8x16xf32>
    %889 = arith.addf %886, %888 : vector<8x16xf32>
    %890 = math.tanh %889 : vector<8x16xf32>
    %cst_208 = arith.constant 1.000000e+00 : f32
    %891 = vector.broadcast %cst_208 : f32 to vector<8x16xf32>
    %892 = arith.subf %891, %885 : vector<8x16xf32>
    %893 = arith.mulf %892, %890 : vector<8x16xf32>
    %894 = arith.mulf %885, %782 : vector<8x16xf32>
    %895 = arith.addf %893, %894 : vector<8x16xf32>
    %cst_209 = arith.constant 5.000000e+00 : f32
    %896 = vector.broadcast %cst_209 : f32 to vector<8x1xf32>
    %897 = arith.cmpf ogt, %4, %896 : vector<8x1xf32>
    %898 = vector.shape_cast %897 : vector<8x1xi1> to vector<8x1xi1>
    %899 = vector.broadcast %898 : vector<8x1xi1> to vector<8x16xi1>
    %900 = arith.select %899, %895, %782 : vector<8x16xi1>, vector<8x16xf32>
    %cst_210 = arith.constant 0.000000e+00 : f32
    %901 = vector.shape_cast %897 : vector<8x1xi1> to vector<8x1xi1>
    %902 = vector.broadcast %901 : vector<8x1xi1> to vector<8x16xi1>
    %903 = vector.broadcast %cst_210 : f32 to vector<8x16xf32>
    %904 = arith.select %902, %895, %903 : vector<8x16xi1>, vector<8x16xf32>
    %c40_211 = arith.constant 40 : index
    %c0_212 = arith.constant 0 : index
    %905 = vector.load %arg12[%c40_211, %c0_212] : memref<64x16xf32, #tpu.memory_space<vmem>>, vector<8x16xf32>
    tpu.vector_store %arg12[%c40_211, %c0_212], %904 {strides = array<i32>} : memref<64x16xf32, #tpu.memory_space<vmem>>, vector<8x16xf32>,
    %906 = tpu.concatenate %827, %864, %900, %824, %867 in 1 : vector<8x16xf32>, vector<8x16xf32>, vector<8x16xf32>, vector<8x16xf32>, vector<8x16xf32> -> vector<8x80xf32>
    %cst_213 = arith.constant dense<0.000000e+00> : vector<8x240xf32>
    %907 = tpu.matmul %906, %75, %cst_213 {dimension_numbers = #tpu.dot_dimension_numbers<[1], [0], [0], [1], [0, 0, 1, 1], [], []>} : vector<8x80xf32>, vector<80x240xf32>, vector<8x240xf32> -> vector<8x240xf32>
    %908 = arith.addf %907, %74 : vector<8x240xf32>
    %909 = vector.extract_strided_slice %908 {offsets = [0, 144], sizes = [8, 48], strides = [1, 1]} : vector<8x240xf32> to vector<8x48xf32>
    %910 = vector.extract_strided_slice %908 {offsets = [0, 48], sizes = [8, 48], strides = [1, 1]} : vector<8x240xf32> to vector<8x48xf32>
    %911 = vector.extract_strided_slice %909 {offsets = [0, 0], sizes = [8, 16], strides = [1, 1]} : vector<8x48xf32> to vector<8x16xf32>
    %912 = vector.extract_strided_slice %910 {offsets = [0, 0], sizes = [8, 16], strides = [1, 1]} : vector<8x48xf32> to vector<8x16xf32>
    %913 = arith.addf %911, %912 : vector<8x16xf32>
    %914 = arith.negf %913 : vector<8x16xf32>
    %915 = math.exp %914 : vector<8x16xf32>
    %cst_214 = arith.constant 1.000000e+00 : f32
    %916 = vector.broadcast %cst_214 : f32 to vector<8x16xf32>
    %917 = arith.addf %916, %915 : vector<8x16xf32>
    %918 = arith.divf %916, %917 : vector<8x16xf32>
    %919 = vector.extract_strided_slice %909 {offsets = [0, 16], sizes = [8, 16], strides = [1, 1]} : vector<8x48xf32> to vector<8x16xf32>
    %920 = vector.extract_strided_slice %910 {offsets = [0, 16], sizes = [8, 16], strides = [1, 1]} : vector<8x48xf32> to vector<8x16xf32>
    %921 = arith.addf %919, %920 : vector<8x16xf32>
    %922 = arith.negf %921 : vector<8x16xf32>
    %923 = math.exp %922 : vector<8x16xf32>
    %cst_215 = arith.constant 1.000000e+00 : f32
    %924 = vector.broadcast %cst_215 : f32 to vector<8x16xf32>
    %925 = arith.addf %924, %923 : vector<8x16xf32>
    %926 = arith.divf %924, %925 : vector<8x16xf32>
    %927 = vector.extract_strided_slice %909 {offsets = [0, 32], sizes = [8, 16], strides = [1, 1]} : vector<8x48xf32> to vector<8x16xf32>
    %928 = vector.extract_strided_slice %910 {offsets = [0, 32], sizes = [8, 16], strides = [1, 1]} : vector<8x48xf32> to vector<8x16xf32>
    %929 = arith.mulf %918, %928 : vector<8x16xf32>
    %930 = arith.addf %927, %929 : vector<8x16xf32>
    %931 = math.tanh %930 : vector<8x16xf32>
    %cst_216 = arith.constant 1.000000e+00 : f32
    %932 = vector.broadcast %cst_216 : f32 to vector<8x16xf32>
    %933 = arith.subf %932, %926 : vector<8x16xf32>
    %934 = arith.mulf %933, %931 : vector<8x16xf32>
    %935 = arith.mulf %926, %864 : vector<8x16xf32>
    %936 = arith.addf %934, %935 : vector<8x16xf32>
    %cst_217 = arith.constant 7.000000e+00 : f32
    %937 = vector.broadcast %cst_217 : f32 to vector<8x1xf32>
    %938 = arith.cmpf ogt, %4, %937 : vector<8x1xf32>
    %cst_218 = arith.constant 0.000000e+00 : f32
    %939 = vector.shape_cast %938 : vector<8x1xi1> to vector<8x1xi1>
    %940 = vector.broadcast %939 : vector<8x1xi1> to vector<8x16xi1>
    %941 = vector.broadcast %cst_218 : f32 to vector<8x16xf32>
    %942 = arith.select %940, %936, %941 : vector<8x16xi1>, vector<8x16xf32>
    %943 = vector.shape_cast %938 : vector<8x1xi1> to vector<8x1xi1>
    %944 = vector.broadcast %943 : vector<8x1xi1> to vector<8x16xi1>
    %945 = arith.select %944, %936, %864 : vector<8x16xi1>, vector<8x16xf32>
    %c56_219 = arith.constant 56 : index
    %c0_220 = arith.constant 0 : index
    %946 = vector.load %arg11[%c56_219, %c0_220] : memref<64x16xf32, #tpu.memory_space<vmem>>, vector<8x16xf32>
    tpu.vector_store %arg11[%c56_219, %c0_220], %942 {strides = array<i32>} : memref<64x16xf32, #tpu.memory_space<vmem>>, vector<8x16xf32>,
    %c56_221 = arith.constant 56 : index
    %c0_222 = arith.constant 0 : index
    %947 = vector.load %arg10[%c56_221, %c0_222] : memref<64x16xf32, #tpu.memory_space<vmem>>, vector<8x16xf32>
    %948 = arith.mulf %947, %942 : vector<8x16xf32>
    %949 = vector.extract_strided_slice %908 {offsets = [0, 192], sizes = [8, 48], strides = [1, 1]} : vector<8x240xf32> to vector<8x48xf32>
    %950 = vector.extract_strided_slice %908 {offsets = [0, 96], sizes = [8, 48], strides = [1, 1]} : vector<8x240xf32> to vector<8x48xf32>
    %951 = vector.extract_strided_slice %949 {offsets = [0, 0], sizes = [8, 16], strides = [1, 1]} : vector<8x48xf32> to vector<8x16xf32>
    %952 = vector.extract_strided_slice %950 {offsets = [0, 0], sizes = [8, 16], strides = [1, 1]} : vector<8x48xf32> to vector<8x16xf32>
    %953 = arith.addf %951, %952 : vector<8x16xf32>
    %954 = arith.negf %953 : vector<8x16xf32>
    %955 = math.exp %954 : vector<8x16xf32>
    %cst_223 = arith.constant 1.000000e+00 : f32
    %956 = vector.broadcast %cst_223 : f32 to vector<8x16xf32>
    %957 = arith.addf %956, %955 : vector<8x16xf32>
    %958 = arith.divf %956, %957 : vector<8x16xf32>
    %959 = vector.extract_strided_slice %949 {offsets = [0, 16], sizes = [8, 16], strides = [1, 1]} : vector<8x48xf32> to vector<8x16xf32>
    %960 = vector.extract_strided_slice %950 {offsets = [0, 16], sizes = [8, 16], strides = [1, 1]} : vector<8x48xf32> to vector<8x16xf32>
    %961 = arith.addf %959, %960 : vector<8x16xf32>
    %962 = arith.negf %961 : vector<8x16xf32>
    %963 = math.exp %962 : vector<8x16xf32>
    %cst_224 = arith.constant 1.000000e+00 : f32
    %964 = vector.broadcast %cst_224 : f32 to vector<8x16xf32>
    %965 = arith.addf %964, %963 : vector<8x16xf32>
    %966 = arith.divf %964, %965 : vector<8x16xf32>
    %967 = vector.extract_strided_slice %949 {offsets = [0, 32], sizes = [8, 16], strides = [1, 1]} : vector<8x48xf32> to vector<8x16xf32>
    %968 = vector.extract_strided_slice %950 {offsets = [0, 32], sizes = [8, 16], strides = [1, 1]} : vector<8x48xf32> to vector<8x16xf32>
    %969 = arith.mulf %958, %968 : vector<8x16xf32>
    %970 = arith.addf %967, %969 : vector<8x16xf32>
    %971 = math.tanh %970 : vector<8x16xf32>
    %cst_225 = arith.constant 1.000000e+00 : f32
    %972 = vector.broadcast %cst_225 : f32 to vector<8x16xf32>
    %973 = arith.subf %972, %966 : vector<8x16xf32>
    %974 = arith.mulf %973, %971 : vector<8x16xf32>
    %975 = arith.mulf %966, %900 : vector<8x16xf32>
    %976 = arith.addf %974, %975 : vector<8x16xf32>
    %cst_226 = arith.constant 6.000000e+00 : f32
    %977 = vector.broadcast %cst_226 : f32 to vector<8x1xf32>
    %978 = arith.cmpf ogt, %4, %977 : vector<8x1xf32>
    %979 = vector.shape_cast %978 : vector<8x1xi1> to vector<8x1xi1>
    %980 = vector.broadcast %979 : vector<8x1xi1> to vector<8x16xi1>
    %981 = arith.select %980, %976, %900 : vector<8x16xi1>, vector<8x16xf32>
    %cst_227 = arith.constant 0.000000e+00 : f32
    %982 = vector.shape_cast %978 : vector<8x1xi1> to vector<8x1xi1>
    %983 = vector.broadcast %982 : vector<8x1xi1> to vector<8x16xi1>
    %984 = vector.broadcast %cst_227 : f32 to vector<8x16xf32>
    %985 = arith.select %983, %976, %984 : vector<8x16xi1>, vector<8x16xf32>
    %c48_228 = arith.constant 48 : index
    %c0_229 = arith.constant 0 : index
    %986 = vector.load %arg12[%c48_228, %c0_229] : memref<64x16xf32, #tpu.memory_space<vmem>>, vector<8x16xf32>
    tpu.vector_store %arg12[%c48_228, %c0_229], %985 {strides = array<i32>} : memref<64x16xf32, #tpu.memory_space<vmem>>, vector<8x16xf32>,
    %987 = tpu.concatenate %827, %945, %981, %824, %948 in 1 : vector<8x16xf32>, vector<8x16xf32>, vector<8x16xf32>, vector<8x16xf32>, vector<8x16xf32> -> vector<8x80xf32>
    %cst_230 = arith.constant dense<0.000000e+00> : vector<8x240xf32>
    %988 = tpu.matmul %987, %75, %cst_230 {dimension_numbers = #tpu.dot_dimension_numbers<[1], [0], [0], [1], [0, 0, 1, 1], [], []>} : vector<8x80xf32>, vector<80x240xf32>, vector<8x240xf32> -> vector<8x240xf32>
    %989 = arith.addf %988, %74 : vector<8x240xf32>
    %990 = vector.extract_strided_slice %989 {offsets = [0, 192], sizes = [8, 48], strides = [1, 1]} : vector<8x240xf32> to vector<8x48xf32>
    %991 = vector.extract_strided_slice %989 {offsets = [0, 96], sizes = [8, 48], strides = [1, 1]} : vector<8x240xf32> to vector<8x48xf32>
    %992 = vector.extract_strided_slice %990 {offsets = [0, 0], sizes = [8, 16], strides = [1, 1]} : vector<8x48xf32> to vector<8x16xf32>
    %993 = vector.extract_strided_slice %991 {offsets = [0, 0], sizes = [8, 16], strides = [1, 1]} : vector<8x48xf32> to vector<8x16xf32>
    %994 = arith.addf %992, %993 : vector<8x16xf32>
    %995 = arith.negf %994 : vector<8x16xf32>
    %996 = math.exp %995 : vector<8x16xf32>
    %cst_231 = arith.constant 1.000000e+00 : f32
    %997 = vector.broadcast %cst_231 : f32 to vector<8x16xf32>
    %998 = arith.addf %997, %996 : vector<8x16xf32>
    %999 = arith.divf %997, %998 : vector<8x16xf32>
    %1000 = vector.extract_strided_slice %990 {offsets = [0, 16], sizes = [8, 16], strides = [1, 1]} : vector<8x48xf32> to vector<8x16xf32>
    %1001 = vector.extract_strided_slice %991 {offsets = [0, 16], sizes = [8, 16], strides = [1, 1]} : vector<8x48xf32> to vector<8x16xf32>
    %1002 = arith.addf %1000, %1001 : vector<8x16xf32>
    %1003 = arith.negf %1002 : vector<8x16xf32>
    %1004 = math.exp %1003 : vector<8x16xf32>
    %cst_232 = arith.constant 1.000000e+00 : f32
    %1005 = vector.broadcast %cst_232 : f32 to vector<8x16xf32>
    %1006 = arith.addf %1005, %1004 : vector<8x16xf32>
    %1007 = arith.divf %1005, %1006 : vector<8x16xf32>
    %1008 = vector.extract_strided_slice %990 {offsets = [0, 32], sizes = [8, 16], strides = [1, 1]} : vector<8x48xf32> to vector<8x16xf32>
    %1009 = vector.extract_strided_slice %991 {offsets = [0, 32], sizes = [8, 16], strides = [1, 1]} : vector<8x48xf32> to vector<8x16xf32>
    %1010 = arith.mulf %999, %1009 : vector<8x16xf32>
    %1011 = arith.addf %1008, %1010 : vector<8x16xf32>
    %1012 = math.tanh %1011 : vector<8x16xf32>
    %cst_233 = arith.constant 1.000000e+00 : f32
    %1013 = vector.broadcast %cst_233 : f32 to vector<8x16xf32>
    %1014 = arith.subf %1013, %1007 : vector<8x16xf32>
    %1015 = arith.mulf %1014, %1012 : vector<8x16xf32>
    %1016 = arith.mulf %1007, %981 : vector<8x16xf32>
    %1017 = arith.addf %1015, %1016 : vector<8x16xf32>
    %cst_234 = arith.constant 7.000000e+00 : f32
    %1018 = vector.broadcast %cst_234 : f32 to vector<8x1xf32>
    %1019 = arith.cmpf ogt, %4, %1018 : vector<8x1xf32>
    %cst_235 = arith.constant 0.000000e+00 : f32
    %1020 = vector.shape_cast %1019 : vector<8x1xi1> to vector<8x1xi1>
    %1021 = vector.broadcast %1020 : vector<8x1xi1> to vector<8x16xi1>
    %1022 = vector.broadcast %cst_235 : f32 to vector<8x16xf32>
    %1023 = arith.select %1021, %1017, %1022 : vector<8x16xi1>, vector<8x16xf32>
    %c56_236 = arith.constant 56 : index
    %c0_237 = arith.constant 0 : index
    %1024 = vector.load %arg12[%c56_236, %c0_237] : memref<64x16xf32, #tpu.memory_space<vmem>>, vector<8x16xf32>
    tpu.vector_store %arg12[%c56_236, %c0_237], %1023 {strides = array<i32>} : memref<64x16xf32, #tpu.memory_space<vmem>>, vector<8x16xf32>,
    %c0_238 = arith.constant 0 : index
    %c0_239 = arith.constant 0 : index
    %1025 = vector.load %arg11[%c0_238, %c0_239] : memref<64x16xf32, #tpu.memory_space<vmem>>, vector<64x16xf32>
    %c0_240 = arith.constant 0 : index
    %c0_241 = arith.constant 0 : index
    %1026 = vector.load %arg12[%c0_240, %c0_241] : memref<64x16xf32, #tpu.memory_space<vmem>>, vector<64x16xf32>
    %1027 = tpu.concatenate %1025, %1026 in 1 : vector<64x16xf32>, vector<64x16xf32> -> vector<64x32xf32>
    %c16_242 = arith.constant 16 : index
    %c53 = arith.constant 53 : index
    %1028 = vector.load %arg6[%c16_242, %c53] : memref<56x64xf32, #tpu.memory_space<vmem>>, vector<32x10xf32>
    %cst_243 = arith.constant dense<0.000000e+00> : vector<64x10xf32>
    %1029 = tpu.matmul %1027, %1028, %cst_243 {dimension_numbers = #tpu.dot_dimension_numbers<[1], [0], [0], [1], [0, 0, 1, 1], [], []>} : vector<64x32xf32>, vector<32x10xf32>, vector<64x10xf32> -> vector<64x10xf32>
    %c48_244 = arith.constant 48 : index
    %c53_245 = arith.constant 53 : index
    %1030 = vector.load %arg6[%c48_244, %c53_245] : memref<56x64xf32, #tpu.memory_space<vmem>>, vector<1x10xf32>
    %1031 = vector.broadcast %1030 : vector<1x10xf32> to vector<64x10xf32>
    %1032 = arith.addf %1029, %1031 : vector<64x10xf32>
    %1033 = tpu.iota {dimensions = array<i32: 1>} : vector<64x10xi32>
    %1034 = arith.negf %1032 : vector<64x10xf32>
    %1035 = math.exp %1034 : vector<64x10xf32>
    %cst_246 = arith.constant 1.000000e+00 : f32
    %1036 = vector.broadcast %cst_246 : f32 to vector<64x10xf32>
    %1037 = arith.addf %1036, %1035 : vector<64x10xf32>
    %1038 = arith.divf %1036, %1037 : vector<64x10xf32>
    %c5_i32 = arith.constant 5 : i32
    %1039 = vector.broadcast %c5_i32 : i32 to vector<64x10xi32>
    %1040 = arith.cmpi sge, %1033, %1039 : vector<64x10xi32>
    %c8_i32 = arith.constant 8 : i32
    %1041 = vector.broadcast %c8_i32 : i32 to vector<64x10xi32>
    %1042 = arith.cmpi slt, %1033, %1041 : vector<64x10xi32>
    %1043 = arith.andi %1040, %1042 : vector<64x10xi1>
    %cst_247 = arith.constant 0xFF800000 : f32
    %1044 = vector.broadcast %cst_247 : f32 to vector<64x10xf32>
    %1045 = arith.select %1043, %1032, %1044 : vector<64x10xi1>, vector<64x10xf32>
    %cst_248 = arith.constant dense<0xFF800000> : vector<64xf32>
    %1046 = vector.multi_reduction <maximumf>, %1045, %cst_248 [1] : vector<64x10xf32> to vector<64xf32>
    %1047 = vector.shape_cast %1046 : vector<64xf32> to vector<64x1xf32>
    %1048 = vector.broadcast %1047 : vector<64x1xf32> to vector<64x10xf32>
    %1049 = arith.subf %1032, %1048 : vector<64x10xf32>
    %1050 = math.exp %1049 : vector<64x10xf32>
    %cst_249 = arith.constant 0.000000e+00 : f32
    %1051 = vector.broadcast %cst_249 : f32 to vector<64x10xf32>
    %1052 = arith.select %1043, %1050, %1051 : vector<64x10xi1>, vector<64x10xf32>
    %cst_250 = arith.constant dense<0.000000e+00> : vector<64xf32>
    %1053 = vector.multi_reduction <add>, %1052, %cst_250 [1] : vector<64x10xf32> to vector<64xf32>
    %1054 = vector.shape_cast %1053 : vector<64xf32> to vector<64x1xf32>
    %1055 = vector.broadcast %1054 : vector<64x1xf32> to vector<64x10xf32>
    %1056 = arith.divf %1050, %1055 : vector<64x10xf32>
    %1057 = arith.select %1043, %1056, %1038 : vector<64x10xi1>, vector<64x10xf32>
    %1058 = tpu.iota {dimensions = array<i32: 1>} : vector<64x10xi32>
    %c0_251 = arith.constant 0 : index
    %c20 = arith.constant 20 : index
    %1059 = vector.load %arg0[%c0_251, %c20] : memref<64x32xf32, #tpu.memory_space<vmem>>, vector<64x1xf32>
    %c0_i32_252 = arith.constant 0 : i32
    %1060 = vector.broadcast %c0_i32_252 : i32 to vector<64x10xi32>
    %1061 = arith.cmpi eq, %1058, %1060 : vector<64x10xi32>
    %cst_253 = arith.constant 0.000000e+00 : f32
    %1062 = vector.shape_cast %1059 : vector<64x1xf32> to vector<64x1xf32>
    %1063 = vector.broadcast %1062 : vector<64x1xf32> to vector<64x10xf32>
    %1064 = vector.broadcast %cst_253 : f32 to vector<64x10xf32>
    %1065 = arith.select %1061, %1063, %1064 : vector<64x10xi1>, vector<64x10xf32>
    %1066 = arith.addf %1057, %1065 : vector<64x10xf32>
    %c0_254 = arith.constant 0 : index
    %c0_255 = arith.constant 0 : index
    %1067 = vector.load %arg8[%c0_254, %c0_255] : memref<64x10xf32, #tpu.memory_space<vmem>>, vector<64x10xf32>
    tpu.vector_store %arg8[%c0_254, %c0_255], %1066 {strides = array<i32>} : memref<64x10xf32, #tpu.memory_space<vmem>>, vector<64x10xf32>,
    return
  }
}

</mosaic_0001>

<llo_original>
// kernel: decoder_forward.1
$region0: #{decoder_forward.1}
  #allocation0 [shape = 'u32[]', space=smem, size = 0x4, offset = 0x4, fixed_abs, tag = 'smem constant byte address 0x4 - core index']
  #allocation1 [shape = 'u32[144,128]{1,0:T(1,128)}', space=vmem, size = 0x12000, scoped, tag = 'internal scratch']
  #allocation2 [shape = 'f32[64,48]{1,0:T(8,128)}', space=vmem, size = 0x8000, scoped, tag = 'scratch operand']
  #allocation3 [shape = 'f32[64,16]{1,0:T(8,128)}', space=vmem, size = 0x8000, scoped, tag = 'scratch operand']
  #allocation4 [shape = 'f32[64,16]{1,0:T(8,128)}', space=vmem, size = 0x8000, scoped, tag = 'scratch operand']
  #allocation5 [shape = 'f32[64,16]{1,0:T(8,128)}', space=vmem, size = 0x8000, scoped, tag = 'scratch operand']
  %s0 = inlined_call_operand.vmem [shape: f32[64,32], index: 0, kind: input, shape index: {}]
  %s1 = inlined_call_operand.vmem [shape: f32[64,8], index: 1, kind: input, shape index: {}]
  %s2 = inlined_call_operand.vmem [shape: f32[8,65], index: 2, kind: input, shape index: {}]
  %s3 = inlined_call_operand.vmem [shape: f32[40,128], index: 3, kind: input, shape index: {}]
  %s4 = inlined_call_operand.vmem [shape: f32[80,240], index: 4, kind: input, shape index: {}]
  %s5 = inlined_call_operand.vmem [shape: f32[1,240], index: 5, kind: input, shape index: {}]
  %s6 = inlined_call_operand.vmem [shape: f32[56,64], index: 6, kind: input, shape index: {}]
  %s7 = inlined_call_operand.vmem [shape: f32[8,5], index: 7, kind: output, shape index: {0}]
  %s8 = inlined_call_operand.vmem [shape: f32[64,10], index: 8, kind: output, shape index: {1}]
  %9 = xla_tuple %s7, %s8
  %s10 = sld [smem:[#allocation0]]
  $region46: #{decoder_forward.1} parent=0
    _
  %s12 = ssub.s32 1, %s10
  %s13 = scalar_select 0, %s12, %s10
  // Predicated region
  $region2: #{decoder_forward.1} parent=0 // pred_check
    _
  $region3: #{decoder_forward.1} parent=0 // pred_check_branch
    %15 = sbr.rel (0) target = $region5
  $region4: #{decoder_forward.1} parent=0 // pred_region
    _
  $region5: #{decoder_forward.1} parent=0 // pred_fallthru
    _
  // Predicated region
  $region6: #{decoder_forward.1} parent=0 // pred_check
    _
  $region7: #{decoder_forward.1} parent=0 // pred_check_branch
    %17 = sbr.rel (0) target = $region9
  $region8: #{decoder_forward.1} parent=0 // pred_region
    _
  $region9: #{decoder_forward.1} parent=0 // pred_fallthru
    _
  // Predicated region
  $region10: #{decoder_forward.1} parent=0 // pred_check
    _
  $region11: #{decoder_forward.1} parent=0 // pred_check_branch
    %19 = sbr.rel (0) target = $region13
  $region12: #{decoder_forward.1} parent=0 // pred_region
    _
  $region13: #{decoder_forward.1} parent=0 // pred_fallthru
    _
  // Predicated region
  $region14: #{decoder_forward.1} parent=0 // pred_check
    _
  $region15: #{decoder_forward.1} parent=0 // pred_check_branch
    %21 = sbr.rel (0) target = $region17
  $region16: #{decoder_forward.1} parent=0 // pred_region
    _
  $region17: #{decoder_forward.1} parent=0 // pred_fallthru
    _
  // Predicated region
  $region18: #{decoder_forward.1} parent=0 // pred_check
    _
  $region19: #{decoder_forward.1} parent=0 // pred_check_branch
    %23 = sbr.rel (0) target = $region21
  $region20: #{decoder_forward.1} parent=0 // pred_region
    _
  $region21: #{decoder_forward.1} parent=0 // pred_fallthru
    _
  // Predicated region
  $region22: #{decoder_forward.1} parent=0 // pred_check
    _
  $region23: #{decoder_forward.1} parent=0 // pred_check_branch
    %25 = sbr.rel (0) target = $region25
  $region24: #{decoder_forward.1} parent=0 // pred_region
    _
  $region25: #{decoder_forward.1} parent=0 // pred_fallthru
    _
  // Predicated region
  $region26: #{decoder_forward.1} parent=0 // pred_check
    _
  $region27: #{decoder_forward.1} parent=0 // pred_check_branch
    %27 = sbr.rel (0) target = $region29
  $region28: #{decoder_forward.1} parent=0 // pred_region
    _
  $region29: #{decoder_forward.1} parent=0 // pred_fallthru
    _
  %v28 = vld [vmem:[%s2] sm:$0xff]
  %v29 = vld [vmem:[%s6] sm:$0xff]
  %v30 = vld [vmem:[%s6 + $0x8] sm:$0xff]
  %vm31 = vcmask 130048
  %v33 = vsel %vm31, %v28, 0
  %35 = vmatprep.subr.mxu0 0.0
  %36 = vmatpush1.msra.mxu0 %v29
  %37 = vmatprep.subr.mxu0 0.0
  %38 = vmatpush1.msra.mxu0 %v30
  %39 = vmatprep.subr.mxu0 0.0
  %40 = vmatpush1.msra.mxu0 0.0
  %41 = vmatprep.subr.mxu0 0.0
  %42 = vmatpush1.msra.mxu0 0.0
  %43 = vmatprep.subr.mxu0 0.0
  %44 = vmatpush1.msra.mxu0 0.0
  %45 = vmatprep.subr.mxu0 0.0
  %46 = vmatpush1.msra.mxu0 0.0
  %47 = vmatprep.subr.mxu0 0.0
  %48 = vmatpush1.msra.mxu0 0.0
  %49 = vmatprep.subr.mxu0 0.0
  %50 = vmatpush1.msra.mxu0 0.0
  %51 = vmatprep.subr.mxu0 0.0
  %52 = vmatpush1.msra.mxu0 0.0
  %53 = vmatprep.subr.mxu0 0.0
  %54 = vmatpush1.msra.mxu0 0.0
  %55 = vmatprep.subr.mxu0 0.0
  %56 = vmatpush1.msra.mxu0 0.0
  %57 = vmatprep.subr.mxu0 0.0
  %58 = vmatpush1.msra.mxu0 0.0
  %59 = vmatprep.subr.mxu0 0.0
  %60 = vmatpush1.msra.mxu0 0.0
  %61 = vmatprep.subr.mxu0 0.0
  %62 = vmatpush1.msra.mxu0 0.0
  %63 = vmatprep.subr.mxu0 0.0
  %64 = vmatpush1.msra.mxu0 0.0
  %65 = vmatprep.subr.mxu0 0.0
  %66 = vmatpush1.msra.mxu0 0.0
  %67 = vmatprep.subr.mxu0 0.0
  %68 = vmatpush1.msra.mxu0 0.0
  %69 = vmatprep.subr.mxu0 0.0
  %70 = vmatpush1.msra.mxu0 0.0
  %71 = vmatprep.subr.mxu0 0.0
  %72 = vmatpush1.msra.mxu0 0.0
  %73 = vmatprep.subr.mxu0 0.0
  %74 = vmatpush1.msra.mxu0 0.0
  %75 = vmatprep.subr.mxu0 0.0
  %76 = vmatpush1.msra.mxu0 0.0
  %77 = vmatprep.subr.mxu0 0.0
  %78 = vmatpush1.msra.mxu0 0.0
  %79 = vmatprep.subr.mxu0 0.0
  %80 = vmatpush1.msra.mxu0 0.0
  %81 = vmatprep.subr.mxu0 0.0
  %82 = vmatpush1.msra.mxu0 0.0
  %83 = vmatprep.subr.mxu0 0.0
  %84 = vmatpush1.msra.mxu0 0.0
  %85 = vmatprep.subr.mxu0 0.0
  %86 = vmatpush1.msra.mxu0 0.0
  %87 = vmatprep.subr.mxu0 0.0
  %88 = vmatpush1.msra.mxu0 0.0
  %89 = vmatprep.subr.mxu0 0.0
  %90 = vmatpush1.msra.mxu0 0.0
  %91 = vmatprep.subr.mxu0 0.0
  %92 = vmatpush1.msra.mxu0 0.0
  %93 = vmatprep.subr.mxu0 0.0
  %94 = vmatpush1.msra.mxu0 0.0
  %95 = vmatprep.subr.mxu0 0.0
  %96 = vmatpush1.msra.mxu0 0.0
  %97 = vmatprep.subr.mxu0 0.0
  %98 = vmatpush1.msra.mxu0 0.0
  %99 = vmatprep.mubr.f32.mxu0 0.0
  %100 = vmatmul.mubr.f32.gmra.mrb[0].mxu0 %v33
  %v101 = vpop.f32.mrb[0].mxu0
  %v102 = vadd.f32 0.0, %v101
  %v103 = vpop.f32.mrb[0].mxu0
  %104 = vdwg.mxu0
  %v105 = vld [vmem:[%s6 + $0x30] sm:$0x1]
  %v106 = vlaneseq
  %v107 = vshrl.u32 %v106, 7
  %v108 = vsub.s32 0, %v107
  %v109 = vrot.slane %v105, %v108
  %v110 = vadd.f32 %v102, %v109
  %v111 = vlaneseq
  %v112 = vand.u32 %v111, 127
  %v113 = vxor.u32 %v110, 2147483648
  %v114 = vmul.f32 %v113, 1.442695
  %v115 = vpow.pop %v114
  %v116 = vadd.f32 %v115, 1.0
  %v117 = vrcp.pop %v116
  %v118 = vmul.f32 1.0, %v117
  %vm119 = vcmp.ge.s32.totalorder %v112, 0
  %vm120 = vcmp.lt.s32.totalorder %v112, 3
  %vm121 = vmand %vm119, %vm120
  %v122 = vsel %vm121, %v110, -inf
  %vm123 = vcmask 39936
  %v124 = vsel %vm123, %v122, -inf
  %125 = vmax.xlane.f32.xlu0 %v124
  %v126 = vpop.xlane.xlu0 %125
  %v127 = vsub.f32 %v110, %v126
  %v128 = vmul.f32 %v127, 1.442695
  %v129 = vpow.pop %v128
  %v130 = vsel %vm121, %v129, 0.0
  %v131 = vsel %vm123, %v130, 0.0
  %132 = vadd.xlane.f32.xlu0 %v131
  %v133 = vpop.xlane.xlu0 %132
  %v134 = vrcp.pop %v133
  %v135 = vmul.f32 %v129, %v134
  %v136 = vsel %vm121, %v135, %v118
  %137 = vst.msk [vmem:[%s7] sm:$0xff] %vm123, %v136
  %v138 = vld [vmem:[%s0] sm:$0xff]
  %v139 = vld [vmem:[%s0 + $0x8] sm:$0xff]
  %v140 = vld [vmem:[%s0 + $0x10] sm:$0xff]
  %v141 = vld [vmem:[%s0 + $0x18] sm:$0xff]
  %v142 = vld [vmem:[%s0 + $0x20] sm:$0xff]
  %v143 = vld [vmem:[%s0 + $0x28] sm:$0xff]
  %v144 = vld [vmem:[%s0 + $0x30] sm:$0xff]
  %v145 = vld [vmem:[%s0 + $0x38] sm:$0xff]
  %v146 = vld [vmem:[%s3] sm:$0xff]
  %v147 = vld [vmem:[%s3 + $0x8] sm:$0xff]
  %v148 = vld [vmem:[%s3 + $0x10] sm:$0xff]
  %v149 = vld [vmem:[%s3 + $0x18] sm:$0xff]
  %v150 = vld [vmem:[%s3 + $0x20] sm:$0x1]
  %v151 = vlaneseq
  %v152 = vshrl.u32 %v151, 7
  %v153 = vsub.s32 0, %v152
  %v154 = vrot.slane %v150, %v153
  %vm155 = vcmask 261120
  %v157 = vsel %vm155, %v138, 0
  %v160 = vsel %vm155, %v139, 0
  %v163 = vsel %vm155, %v140, 0
  %v166 = vsel %vm155, %v141, 0
  %v169 = vsel %vm155, %v142, 0
  %v172 = vsel %vm155, %v143, 0
  %v175 = vsel %vm155, %v144, 0
  %v178 = vsel %vm155, %v145, 0
  %180 = vmatprep.subr.mxu0 0.0
  %181 = vmatpush1.msra.mxu0 %v146
  %182 = vmatprep.subr.mxu0 0.0
  %183 = vmatpush1.msra.mxu0 %v147
  %184 = vmatprep.subr.mxu0 0.0
  %185 = vmatpush1.msra.mxu0 %v148
  %186 = vmatprep.subr.mxu0 0.0
  %187 = vmatpush1.msra.mxu0 %v149
  %188 = vmatprep.subr.mxu0 0.0
  %189 = vmatpush1.msra.mxu0 0.0
  %190 = vmatprep.subr.mxu0 0.0
  %191 = vmatpush1.msra.mxu0 0.0
  %192 = vmatprep.subr.mxu0 0.0
  %193 = vmatpush1.msra.mxu0 0.0
  %194 = vmatprep.subr.mxu0 0.0
  %195 = vmatpush1.msra.mxu0 0.0
  %196 = vmatprep.subr.mxu0 0.0
  %197 = vmatpush1.msra.mxu0 0.0
  %198 = vmatprep.subr.mxu0 0.0
  %199 = vmatpush1.msra.mxu0 0.0
  %200 = vmatprep.subr.mxu0 0.0
  %201 = vmatpush1.msra.mxu0 0.0
  %202 = vmatprep.subr.mxu0 0.0
  %203 = vmatpush1.msra.mxu0 0.0
  %204 = vmatprep.subr.mxu0 0.0
  %205 = vmatpush1.msra.mxu0 0.0
  %206 = vmatprep.subr.mxu0 0.0
  %207 = vmatpush1.msra.mxu0 0.0
  %208 = vmatprep.subr.mxu0 0.0
  %209 = vmatpush1.msra.mxu0 0.0
  %210 = vmatprep.subr.mxu0 0.0
  %211 = vmatpush1.msra.mxu0 0.0
  %212 = vmatprep.subr.mxu0 0.0
  %213 = vmatpush1.msra.mxu0 0.0
  %214 = vmatprep.subr.mxu0 0.0
  %215 = vmatpush1.msra.mxu0 0.0
  %216 = vmatprep.subr.mxu0 0.0
  %217 = vmatpush1.msra.mxu0 0.0
  %218 = vmatprep.subr.mxu0 0.0
  %219 = vmatpush1.msra.mxu0 0.0
  %220 = vmatprep.subr.mxu0 0.0
  %221 = vmatpush1.msra.mxu0 0.0
  %222 = vmatprep.subr.mxu0 0.0
  %223 = vmatpush1.msra.mxu0 0.0
  %224 = vmatprep.subr.mxu0 0.0
  %225 = vmatpush1.msra.mxu0 0.0
  %226 = vmatprep.subr.mxu0 0.0
  %227 = vmatpush1.msra.mxu0 0.0
  %228 = vmatprep.subr.mxu0 0.0
  %229 = vmatpush1.msra.mxu0 0.0
  %230 = vmatprep.subr.mxu0 0.0
  %231 = vmatpush1.msra.mxu0 0.0
  %232 = vmatprep.subr.mxu0 0.0
  %233 = vmatpush1.msra.mxu0 0.0
  %234 = vmatprep.subr.mxu0 0.0
  %235 = vmatpush1.msra.mxu0 0.0
  %236 = vmatprep.subr.mxu0 0.0
  %237 = vmatpush1.msra.mxu0 0.0
  %238 = vmatprep.subr.mxu0 0.0
  %239 = vmatpush1.msra.mxu0 0.0
  %240 = vmatprep.subr.mxu0 0.0
  %241 = vmatpush1.msra.mxu0 0.0
  %242 = vmatprep.subr.mxu0 0.0
  %243 = vmatpush1.msra.mxu0 0.0
  %244 = vmatprep.mubr.f32.mxu0 0.0
  %245 = vmatmul.mubr.f32.gmra.mrb[0].mxu0 %v157
  %v246 = vpop.f32.mrb[0].mxu0
  %v247 = vadd.f32 %v154, %v246
  %v248 = vpop.f32.mrb[0].mxu0
  %249 = vmatprep.mubr.f32.mxu0 0.0
  %250 = vmatmul.mubr.f32.gmra.mrb[0].mxu0 %v160
  %v251 = vpop.f32.mrb[0].mxu0
  %v252 = vadd.f32 %v154, %v251
  %v253 = vpop.f32.mrb[0].mxu0
  %254 = vmatprep.mubr.f32.mxu0 0.0
  %255 = vmatmul.mubr.f32.gmra.mrb[0].mxu0 %v163
  %v256 = vpop.f32.mrb[0].mxu0
  %v257 = vadd.f32 %v154, %v256
  %v258 = vpop.f32.mrb[0].mxu0
  %259 = vmatprep.mubr.f32.mxu0 0.0
  %260 = vmatmul.mubr.f32.gmra.mrb[0].mxu0 %v166
  %v261 = vpop.f32.mrb[0].mxu0
  %v262 = vadd.f32 %v154, %v261
  %v263 = vpop.f32.mrb[0].mxu0
  %264 = vmatprep.mubr.f32.mxu0 0.0
  %265 = vmatmul.mubr.f32.gmra.mrb[0].mxu0 %v169
  %v266 = vpop.f32.mrb[0].mxu0
  %v267 = vadd.f32 %v154, %v266
  %v268 = vpop.f32.mrb[0].mxu0
  %269 = vmatprep.mubr.f32.mxu0 0.0
  %270 = vmatmul.mubr.f32.gmra.mrb[0].mxu0 %v172
  %v271 = vpop.f32.mrb[0].mxu0
  %v272 = vadd.f32 %v154, %v271
  %v273 = vpop.f32.mrb[0].mxu0
  %274 = vmatprep.mubr.f32.mxu0 0.0
  %275 = vmatmul.mubr.f32.gmra.mrb[0].mxu0 %v175
  %v276 = vpop.f32.mrb[0].mxu0
  %v277 = vadd.f32 %v154, %v276
  %v278 = vpop.f32.mrb[0].mxu0
  %279 = vmatprep.mubr.f32.mxu0 0.0
  %280 = vmatmul.mubr.f32.gmra.mrb[0].mxu0 %v178
  %v281 = vpop.f32.mrb[0].mxu0
  %v282 = vadd.f32 %v154, %v281
  %v283 = vpop.f32.mrb[0].mxu0
  %284 = vdwg.mxu0
  %vm285 = vcmp.eq.s32.totalorder %v112, 0
  %v286 = vand.u32 2147483647, %v247
  %vm287 = vcmp.le.f32.partialorder %v286, 0.7853982
  %vm288 = vcmp.lt.s32.totalorder %v247, 0
  %v289 = vand.u32 %v247, 2139095040
  %v290 = vshrl.u32 %v289, 23
  %v291 = vsub.s32 %v290, 127
  %v292 = vand.u32 2147483647, %v247
  %v293 = vand.u32 %v292, 8388607
  %v294 = vor.u32 %v293, 8388608
  %v295 = vsub.s32 0, %v294
  %v296 = vadd.s32 %v291, 1
  %vm297 = vcmp.gt.s32.totalorder %v296, 0
  %v298 = vsel %vm297, %v296, 0
  %v299 = vshrl.u32 %v298, 5
  %v300 = vand.u32 %v298, 31
  %v301 = vsub.s32 32, %v300
  %v302 = vshrl.u32 683565275, %v301
  %v303 = vshll.u32 683565275, %v300
  %v304 = vshrl.u32 2475754826, %v301
  %v305 = vor.u32 %v303, %v304
  %v306 = vshll.u32 2475754826, %v300
  %v307 = vshrl.u32 2131351028, %v301
  %v308 = vor.u32 %v306, %v307
  %v309 = vshll.u32 2131351028, %v300
  %v310 = vshrl.u32 2102212464, %v301
  %v311 = vor.u32 %v309, %v310
  %v312 = vshll.u32 2102212464, %v300
  %v313 = vshrl.u32 920167782, %v301
  %v314 = vor.u32 %v312, %v313
  %v315 = vshll.u32 920167782, %v300
  %v316 = vshrl.u32 1326507024, %v301
  %v317 = vor.u32 %v315, %v316
  %vm318 = vcmp.lt.s32.totalorder %v299, 1
  %vm319 = vcmp.lt.s32.totalorder %v299, 2
  %vm320 = vcmp.lt.s32.totalorder %v299, 3
  %vm321 = vcmp.lt.s32.totalorder %v299, 4
  %v322 = vsel %vm318, %v302, %v305
  %v323 = vsel %vm321, %v311, 2102212464
  %v324 = vsel %vm320, %v308, %v323
  %v325 = vsel %vm319, %v322, %v324
  %v326 = vsel %vm318, %v305, %v308
  %v327 = vsel %vm321, %v314, 920167782
  %v328 = vsel %vm320, %v311, %v327
  %v329 = vsel %vm319, %v326, %v328
  %v330 = vsel %vm318, %v308, %v311
  %v331 = vsel %vm321, %v317, 1326507024
  %v332 = vsel %vm320, %v314, %v331
  %v333 = vsel %vm319, %v330, %v332
  %v334 = vshll.u32 %v294, 8
  %v335 = vmul.u32.u64.compose %v334, %v333
  %v336 = vextract.low.u32 %v335
  %v337 = vextract.high.u32 %v335
  %v338 = vmul.u32.u64.compose %v334, %v329
  %v339 = vextract.low.u32 %v338
  %v340 = vextract.high.u32 %v338
  %v341 = vmul.u32 %v334, %v325
  %v342 = vadd.s32 %v337, %v339
  %vm343 = vc.u32 %v337, %v339
  %v344 = vadd.s32 %v340, 1
  %v345 = vsel %vm343, %v344, %v340
  %v346 = vadd.s32 %v341, %v345
  %v347 = vadd.s32 %v346, 536870912
  %v348 = vshrl.u32 %v347, 30
  %v349 = vshll.u32 %v348, 30
  %v350 = vsub.s32 %v346, %v349
  %vm351 = vcmp.lt.s32.totalorder %v350, 0
  %v352 = vsub.s32 0, %v350
  %v353 = vsel %vm351, %v352, %v350
  %v354 = vclz %v353
  %v355 = vsub.s32 %v354, 2
  %vm356 = vcmp.gt.s32.totalorder 0, %v355
  %v357 = vsel %vm356, 0, %v355
  %v358 = vsub.s32 32, %v357
  %v359 = vshll.u32 %v350, %v357
  %v360 = vshrl.u32 %v342, %v358
  %v361 = vor.u32 %v359, %v360
  %v362 = vsub.s32 4294967266, %v357
  %v363 = vadd.s32 %v362, 127
  %v364 = vshll.u32 %v363, 23
  %v365 = vor.u32 4788187, %v364
  %v366 = vand.u32 2147483647, %v365
  %v368 = vcvt.s32.f32 %v361
  %v369 = vmul.f32 %v368, %v366
  %v370 = vxor.u32 %v369, 2147483648
  %v371 = vsel %vm288, %v370, %v369
  %v372 = vsub.s32 4, %v348
  %v373 = vsel %vm288, %v372, %v348
  %v374 = vsel %vm287, %v247, %v371
  %v375 = vsel %vm287, 0, %v373
  %v376 = vcosq.f32.pop %v374
  %v377 = vsinq.f32.pop %v374
  %vm378 = vweird.f32 %v247
  %v379 = vadd.s32 %v375, 3
  %v380 = vand.u32 %v379, 3
  %vm381 = vcmp.lt.s32.totalorder %v380, 2
  %vm382 = vcmp.eq.s32.totalorder %v380, 0
  %v383 = vxor.u32 %v377, 2147483648
  %v384 = vsel %vm382, %v376, %v383
  %vm385 = vcmp.eq.s32.totalorder %v380, 2
  %v386 = vxor.u32 %v376, 2147483648
  %v387 = vsel %vm385, %v386, %v377
  %v388 = vsel %vm381, %v384, %v387
  %v389 = vsel %vm378, nan, %v388
  %v390 = vand.u32 2147483647, %v252
  %vm391 = vcmp.le.f32.partialorder %v390, 0.7853982
  %vm392 = vcmp.lt.s32.totalorder %v252, 0
  %v393 = vand.u32 %v252, 2139095040
  %v394 = vshrl.u32 %v393, 23
  %v395 = vsub.s32 %v394, 127
  %v396 = vand.u32 2147483647, %v252
  %v397 = vand.u32 %v396, 8388607
  %v398 = vor.u32 %v397, 8388608
  %v399 = vsub.s32 0, %v398
  %v400 = vadd.s32 %v395, 1
  %vm401 = vcmp.gt.s32.totalorder %v400, 0
  %v402 = vsel %vm401, %v400, 0
  %v403 = vshrl.u32 %v402, 5
  %v404 = vand.u32 %v402, 31
  %v405 = vsub.s32 32, %v404
  %v406 = vshrl.u32 683565275, %v405
  %v407 = vshll.u32 683565275, %v404
  %v408 = vshrl.u32 2475754826, %v405
  %v409 = vor.u32 %v407, %v408
  %v410 = vshll.u32 2475754826, %v404
  %v411 = vshrl.u32 2131351028, %v405
  %v412 = vor.u32 %v410, %v411
  %v413 = vshll.u32 2131351028, %v404
  %v414 = vshrl.u32 2102212464, %v405
  %v415 = vor.u32 %v413, %v414
  %v416 = vshll.u32 2102212464, %v404
  %v417 = vshrl.u32 920167782, %v405
  %v418 = vor.u32 %v416, %v417
  %v419 = vshll.u32 920167782, %v404
  %v420 = vshrl.u32 1326507024, %v405
  %v421 = vor.u32 %v419, %v420
  %vm422 = vcmp.lt.s32.totalorder %v403, 1
  %vm423 = vcmp.lt.s32.totalorder %v403, 2
  %vm424 = vcmp.lt.s32.totalorder %v403, 3
  %vm425 = vcmp.lt.s32.totalorder %v403, 4
  %v426 = vsel %vm422, %v406, %v409
  %v427 = vsel %vm425, %v415, 2102212464
  %v428 = vsel %vm424, %v412, %v427
  %v429 = vsel %vm423, %v426, %v428
  %v430 = vsel %vm422, %v409, %v412
  %v431 = vsel %vm425, %v418, 920167782
  %v432 = vsel %vm424, %v415, %v431
  %v433 = vsel %vm423, %v430, %v432
  %v434 = vsel %vm422, %v412, %v415
  %v435 = vsel %vm425, %v421, 1326507024
  %v436 = vsel %vm424, %v418, %v435
  %v437 = vsel %vm423, %v434, %v436
  %v438 = vshll.u32 %v398, 8
  %v439 = vmul.u32.u64.compose %v438, %v437
  %v440 = vextract.low.u32 %v439
  %v441 = vextract.high.u32 %v439
  %v442 = vmul.u32.u64.compose %v438, %v433
  %v443 = vextract.low.u32 %v442
  %v444 = vextract.high.u32 %v442
  %v445 = vmul.u32 %v438, %v429
  %v446 = vadd.s32 %v441, %v443
  %vm447 = vc.u32 %v441, %v443
  %v448 = vadd.s32 %v444, 1
  %v449 = vsel %vm447, %v448, %v444
  %v450 = vadd.s32 %v445, %v449
  %v451 = vadd.s32 %v450, 536870912
  %v452 = vshrl.u32 %v451, 30
  %v453 = vshll.u32 %v452, 30
  %v454 = vsub.s32 %v450, %v453
  %vm455 = vcmp.lt.s32.totalorder %v454, 0
  %v456 = vsub.s32 0, %v454
  %v457 = vsel %vm455, %v456, %v454
  %v458 = vclz %v457
  %v459 = vsub.s32 %v458, 2
  %vm460 = vcmp.gt.s32.totalorder 0, %v459
  %v461 = vsel %vm460, 0, %v459
  %v462 = vsub.s32 32, %v461
  %v463 = vshll.u32 %v454, %v461
  %v464 = vshrl.u32 %v446, %v462
  %v465 = vor.u32 %v463, %v464
  %v466 = vsub.s32 4294967266, %v461
  %v467 = vadd.s32 %v466, 127
  %v468 = vshll.u32 %v467, 23
  %v469 = vor.u32 4788187, %v468
  %v470 = vand.u32 2147483647, %v469
  %v472 = vcvt.s32.f32 %v465
  %v473 = vmul.f32 %v472, %v470
  %v474 = vxor.u32 %v473, 2147483648
  %v475 = vsel %vm392, %v474, %v473
  %v476 = vsub.s32 4, %v452
  %v477 = vsel %vm392, %v476, %v452
  %v478 = vsel %vm391, %v252, %v475
  %v479 = vsel %vm391, 0, %v477
  %v480 = vcosq.f32.pop %v478
  %v481 = vsinq.f32.pop %v478
  %vm482 = vweird.f32 %v252
  %v483 = vadd.s32 %v479, 3
  %v484 = vand.u32 %v483, 3
  %vm485 = vcmp.lt.s32.totalorder %v484, 2
  %vm486 = vcmp.eq.s32.totalorder %v484, 0
  %v487 = vxor.u32 %v481, 2147483648
  %v488 = vsel %vm486, %v480, %v487
  %vm489 = vcmp.eq.s32.totalorder %v484, 2
  %v490 = vxor.u32 %v480, 2147483648
  %v491 = vsel %vm489, %v490, %v481
  %v492 = vsel %vm485, %v488, %v491
  %v493 = vsel %vm482, nan, %v492
  %v494 = vand.u32 2147483647, %v257
  %vm495 = vcmp.le.f32.partialorder %v494, 0.7853982
  %vm496 = vcmp.lt.s32.totalorder %v257, 0
  %v497 = vand.u32 %v257, 2139095040
  %v498 = vshrl.u32 %v497, 23
  %v499 = vsub.s32 %v498, 127
  %v500 = vand.u32 2147483647, %v257
  %v501 = vand.u32 %v500, 8388607
  %v502 = vor.u32 %v501, 8388608
  %v503 = vsub.s32 0, %v502
  %v504 = vadd.s32 %v499, 1
  %vm505 = vcmp.gt.s32.totalorder %v504, 0
  %v506 = vsel %vm505, %v504, 0
  %v507 = vshrl.u32 %v506, 5
  %v508 = vand.u32 %v506, 31
  %v509 = vsub.s32 32, %v508
  %v510 = vshrl.u32 683565275, %v509
  %v511 = vshll.u32 683565275, %v508
  %v512 = vshrl.u32 2475754826, %v509
  %v513 = vor.u32 %v511, %v512
  %v514 = vshll.u32 2475754826, %v508
  %v515 = vshrl.u32 2131351028, %v509
  %v516 = vor.u32 %v514, %v515
  %v517 = vshll.u32 2131351028, %v508
  %v518 = vshrl.u32 2102212464, %v509
  %v519 = vor.u32 %v517, %v518
  %v520 = vshll.u32 2102212464, %v508
  %v521 = vshrl.u32 920167782, %v509
  %v522 = vor.u32 %v520, %v521
  %v523 = vshll.u32 920167782, %v508
  %v524 = vshrl.u32 1326507024, %v509
  %v525 = vor.u32 %v523, %v524
  %vm526 = vcmp.lt.s32.totalorder %v507, 1
  %vm527 = vcmp.lt.s32.totalorder %v507, 2
  %vm528 = vcmp.lt.s32.totalorder %v507, 3
  %vm529 = vcmp.lt.s32.totalorder %v507, 4
  %v530 = vsel %vm526, %v510, %v513
  %v531 = vsel %vm529, %v519, 2102212464
  %v532 = vsel %vm528, %v516, %v531
  %v533 = vsel %vm527, %v530, %v532
  %v534 = vsel %vm526, %v513, %v516
  %v535 = vsel %vm529, %v522, 920167782
  %v536 = vsel %vm528, %v519, %v535
  %v537 = vsel %vm527, %v534, %v536
  %v538 = vsel %vm526, %v516, %v519
  %v539 = vsel %vm529, %v525, 1326507024
  %v540 = vsel %vm528, %v522, %v539
  %v541 = vsel %vm527, %v538, %v540
  %v542 = vshll.u32 %v502, 8
  %v543 = vmul.u32.u64.compose %v542, %v541
  %v544 = vextract.low.u32 %v543
  %v545 = vextract.high.u32 %v543
  %v546 = vmul.u32.u64.compose %v542, %v537
  %v547 = vextract.low.u32 %v546
  %v548 = vextract.high.u32 %v546
  %v549 = vmul.u32 %v542, %v533
  %v550 = vadd.s32 %v545, %v547
  %vm551 = vc.u32 %v545, %v547
  %v552 = vadd.s32 %v548, 1
  %v553 = vsel %vm551, %v552, %v548
  %v554 = vadd.s32 %v549, %v553
  %v555 = vadd.s32 %v554, 536870912
  %v556 = vshrl.u32 %v555, 30
  %v557 = vshll.u32 %v556, 30
  %v558 = vsub.s32 %v554, %v557
  %vm559 = vcmp.lt.s32.totalorder %v558, 0
  %v560 = vsub.s32 0, %v558
  %v561 = vsel %vm559, %v560, %v558
  %v562 = vclz %v561
  %v563 = vsub.s32 %v562, 2
  %vm564 = vcmp.gt.s32.totalorder 0, %v563
  %v565 = vsel %vm564, 0, %v563
  %v566 = vsub.s32 32, %v565
  %v567 = vshll.u32 %v558, %v565
  %v568 = vshrl.u32 %v550, %v566
  %v569 = vor.u32 %v567, %v568
  %v570 = vsub.s32 4294967266, %v565
  %v571 = vadd.s32 %v570, 127
  %v572 = vshll.u32 %v571, 23
  %v573 = vor.u32 4788187, %v572
  %v574 = vand.u32 2147483647, %v573
  %v576 = vcvt.s32.f32 %v569
  %v577 = vmul.f32 %v576, %v574
  %v578 = vxor.u32 %v577, 2147483648
  %v579 = vsel %vm496, %v578, %v577
  %v580 = vsub.s32 4, %v556
  %v581 = vsel %vm496, %v580, %v556
  %v582 = vsel %vm495, %v257, %v579
  %v583 = vsel %vm495, 0, %v581
  %v584 = vcosq.f32.pop %v582
  %v585 = vsinq.f32.pop %v582
  %vm586 = vweird.f32 %v257
  %v587 = vadd.s32 %v583, 3
  %v588 = vand.u32 %v587, 3
  %vm589 = vcmp.lt.s32.totalorder %v588, 2
  %vm590 = vcmp.eq.s32.totalorder %v588, 0
  %v591 = vxor.u32 %v585, 2147483648
  %v592 = vsel %vm590, %v584, %v591
  %vm593 = vcmp.eq.s32.totalorder %v588, 2
  %v594 = vxor.u32 %v584, 2147483648
  %v595 = vsel %vm593, %v594, %v585
  %v596 = vsel %vm589, %v592, %v595
  %v597 = vsel %vm586, nan, %v596
  %v598 = vand.u32 2147483647, %v262
  %vm599 = vcmp.le.f32.partialorder %v598, 0.7853982
  %vm600 = vcmp.lt.s32.totalorder %v262, 0
  %v601 = vand.u32 %v262, 2139095040
  %v602 = vshrl.u32 %v601, 23
  %v603 = vsub.s32 %v602, 127
  %v604 = vand.u32 2147483647, %v262
  %v605 = vand.u32 %v604, 8388607
  %v606 = vor.u32 %v605, 8388608
  %v607 = vsub.s32 0, %v606
  %v608 = vadd.s32 %v603, 1
  %vm609 = vcmp.gt.s32.totalorder %v608, 0
  %v610 = vsel %vm609, %v608, 0
  %v611 = vshrl.u32 %v610, 5
  %v612 = vand.u32 %v610, 31
  %v613 = vsub.s32 32, %v612
  %v614 = vshrl.u32 683565275, %v613
  %v615 = vshll.u32 683565275, %v612
  %v616 = vshrl.u32 2475754826, %v613
  %v617 = vor.u32 %v615, %v616
  %v618 = vshll.u32 2475754826, %v612
  %v619 = vshrl.u32 2131351028, %v613
  %v620 = vor.u32 %v618, %v619
  %v621 = vshll.u32 2131351028, %v612
  %v622 = vshrl.u32 2102212464, %v613
  %v623 = vor.u32 %v621, %v622
  %v624 = vshll.u32 2102212464, %v612
  %v625 = vshrl.u32 920167782, %v613
  %v626 = vor.u32 %v624, %v625
  %v627 = vshll.u32 920167782, %v612
  %v628 = vshrl.u32 1326507024, %v613
  %v629 = vor.u32 %v627, %v628
  %vm630 = vcmp.lt.s32.totalorder %v611, 1
  %vm631 = vcmp.lt.s32.totalorder %v611, 2
  %vm632 = vcmp.lt.s32.totalorder %v611, 3
  %vm633 = vcmp.lt.s32.totalorder %v611, 4
  %v634 = vsel %vm630, %v614, %v617
  %v635 = vsel %vm633, %v623, 2102212464
  %v636 = vsel %vm632, %v620, %v635
  %v637 = vsel %vm631, %v634, %v636
  %v638 = vsel %vm630, %v617, %v620
  %v639 = vsel %vm633, %v626, 920167782
  %v640 = vsel %vm632, %v623, %v639
  %v641 = vsel %vm631, %v638, %v640
  %v642 = vsel %vm630, %v620, %v623
  %v643 = vsel %vm633, %v629, 1326507024
  %v644 = vsel %vm632, %v626, %v643
  %v645 = vsel %vm631, %v642, %v644
  %v646 = vshll.u32 %v606, 8
  %v647 = vmul.u32.u64.compose %v646, %v645
  %v648 = vextract.low.u32 %v647
  %v649 = vextract.high.u32 %v647
  %v650 = vmul.u32.u64.compose %v646, %v641
  %v651 = vextract.low.u32 %v650
  %v652 = vextract.high.u32 %v650
  %v653 = vmul.u32 %v646, %v637
  %v654 = vadd.s32 %v649, %v651
  %vm655 = vc.u32 %v649, %v651
  %v656 = vadd.s32 %v652, 1
  %v657 = vsel %vm655, %v656, %v652
  %v658 = vadd.s32 %v653, %v657
  %v659 = vadd.s32 %v658, 536870912
  %v660 = vshrl.u32 %v659, 30
  %v661 = vshll.u32 %v660, 30
  %v662 = vsub.s32 %v658, %v661
  %vm663 = vcmp.lt.s32.totalorder %v662, 0
  %v664 = vsub.s32 0, %v662
  %v665 = vsel %vm663, %v664, %v662
  %v666 = vclz %v665
  %v667 = vsub.s32 %v666, 2
  %vm668 = vcmp.gt.s32.totalorder 0, %v667
  %v669 = vsel %vm668, 0, %v667
  %v670 = vsub.s32 32, %v669
  %v671 = vshll.u32 %v662, %v669
  %v672 = vshrl.u32 %v654, %v670
  %v673 = vor.u32 %v671, %v672
  %v674 = vsub.s32 4294967266, %v669
  %v675 = vadd.s32 %v674, 127
  %v676 = vshll.u32 %v675, 23
  %v677 = vor.u32 4788187, %v676
  %v678 = vand.u32 2147483647, %v677
  %v680 = vcvt.s32.f32 %v673
  %v681 = vmul.f32 %v680, %v678
  %v682 = vxor.u32 %v681, 2147483648
  %v683 = vsel %vm600, %v682, %v681
  %v684 = vsub.s32 4, %v660
  %v685 = vsel %vm600, %v684, %v660
  %v686 = vsel %vm599, %v262, %v683
  %v687 = vsel %vm599, 0, %v685
  %v688 = vcosq.f32.pop %v686
  %v689 = vsinq.f32.pop %v686
  %vm690 = vweird.f32 %v262
  %v691 = vadd.s32 %v687, 3
  %v692 = vand.u32 %v691, 3
  %vm693 = vcmp.lt.s32.totalorder %v692, 2
  %vm694 = vcmp.eq.s32.totalorder %v692, 0
  %v695 = vxor.u32 %v689, 2147483648
  %v696 = vsel %vm694, %v688, %v695
  %vm697 = vcmp.eq.s32.totalorder %v692, 2
  %v698 = vxor.u32 %v688, 2147483648
  %v699 = vsel %vm697, %v698, %v689
  %v700 = vsel %vm693, %v696, %v699
  %v701 = vsel %vm690, nan, %v700
  %v702 = vand.u32 2147483647, %v267
  %vm703 = vcmp.le.f32.partialorder %v702, 0.7853982
  %vm704 = vcmp.lt.s32.totalorder %v267, 0
  %v705 = vand.u32 %v267, 2139095040
  %v706 = vshrl.u32 %v705, 23
  %v707 = vsub.s32 %v706, 127
  %v708 = vand.u32 2147483647, %v267
  %v709 = vand.u32 %v708, 8388607
  %v710 = vor.u32 %v709, 8388608
  %v711 = vsub.s32 0, %v710
  %v712 = vadd.s32 %v707, 1
  %vm713 = vcmp.gt.s32.totalorder %v712, 0
  %v714 = vsel %vm713, %v712, 0
  %v715 = vshrl.u32 %v714, 5
  %v716 = vand.u32 %v714, 31
  %v717 = vsub.s32 32, %v716
  %v718 = vshrl.u32 683565275, %v717
  %v719 = vshll.u32 683565275, %v716
  %v720 = vshrl.u32 2475754826, %v717
  %v721 = vor.u32 %v719, %v720
  %v722 = vshll.u32 2475754826, %v716
  %v723 = vshrl.u32 2131351028, %v717
  %v724 = vor.u32 %v722, %v723
  %v725 = vshll.u32 2131351028, %v716
  %v726 = vshrl.u32 2102212464, %v717
  %v727 = vor.u32 %v725, %v726
  %v728 = vshll.u32 2102212464, %v716
  %v729 = vshrl.u32 920167782, %v717
  %v730 = vor.u32 %v728, %v729
  %v731 = vshll.u32 920167782, %v716
  %v732 = vshrl.u32 1326507024, %v717
  %v733 = vor.u32 %v731, %v732
  %vm734 = vcmp.lt.s32.totalorder %v715, 1
  %vm735 = vcmp.lt.s32.totalorder %v715, 2
  %vm736 = vcmp.lt.s32.totalorder %v715, 3
  %vm737 = vcmp.lt.s32.totalorder %v715, 4
  %v738 = vsel %vm734, %v718, %v721
  %v739 = vsel %vm737, %v727, 2102212464
  %v740 = vsel %vm736, %v724, %v739
  %v741 = vsel %vm735, %v738, %v740
  %v742 = vsel %vm734, %v721, %v724
  %v743 = vsel %vm737, %v730, 920167782
  %v744 = vsel %vm736, %v727, %v743
  %v745 = vsel %vm735, %v742, %v744
  %v746 = vsel %vm734, %v724, %v727
  %v747 = vsel %vm737, %v733, 1326507024
  %v748 = vsel %vm736, %v730, %v747
  %v749 = vsel %vm735, %v746, %v748
  %v750 = vshll.u32 %v710, 8
  %v751 = vmul.u32.u64.compose %v750, %v749
  %v752 = vextract.low.u32 %v751
  %v753 = vextract.high.u32 %v751
  %v754 = vmul.u32.u64.compose %v750, %v745
  %v755 = vextract.low.u32 %v754
  %v756 = vextract.high.u32 %v754
  %v757 = vmul.u32 %v750, %v741
  %v758 = vadd.s32 %v753, %v755
  %vm759 = vc.u32 %v753, %v755
  %v760 = vadd.s32 %v756, 1
  %v761 = vsel %vm759, %v760, %v756
  %v762 = vadd.s32 %v757, %v761
  %v763 = vadd.s32 %v762, 536870912
  %v764 = vshrl.u32 %v763, 30
  %v765 = vshll.u32 %v764, 30
  %v766 = vsub.s32 %v762, %v765
  %vm767 = vcmp.lt.s32.totalorder %v766, 0
  %v768 = vsub.s32 0, %v766
  %v769 = vsel %vm767, %v768, %v766
  %v770 = vclz %v769
  %v771 = vsub.s32 %v770, 2
  %vm772 = vcmp.gt.s32.totalorder 0, %v771
  %v773 = vsel %vm772, 0, %v771
  %v774 = vsub.s32 32, %v773
  %v775 = vshll.u32 %v766, %v773
  %v776 = vshrl.u32 %v758, %v774
  %v777 = vor.u32 %v775, %v776
  %v778 = vsub.s32 4294967266, %v773
  %v779 = vadd.s32 %v778, 127
  %v780 = vshll.u32 %v779, 23
  %v781 = vor.u32 4788187, %v780
  %v782 = vand.u32 2147483647, %v781
  %v784 = vcvt.s32.f32 %v777
  %v785 = vmul.f32 %v784, %v782
  %v786 = vxor.u32 %v785, 2147483648
  %v787 = vsel %vm704, %v786, %v785
  %v788 = vsub.s32 4, %v764
  %v789 = vsel %vm704, %v788, %v764
  %v790 = vsel %vm703, %v267, %v787
  %v791 = vsel %vm703, 0, %v789
  %v792 = vcosq.f32.pop %v790
  %v793 = vsinq.f32.pop %v790
  %vm794 = vweird.f32 %v267
  %v795 = vadd.s32 %v791, 3
  %v796 = vand.u32 %v795, 3
  %vm797 = vcmp.lt.s32.totalorder %v796, 2
  %vm798 = vcmp.eq.s32.totalorder %v796, 0
  %v799 = vxor.u32 %v793, 2147483648
  %v800 = vsel %vm798, %v792, %v799
  %vm801 = vcmp.eq.s32.totalorder %v796, 2
  %v802 = vxor.u32 %v792, 2147483648
  %v803 = vsel %vm801, %v802, %v793
  %v804 = vsel %vm797, %v800, %v803
  %v805 = vsel %vm794, nan, %v804
  %v806 = vand.u32 2147483647, %v272
  %vm807 = vcmp.le.f32.partialorder %v806, 0.7853982
  %vm808 = vcmp.lt.s32.totalorder %v272, 0
  %v809 = vand.u32 %v272, 2139095040
  %v810 = vshrl.u32 %v809, 23
  %v811 = vsub.s32 %v810, 127
  %v812 = vand.u32 2147483647, %v272
  %v813 = vand.u32 %v812, 8388607
  %v814 = vor.u32 %v813, 8388608
  %v815 = vsub.s32 0, %v814
  %v816 = vadd.s32 %v811, 1
  %vm817 = vcmp.gt.s32.totalorder %v816, 0
  %v818 = vsel %vm817, %v816, 0
  %v819 = vshrl.u32 %v818, 5
  %v820 = vand.u32 %v818, 31
  %v821 = vsub.s32 32, %v820
  %v822 = vshrl.u32 683565275, %v821
  %v823 = vshll.u32 683565275, %v820
  %v824 = vshrl.u32 2475754826, %v821
  %v825 = vor.u32 %v823, %v824
  %v826 = vshll.u32 2475754826, %v820
  %v827 = vshrl.u32 2131351028, %v821
  %v828 = vor.u32 %v826, %v827
  %v829 = vshll.u32 2131351028, %v820
  %v830 = vshrl.u32 2102212464, %v821
  %v831 = vor.u32 %v829, %v830
  %v832 = vshll.u32 2102212464, %v820
  %v833 = vshrl.u32 920167782, %v821
  %v834 = vor.u32 %v832, %v833
  %v835 = vshll.u32 920167782, %v820
  %v836 = vshrl.u32 1326507024, %v821
  %v837 = vor.u32 %v835, %v836
  %vm838 = vcmp.lt.s32.totalorder %v819, 1
  %vm839 = vcmp.lt.s32.totalorder %v819, 2
  %vm840 = vcmp.lt.s32.totalorder %v819, 3
  %vm841 = vcmp.lt.s32.totalorder %v819, 4
  %v842 = vsel %vm838, %v822, %v825
  %v843 = vsel %vm841, %v831, 2102212464
  %v844 = vsel %vm840, %v828, %v843
  %v845 = vsel %vm839, %v842, %v844
  %v846 = vsel %vm838, %v825, %v828
  %v847 = vsel %vm841, %v834, 920167782
  %v848 = vsel %vm840, %v831, %v847
  %v849 = vsel %vm839, %v846, %v848
  %v850 = vsel %vm838, %v828, %v831
  %v851 = vsel %vm841, %v837, 1326507024
  %v852 = vsel %vm840, %v834, %v851
  %v853 = vsel %vm839, %v850, %v852
  %v854 = vshll.u32 %v814, 8
  %v855 = vmul.u32.u64.compose %v854, %v853
  %v856 = vextract.low.u32 %v855
  %v857 = vextract.high.u32 %v855
  %v858 = vmul.u32.u64.compose %v854, %v849
  %v859 = vextract.low.u32 %v858
  %v860 = vextract.high.u32 %v858
  %v861 = vmul.u32 %v854, %v845
  %v862 = vadd.s32 %v857, %v859
  %vm863 = vc.u32 %v857, %v859
  %v864 = vadd.s32 %v860, 1
  %v865 = vsel %vm863, %v864, %v860
  %v866 = vadd.s32 %v861, %v865
  %v867 = vadd.s32 %v866, 536870912
  %v868 = vshrl.u32 %v867, 30
  %v869 = vshll.u32 %v868, 30
  %v870 = vsub.s32 %v866, %v869
  %vm871 = vcmp.lt.s32.totalorder %v870, 0
  %v872 = vsub.s32 0, %v870
  %v873 = vsel %vm871, %v872, %v870
  %v874 = vclz %v873
  %v875 = vsub.s32 %v874, 2
  %vm876 = vcmp.gt.s32.totalorder 0, %v875
  %v877 = vsel %vm876, 0, %v875
  %v878 = vsub.s32 32, %v877
  %v879 = vshll.u32 %v870, %v877
  %v880 = vshrl.u32 %v862, %v878
  %v881 = vor.u32 %v879, %v880
  %v882 = vsub.s32 4294967266, %v877
  %v883 = vadd.s32 %v882, 127
  %v884 = vshll.u32 %v883, 23
  %v885 = vor.u32 4788187, %v884
  %v886 = vand.u32 2147483647, %v885
  %v888 = vcvt.s32.f32 %v881
  %v889 = vmul.f32 %v888, %v886
  %v890 = vxor.u32 %v889, 2147483648
  %v891 = vsel %vm808, %v890, %v889
  %v892 = vsub.s32 4, %v868
  %v893 = vsel %vm808, %v892, %v868
  %v894 = vsel %vm807, %v272, %v891
  %v895 = vsel %vm807, 0, %v893
  %v896 = vcosq.f32.pop %v894
  %v897 = vsinq.f32.pop %v894
  %vm898 = vweird.f32 %v272
  %v899 = vadd.s32 %v895, 3
  %v900 = vand.u32 %v899, 3
  %vm901 = vcmp.lt.s32.totalorder %v900, 2
  %vm902 = vcmp.eq.s32.totalorder %v900, 0
  %v903 = vxor.u32 %v897, 2147483648
  %v904 = vsel %vm902, %v896, %v903
  %vm905 = vcmp.eq.s32.totalorder %v900, 2
  %v906 = vxor.u32 %v896, 2147483648
  %v907 = vsel %vm905, %v906, %v897
  %v908 = vsel %vm901, %v904, %v907
  %v909 = vsel %vm898, nan, %v908
  %v910 = vand.u32 2147483647, %v277
  %vm911 = vcmp.le.f32.partialorder %v910, 0.7853982
  %vm912 = vcmp.lt.s32.totalorder %v277, 0
  %v913 = vand.u32 %v277, 2139095040
  %v914 = vshrl.u32 %v913, 23
  %v915 = vsub.s32 %v914, 127
  %v916 = vand.u32 2147483647, %v277
  %v917 = vand.u32 %v916, 8388607
  %v918 = vor.u32 %v917, 8388608
  %v919 = vsub.s32 0, %v918
  %v920 = vadd.s32 %v915, 1
  %vm921 = vcmp.gt.s32.totalorder %v920, 0
  %v922 = vsel %vm921, %v920, 0
  %v923 = vshrl.u32 %v922, 5
  %v924 = vand.u32 %v922, 31
  %v925 = vsub.s32 32, %v924
  %v926 = vshrl.u32 683565275, %v925
  %v927 = vshll.u32 683565275, %v924
  %v928 = vshrl.u32 2475754826, %v925
  %v929 = vor.u32 %v927, %v928
  %v930 = vshll.u32 2475754826, %v924
  %v931 = vshrl.u32 2131351028, %v925
  %v932 = vor.u32 %v930, %v931
  %v933 = vshll.u32 2131351028, %v924
  %v934 = vshrl.u32 2102212464, %v925
  %v935 = vor.u32 %v933, %v934
  %v936 = vshll.u32 2102212464, %v924
  %v937 = vshrl.u32 920167782, %v925
  %v938 = vor.u32 %v936, %v937
  %v939 = vshll.u32 920167782, %v924
  %v940 = vshrl.u32 1326507024, %v925
  %v941 = vor.u32 %v939, %v940
  %vm942 = vcmp.lt.s32.totalorder %v923, 1
  %vm943 = vcmp.lt.s32.totalorder %v923, 2
  %vm944 = vcmp.lt.s32.totalorder %v923, 3
  %vm945 = vcmp.lt.s32.totalorder %v923, 4
  %v946 = vsel %vm942, %v926, %v929
  %v947 = vsel %vm945, %v935, 2102212464
  %v948 = vsel %vm944, %v932, %v947
  %v949 = vsel %vm943, %v946, %v948
  %v950 = vsel %vm942, %v929, %v932
  %v951 = vsel %vm945, %v938, 920167782
  %v952 = vsel %vm944, %v935, %v951
  %v953 = vsel %vm943, %v950, %v952
  %v954 = vsel %vm942, %v932, %v935
  %v955 = vsel %vm945, %v941, 1326507024
  %v956 = vsel %vm944, %v938, %v955
  %v957 = vsel %vm943, %v954, %v956
  %v958 = vshll.u32 %v918, 8
  %v959 = vmul.u32.u64.compose %v958, %v957
  %v960 = vextract.low.u32 %v959
  %v961 = vextract.high.u32 %v959
  %v962 = vmul.u32.u64.compose %v958, %v953
  %v963 = vextract.low.u32 %v962
  %v964 = vextract.high.u32 %v962
  %v965 = vmul.u32 %v958, %v949
  %v966 = vadd.s32 %v961, %v963
  %vm967 = vc.u32 %v961, %v963
  %v968 = vadd.s32 %v964, 1
  %v969 = vsel %vm967, %v968, %v964
  %v970 = vadd.s32 %v965, %v969
  %v971 = vadd.s32 %v970, 536870912
  %v972 = vshrl.u32 %v971, 30
  %v973 = vshll.u32 %v972, 30
  %v974 = vsub.s32 %v970, %v973
  %vm975 = vcmp.lt.s32.totalorder %v974, 0
  %v976 = vsub.s32 0, %v974
  %v977 = vsel %vm975, %v976, %v974
  %v978 = vclz %v977
  %v979 = vsub.s32 %v978, 2
  %vm980 = vcmp.gt.s32.totalorder 0, %v979
  %v981 = vsel %vm980, 0, %v979
  %v982 = vsub.s32 32, %v981
  %v983 = vshll.u32 %v974, %v981
  %v984 = vshrl.u32 %v966, %v982
  %v985 = vor.u32 %v983, %v984
  %v986 = vsub.s32 4294967266, %v981
  %v987 = vadd.s32 %v986, 127
  %v988 = vshll.u32 %v987, 23
  %v989 = vor.u32 4788187, %v988
  %v990 = vand.u32 2147483647, %v989
  %v992 = vcvt.s32.f32 %v985
  %v993 = vmul.f32 %v992, %v990
  %v994 = vxor.u32 %v993, 2147483648
  %v995 = vsel %vm912, %v994, %v993
  %v996 = vsub.s32 4, %v972
  %v997 = vsel %vm912, %v996, %v972
  %v998 = vsel %vm911, %v277, %v995
  %v999 = vsel %vm911, 0, %v997
  %v1000 = vcosq.f32.pop %v998
  %v1001 = vsinq.f32.pop %v998
  %vm1002 = vweird.f32 %v277
  %v1003 = vadd.s32 %v999, 3
  %v1004 = vand.u32 %v1003, 3
  %vm1005 = vcmp.lt.s32.totalorder %v1004, 2
  %vm1006 = vcmp.eq.s32.totalorder %v1004, 0
  %v1007 = vxor.u32 %v1001, 2147483648
  %v1008 = vsel %vm1006, %v1000, %v1007
  %vm1009 = vcmp.eq.s32.totalorder %v1004, 2
  %v1010 = vxor.u32 %v1000, 2147483648
  %v1011 = vsel %vm1009, %v1010, %v1001
  %v1012 = vsel %vm1005, %v1008, %v1011
  %v1013 = vsel %vm1002, nan, %v1012
  %v1014 = vand.u32 2147483647, %v282
  %vm1015 = vcmp.le.f32.partialorder %v1014, 0.7853982
  %vm1016 = vcmp.lt.s32.totalorder %v282, 0
  %v1017 = vand.u32 %v282, 2139095040
  %v1018 = vshrl.u32 %v1017, 23
  %v1019 = vsub.s32 %v1018, 127
  %v1020 = vand.u32 2147483647, %v282
  %v1021 = vand.u32 %v1020, 8388607
  %v1022 = vor.u32 %v1021, 8388608
  %v1023 = vsub.s32 0, %v1022
  %v1024 = vadd.s32 %v1019, 1
  %vm1025 = vcmp.gt.s32.totalorder %v1024, 0
  %v1026 = vsel %vm1025, %v1024, 0
  %v1027 = vshrl.u32 %v1026, 5
  %v1028 = vand.u32 %v1026, 31
  %v1029 = vsub.s32 32, %v1028
  %v1030 = vshrl.u32 683565275, %v1029
  %v1031 = vshll.u32 683565275, %v1028
  %v1032 = vshrl.u32 2475754826, %v1029
  %v1033 = vor.u32 %v1031, %v1032
  %v1034 = vshll.u32 2475754826, %v1028
  %v1035 = vshrl.u32 2131351028, %v1029
  %v1036 = vor.u32 %v1034, %v1035
  %v1037 = vshll.u32 2131351028, %v1028
  %v1038 = vshrl.u32 2102212464, %v1029
  %v1039 = vor.u32 %v1037, %v1038
  %v1040 = vshll.u32 2102212464, %v1028
  %v1041 = vshrl.u32 920167782, %v1029
  %v1042 = vor.u32 %v1040, %v1041
  %v1043 = vshll.u32 920167782, %v1028
  %v1044 = vshrl.u32 1326507024, %v1029
  %v1045 = vor.u32 %v1043, %v1044
  %vm1046 = vcmp.lt.s32.totalorder %v1027, 1
  %vm1047 = vcmp.lt.s32.totalorder %v1027, 2
  %vm1048 = vcmp.lt.s32.totalorder %v1027, 3
  %vm1049 = vcmp.lt.s32.totalorder %v1027, 4
  %v1050 = vsel %vm1046, %v1030, %v1033
  %v1051 = vsel %vm1049, %v1039, 2102212464
  %v1052 = vsel %vm1048, %v1036, %v1051
  %v1053 = vsel %vm1047, %v1050, %v1052
  %v1054 = vsel %vm1046, %v1033, %v1036
  %v1055 = vsel %vm1049, %v1042, 920167782
  %v1056 = vsel %vm1048, %v1039, %v1055
  %v1057 = vsel %vm1047, %v1054, %v1056
  %v1058 = vsel %vm1046, %v1036, %v1039
  %v1059 = vsel %vm1049, %v1045, 1326507024
  %v1060 = vsel %vm1048, %v1042, %v1059
  %v1061 = vsel %vm1047, %v1058, %v1060
  %v1062 = vshll.u32 %v1022, 8
  %v1063 = vmul.u32.u64.compose %v1062, %v1061
  %v1064 = vextract.low.u32 %v1063
  %v1065 = vextract.high.u32 %v1063
  %v1066 = vmul.u32.u64.compose %v1062, %v1057
  %v1067 = vextract.low.u32 %v1066
  %v1068 = vextract.high.u32 %v1066
  %v1069 = vmul.u32 %v1062, %v1053
  %v1070 = vadd.s32 %v1065, %v1067
  %vm1071 = vc.u32 %v1065, %v1067
  %v1072 = vadd.s32 %v1068, 1
  %v1073 = vsel %vm1071, %v1072, %v1068
  %v1074 = vadd.s32 %v1069, %v1073
  %v1075 = vadd.s32 %v1074, 536870912
  %v1076 = vshrl.u32 %v1075, 30
  %v1077 = vshll.u32 %v1076, 30
  %v1078 = vsub.s32 %v1074, %v1077
  %vm1079 = vcmp.lt.s32.totalorder %v1078, 0
  %v1080 = vsub.s32 0, %v1078
  %v1081 = vsel %vm1079, %v1080, %v1078
  %v1082 = vclz %v1081
  %v1083 = vsub.s32 %v1082, 2
  %vm1084 = vcmp.gt.s32.totalorder 0, %v1083
  %v1085 = vsel %vm1084, 0, %v1083
  %v1086 = vsub.s32 32, %v1085
  %v1087 = vshll.u32 %v1078, %v1085
  %v1088 = vshrl.u32 %v1070, %v1086
  %v1089 = vor.u32 %v1087, %v1088
  %v1090 = vsub.s32 4294967266, %v1085
  %v1091 = vadd.s32 %v1090, 127
  %v1092 = vshll.u32 %v1091, 23
  %v1093 = vor.u32 4788187, %v1092
  %v1094 = vand.u32 2147483647, %v1093
  %v1096 = vcvt.s32.f32 %v1089
  %v1097 = vmul.f32 %v1096, %v1094
  %v1098 = vxor.u32 %v1097, 2147483648
  %v1099 = vsel %vm1016, %v1098, %v1097
  %v1100 = vsub.s32 4, %v1076
  %v1101 = vsel %vm1016, %v1100, %v1076
  %v1102 = vsel %vm1015, %v282, %v1099
  %v1103 = vsel %vm1015, 0, %v1101
  %v1104 = vcosq.f32.pop %v1102
  %v1105 = vsinq.f32.pop %v1102
  %vm1106 = vweird.f32 %v282
  %v1107 = vadd.s32 %v1103, 3
  %v1108 = vand.u32 %v1107, 3
  %vm1109 = vcmp.lt.s32.totalorder %v1108, 2
  %vm1110 = vcmp.eq.s32.totalorder %v1108, 0
  %v1111 = vxor.u32 %v1105, 2147483648
  %v1112 = vsel %vm1110, %v1104, %v1111
  %vm1113 = vcmp.eq.s32.totalorder %v1108, 2
  %v1114 = vxor.u32 %v1104, 2147483648
  %v1115 = vsel %vm1113, %v1114, %v1105
  %v1116 = vsel %vm1109, %v1112, %v1115
  %v1117 = vsel %vm1106, nan, %v1116
  %1126 = vrot.lane.b32.xlu0 %v247, 96
  %v1127 = vpop.permute.xlu0 %1126
  %1128 = vrot.lane.b32.xlu0 %v252, 96
  %v1129 = vpop.permute.xlu0 %1128
  %1130 = vrot.lane.b32.xlu0 %v257, 96
  %v1131 = vpop.permute.xlu0 %1130
  %1132 = vrot.lane.b32.xlu0 %v262, 96
  %v1133 = vpop.permute.xlu0 %1132
  %1134 = vrot.lane.b32.xlu0 %v267, 96
  %v1135 = vpop.permute.xlu0 %1134
  %1136 = vrot.lane.b32.xlu0 %v272, 96
  %v1137 = vpop.permute.xlu0 %1136
  %1138 = vrot.lane.b32.xlu0 %v277, 96
  %v1139 = vpop.permute.xlu0 %1138
  %1140 = vrot.lane.b32.xlu0 %v282, 96
  %v1141 = vpop.permute.xlu0 %1140
  %1158 = vrot.lane.b32.xlu0 %v389, 96
  %v1159 = vpop.permute.xlu0 %1158
  %1160 = vrot.lane.b32.xlu0 %v493, 96
  %v1161 = vpop.permute.xlu0 %1160
  %1162 = vrot.lane.b32.xlu0 %v597, 96
  %v1163 = vpop.permute.xlu0 %1162
  %1164 = vrot.lane.b32.xlu0 %v701, 96
  %v1165 = vpop.permute.xlu0 %1164
  %1166 = vrot.lane.b32.xlu0 %v805, 96
  %v1167 = vpop.permute.xlu0 %1166
  %1168 = vrot.lane.b32.xlu0 %v909, 96
  %v1169 = vpop.permute.xlu0 %1168
  %1170 = vrot.lane.b32.xlu0 %v1013, 96
  %v1171 = vpop.permute.xlu0 %1170
  %1172 = vrot.lane.b32.xlu0 %v1117, 96
  %v1173 = vpop.permute.xlu0 %1172
  %v1182 = vsel %vm285, %v1127, %v1159
  %v1183 = vsel %vm285, %v1129, %v1161
  %v1184 = vsel %vm285, %v1131, %v1163
  %v1185 = vsel %vm285, %v1133, %v1165
  %v1186 = vsel %vm285, %v1135, %v1167
  %v1187 = vsel %vm285, %v1137, %v1169
  %v1188 = vsel %vm285, %v1139, %v1171
  %v1189 = vsel %vm285, %v1141, %v1173
  %v1190 = vadd.f32 %v247, %v1182
  %v1191 = vadd.f32 %v252, %v1183
  %v1192 = vadd.f32 %v257, %v1184
  %v1193 = vadd.f32 %v262, %v1185
  %v1194 = vadd.f32 %v267, %v1186
  %v1195 = vadd.f32 %v272, %v1187
  %v1196 = vadd.f32 %v277, %v1188
  %v1197 = vadd.f32 %v282, %v1189
  %1202 = vrot.lane.b32.xlu0 %v146, 64
  %v1203 = vpop.permute.xlu0 %1202
  %1204 = vrot.lane.b32.xlu0 %v147, 64
  %v1205 = vpop.permute.xlu0 %1204
  %1206 = vrot.lane.b32.xlu0 %v148, 64
  %v1207 = vpop.permute.xlu0 %1206
  %1208 = vrot.lane.b32.xlu0 %v149, 64
  %v1209 = vpop.permute.xlu0 %1208
  %1215 = vrot.lane.b32.xlu0 %v154, 64
  %v1216 = vpop.permute.xlu0 %1215
  %v1219 = vsel %vm155, %v1190, 0
  %v1222 = vsel %vm155, %v1191, 0
  %v1225 = vsel %vm155, %v1192, 0
  %v1228 = vsel %vm155, %v1193, 0
  %v1231 = vsel %vm155, %v1194, 0
  %v1234 = vsel %vm155, %v1195, 0
  %v1237 = vsel %vm155, %v1196, 0
  %v1240 = vsel %vm155, %v1197, 0
  %1242 = vmatprep.subr.mxu0 0.0
  %1243 = vmatpush1.msra.mxu0 %v1203
  %1244 = vmatprep.subr.mxu0 0.0
  %1245 = vmatpush1.msra.mxu0 %v1205
  %1246 = vmatprep.subr.mxu0 0.0
  %1247 = vmatpush1.msra.mxu0 %v1207
  %1248 = vmatprep.subr.mxu0 0.0
  %1249 = vmatpush1.msra.mxu0 %v1209
  %1250 = vmatprep.subr.mxu0 0.0
  %1251 = vmatpush1.msra.mxu0 0.0
  %1252 = vmatprep.subr.mxu0 0.0
  %1253 = vmatpush1.msra.mxu0 0.0
  %1254 = vmatprep.subr.mxu0 0.0
  %1255 = vmatpush1.msra.mxu0 0.0
  %1256 = vmatprep.subr.mxu0 0.0
  %1257 = vmatpush1.msra.mxu0 0.0
  %1258 = vmatprep.subr.mxu0 0.0
  %1259 = vmatpush1.msra.mxu0 0.0
  %1260 = vmatprep.subr.mxu0 0.0
  %1261 = vmatpush1.msra.mxu0 0.0
  %1262 = vmatprep.subr.mxu0 0.0
  %1263 = vmatpush1.msra.mxu0 0.0
  %1264 = vmatprep.subr.mxu0 0.0
  %1265 = vmatpush1.msra.mxu0 0.0
  %1266 = vmatprep.subr.mxu0 0.0
  %1267 = vmatpush1.msra.mxu0 0.0
  %1268 = vmatprep.subr.mxu0 0.0
  %1269 = vmatpush1.msra.mxu0 0.0
  %1270 = vmatprep.subr.mxu0 0.0
  %1271 = vmatpush1.msra.mxu0 0.0
  %1272 = vmatprep.subr.mxu0 0.0
  %1273 = vmatpush1.msra.mxu0 0.0
  %1274 = vmatprep.subr.mxu0 0.0
  %1275 = vmatpush1.msra.mxu0 0.0
  %1276 = vmatprep.subr.mxu0 0.0
  %1277 = vmatpush1.msra.mxu0 0.0
  %1278 = vmatprep.subr.mxu0 0.0
  %1279 = vmatpush1.msra.mxu0 0.0
  %1280 = vmatprep.subr.mxu0 0.0
  %1281 = vmatpush1.msra.mxu0 0.0
  %1282 = vmatprep.subr.mxu0 0.0
  %1283 = vmatpush1.msra.mxu0 0.0
  %1284 = vmatprep.subr.mxu0 0.0
  %1285 = vmatpush1.msra.mxu0 0.0
  %1286 = vmatprep.subr.mxu0 0.0
  %1287 = vmatpush1.msra.mxu0 0.0
  %1288 = vmatprep.subr.mxu0 0.0
  %1289 = vmatpush1.msra.mxu0 0.0
  %1290 = vmatprep.subr.mxu0 0.0
  %1291 = vmatpush1.msra.mxu0 0.0
  %1292 = vmatprep.subr.mxu0 0.0
  %1293 = vmatpush1.msra.mxu0 0.0
  %1294 = vmatprep.subr.mxu0 0.0
  %1295 = vmatpush1.msra.mxu0 0.0
  %1296 = vmatprep.subr.mxu0 0.0
  %1297 = vmatpush1.msra.mxu0 0.0
  %1298 = vmatprep.subr.mxu0 0.0
  %1299 = vmatpush1.msra.mxu0 0.0
  %1300 = vmatprep.subr.mxu0 0.0
  %1301 = vmatpush1.msra.mxu0 0.0
  %1302 = vmatprep.subr.mxu0 0.0
  %1303 = vmatpush1.msra.mxu0 0.0
  %1304 = vmatprep.subr.mxu0 0.0
  %1305 = vmatpush1.msra.mxu0 0.0
  %1306 = vmatprep.mubr.f32.mxu0 0.0
  %1307 = vmatmul.mubr.f32.gmra.mrb[0].mxu0 %v1219
  %v1308 = vpop.f32.mrb[0].mxu0
  %v1309 = vadd.f32 %v1216, %v1308
  %v1310 = vpop.f32.mrb[0].mxu0
  %1311 = vmatprep.mubr.f32.mxu0 0.0
  %1312 = vmatmul.mubr.f32.gmra.mrb[0].mxu0 %v1222
  %v1313 = vpop.f32.mrb[0].mxu0
  %v1314 = vadd.f32 %v1216, %v1313
  %v1315 = vpop.f32.mrb[0].mxu0
  %1316 = vmatprep.mubr.f32.mxu0 0.0
  %1317 = vmatmul.mubr.f32.gmra.mrb[0].mxu0 %v1225
  %v1318 = vpop.f32.mrb[0].mxu0
  %v1319 = vadd.f32 %v1216, %v1318
  %v1320 = vpop.f32.mrb[0].mxu0
  %1321 = vmatprep.mubr.f32.mxu0 0.0
  %1322 = vmatmul.mubr.f32.gmra.mrb[0].mxu0 %v1228
  %v1323 = vpop.f32.mrb[0].mxu0
  %v1324 = vadd.f32 %v1216, %v1323
  %v1325 = vpop.f32.mrb[0].mxu0
  %1326 = vmatprep.mubr.f32.mxu0 0.0
  %1327 = vmatmul.mubr.f32.gmra.mrb[0].mxu0 %v1231
  %v1328 = vpop.f32.mrb[0].mxu0
  %v1329 = vadd.f32 %v1216, %v1328
  %v1330 = vpop.f32.mrb[0].mxu0
  %1331 = vmatprep.mubr.f32.mxu0 0.0
  %1332 = vmatmul.mubr.f32.gmra.mrb[0].mxu0 %v1234
  %v1333 = vpop.f32.mrb[0].mxu0
  %v1334 = vadd.f32 %v1216, %v1333
  %v1335 = vpop.f32.mrb[0].mxu0
  %1336 = vmatprep.mubr.f32.mxu0 0.0
  %1337 = vmatmul.mubr.f32.gmra.mrb[0].mxu0 %v1237
  %v1338 = vpop.f32.mrb[0].mxu0
  %v1339 = vadd.f32 %v1216, %v1338
  %v1340 = vpop.f32.mrb[0].mxu0
  %1341 = vmatprep.mubr.f32.mxu0 0.0
  %1342 = vmatmul.mubr.f32.gmra.mrb[0].mxu0 %v1240
  %v1343 = vpop.f32.mrb[0].mxu0
  %v1344 = vadd.f32 %v1216, %v1343
  %v1345 = vpop.f32.mrb[0].mxu0
  %1346 = vdwg.mxu0
  %vm1347 = vcmask 392192
  %1348 = vst.msk [vmem:[#allocation2] sm:$0xff] %vm1347, %v1309
  %1349 = vst.msk [vmem:[#allocation2 + $0x8] sm:$0xff] %vm1347, %v1314
  %1350 = vst.msk [vmem:[#allocation2 + $0x10] sm:$0xff] %vm1347, %v1319
  %1351 = vst.msk [vmem:[#allocation2 + $0x18] sm:$0xff] %vm1347, %v1324
  %1352 = vst.msk [vmem:[#allocation2 + $0x20] sm:$0xff] %vm1347, %v1329
  %1353 = vst.msk [vmem:[#allocation2 + $0x28] sm:$0xff] %vm1347, %v1334
  %1354 = vst.msk [vmem:[#allocation2 + $0x30] sm:$0xff] %vm1347, %v1339
  %1355 = vst.msk [vmem:[#allocation2 + $0x38] sm:$0xff] %vm1347, %v1344
  %v1356 = vld [vmem:[%s1] sm:$0xff]
  %v1357 = vld [vmem:[%s1 + $0x8] sm:$0xff]
  %v1358 = vld [vmem:[%s1 + $0x10] sm:$0xff]
  %v1359 = vld [vmem:[%s1 + $0x18] sm:$0xff]
  %v1360 = vld [vmem:[%s1 + $0x20] sm:$0xff]
  %v1361 = vld [vmem:[%s1 + $0x28] sm:$0xff]
  %v1362 = vld [vmem:[%s1 + $0x30] sm:$0xff]
  %v1363 = vld [vmem:[%s1 + $0x38] sm:$0xff]
  %v1364 = vld [vmem:[%s3] sm:$0xff]
  %v1365 = vld [vmem:[%s3 + $0x20] sm:$0x1]
  %v1366 = vlaneseq
  %v1367 = vshrl.u32 %v1366, 7
  %v1368 = vsub.s32 0, %v1367
  %v1369 = vrot.slane %v1365, %v1368
  %1371 = vrot.lane.b32.xlu0 %v1364, 16
  %v1372 = vpop.permute.xlu0 %1371
  %1375 = vrot.lane.b32.xlu0 %v1369, 16
  %v1376 = vpop.permute.xlu0 %1375
  %vm1378 = vcmask 64512
  %v1380 = vsel %vm1378, %v1356, 0
  %v1383 = vsel %vm1378, %v1357, 0
  %v1386 = vsel %vm1378, %v1358, 0
  %v1389 = vsel %vm1378, %v1359, 0
  %v1392 = vsel %vm1378, %v1360, 0
  %v1395 = vsel %vm1378, %v1361, 0
  %v1398 = vsel %vm1378, %v1362, 0
  %v1401 = vsel %vm1378, %v1363, 0
  %1403 = vmatprep.subr.mxu0 0.0
  %1404 = vmatpush1.msra.mxu0 %v1372
  %1405 = vmatprep.subr.mxu0 0.0
  %1406 = vmatpush1.msra.mxu0 0.0
  %1407 = vmatprep.subr.mxu0 0.0
  %1408 = vmatpush1.msra.mxu0 0.0
  %1409 = vmatprep.subr.mxu0 0.0
  %1410 = vmatpush1.msra.mxu0 0.0
  %1411 = vmatprep.subr.mxu0 0.0
  %1412 = vmatpush1.msra.mxu0 0.0
  %1413 = vmatprep.subr.mxu0 0.0
  %1414 = vmatpush1.msra.mxu0 0.0
  %1415 = vmatprep.subr.mxu0 0.0
  %1416 = vmatpush1.msra.mxu0 0.0
  %1417 = vmatprep.subr.mxu0 0.0
  %1418 = vmatpush1.msra.mxu0 0.0
  %1419 = vmatprep.subr.mxu0 0.0
  %1420 = vmatpush1.msra.mxu0 0.0
  %1421 = vmatprep.subr.mxu0 0.0
  %1422 = vmatpush1.msra.mxu0 0.0
  %1423 = vmatprep.subr.mxu0 0.0
  %1424 = vmatpush1.msra.mxu0 0.0
  %1425 = vmatprep.subr.mxu0 0.0
  %1426 = vmatpush1.msra.mxu0 0.0
  %1427 = vmatprep.subr.mxu0 0.0
  %1428 = vmatpush1.msra.mxu0 0.0
  %1429 = vmatprep.subr.mxu0 0.0
  %1430 = vmatpush1.msra.mxu0 0.0
  %1431 = vmatprep.subr.mxu0 0.0
  %1432 = vmatpush1.msra.mxu0 0.0
  %1433 = vmatprep.subr.mxu0 0.0
  %1434 = vmatpush1.msra.mxu0 0.0
  %1435 = vmatprep.subr.mxu0 0.0
  %1436 = vmatpush1.msra.mxu0 0.0
  %1437 = vmatprep.subr.mxu0 0.0
  %1438 = vmatpush1.msra.mxu0 0.0
  %1439 = vmatprep.subr.mxu0 0.0
  %1440 = vmatpush1.msra.mxu0 0.0
  %1441 = vmatprep.subr.mxu0 0.0
  %1442 = vmatpush1.msra.mxu0 0.0
  %1443 = vmatprep.subr.mxu0 0.0
  %1444 = vmatpush1.msra.mxu0 0.0
  %1445 = vmatprep.subr.mxu0 0.0
  %1446 = vmatpush1.msra.mxu0 0.0
  %1447 = vmatprep.subr.mxu0 0.0
  %1448 = vmatpush1.msra.mxu0 0.0
  %1449 = vmatprep.subr.mxu0 0.0
  %1450 = vmatpush1.msra.mxu0 0.0
  %1451 = vmatprep.subr.mxu0 0.0
  %1452 = vmatpush1.msra.mxu0 0.0
  %1453 = vmatprep.subr.mxu0 0.0
  %1454 = vmatpush1.msra.mxu0 0.0
  %1455 = vmatprep.subr.mxu0 0.0
  %1456 = vmatpush1.msra.mxu0 0.0
  %1457 = vmatprep.subr.mxu0 0.0
  %1458 = vmatpush1.msra.mxu0 0.0
  %1459 = vmatprep.subr.mxu0 0.0
  %1460 = vmatpush1.msra.mxu0 0.0
  %1461 = vmatprep.subr.mxu0 0.0
  %1462 = vmatpush1.msra.mxu0 0.0
  %1463 = vmatprep.subr.mxu0 0.0
  %1464 = vmatpush1.msra.mxu0 0.0
  %1465 = vmatprep.subr.mxu0 0.0
  %1466 = vmatpush1.msra.mxu0 0.0
  %1467 = vmatprep.mubr.f32.mxu0 0.0
  %1468 = vmatmul.mubr.f32.gmra.mrb[0].mxu0 %v1380
  %v1469 = vpop.f32.mrb[0].mxu0
  %v1470 = vadd.f32 %v1376, %v1469
  %v1471 = vpop.f32.mrb[0].mxu0
  %1472 = vmatprep.mubr.f32.mxu0 0.0
  %1473 = vmatmul.mubr.f32.gmra.mrb[0].mxu0 %v1383
  %v1474 = vpop.f32.mrb[0].mxu0
  %v1475 = vadd.f32 %v1376, %v1474
  %v1476 = vpop.f32.mrb[0].mxu0
  %1477 = vmatprep.mubr.f32.mxu0 0.0
  %1478 = vmatmul.mubr.f32.gmra.mrb[0].mxu0 %v1386
  %v1479 = vpop.f32.mrb[0].mxu0
  %v1480 = vadd.f32 %v1376, %v1479
  %v1481 = vpop.f32.mrb[0].mxu0
  %1482 = vmatprep.mubr.f32.mxu0 0.0
  %1483 = vmatmul.mubr.f32.gmra.mrb[0].mxu0 %v1389
  %v1484 = vpop.f32.mrb[0].mxu0
  %v1485 = vadd.f32 %v1376, %v1484
  %v1486 = vpop.f32.mrb[0].mxu0
  %1487 = vmatprep.mubr.f32.mxu0 0.0
  %1488 = vmatmul.mubr.f32.gmra.mrb[0].mxu0 %v1392
  %v1489 = vpop.f32.mrb[0].mxu0
  %v1490 = vadd.f32 %v1376, %v1489
  %v1491 = vpop.f32.mrb[0].mxu0
  %1492 = vmatprep.mubr.f32.mxu0 0.0
  %1493 = vmatmul.mubr.f32.gmra.mrb[0].mxu0 %v1395
  %v1494 = vpop.f32.mrb[0].mxu0
  %v1495 = vadd.f32 %v1376, %v1494
  %v1496 = vpop.f32.mrb[0].mxu0
  %1497 = vmatprep.mubr.f32.mxu0 0.0
  %1498 = vmatmul.mubr.f32.gmra.mrb[0].mxu0 %v1398
  %v1499 = vpop.f32.mrb[0].mxu0
  %v1500 = vadd.f32 %v1376, %v1499
  %v1501 = vpop.f32.mrb[0].mxu0
  %1502 = vmatprep.mubr.f32.mxu0 0.0
  %1503 = vmatmul.mubr.f32.gmra.mrb[0].mxu0 %v1401
  %v1504 = vpop.f32.mrb[0].mxu0
  %v1505 = vadd.f32 %v1376, %v1504
  %v1506 = vpop.f32.mrb[0].mxu0
  %1507 = vdwg.mxu0
  %v1508 = vmax.f32 %v1470, 0.0
  %v1509 = vmax.f32 %v1475, 0.0
  %v1510 = vmax.f32 %v1480, 0.0
  %v1511 = vmax.f32 %v1485, 0.0
  %v1512 = vmax.f32 %v1490, 0.0
  %v1513 = vmax.f32 %v1495, 0.0
  %v1514 = vmax.f32 %v1500, 0.0
  %v1515 = vmax.f32 %v1505, 0.0
  %v1516 = vsub.f32 0.0, %v1508
  %v1517 = vsub.f32 0.0, %v1509
  %v1518 = vsub.f32 0.0, %v1510
  %v1519 = vsub.f32 0.0, %v1511
  %v1520 = vsub.f32 0.0, %v1512
  %v1521 = vsub.f32 0.0, %v1513
  %v1522 = vsub.f32 0.0, %v1514
  %v1523 = vsub.f32 0.0, %v1515
  %v1524 = vmul.f32 %v1516, 1.442695
  %v1525 = vpow.pop %v1524
  %v1526 = vmul.f32 %v1517, 1.442695
  %v1527 = vpow.pop %v1526
  %v1528 = vmul.f32 %v1518, 1.442695
  %v1529 = vpow.pop %v1528
  %v1530 = vmul.f32 %v1519, 1.442695
  %v1531 = vpow.pop %v1530
  %v1532 = vmul.f32 %v1520, 1.442695
  %v1533 = vpow.pop %v1532
  %v1534 = vmul.f32 %v1521, 1.442695
  %v1535 = vpow.pop %v1534
  %v1536 = vmul.f32 %v1522, 1.442695
  %v1537 = vpow.pop %v1536
  %v1538 = vmul.f32 %v1523, 1.442695
  %v1539 = vpow.pop %v1538
  %1540 = vst.msk [vmem:[#allocation3] sm:$0xff] %vm31, %v1525
  %1541 = vst.msk [vmem:[#allocation3 + $0x8] sm:$0xff] %vm31, %v1527
  %1542 = vst.msk [vmem:[#allocation3 + $0x10] sm:$0xff] %vm31, %v1529
  %1543 = vst.msk [vmem:[#allocation3 + $0x18] sm:$0xff] %vm31, %v1531
  %1544 = vst.msk [vmem:[#allocation3 + $0x20] sm:$0xff] %vm31, %v1533
  %1545 = vst.msk [vmem:[#allocation3 + $0x28] sm:$0xff] %vm31, %v1535
  %1546 = vst.msk [vmem:[#allocation3 + $0x30] sm:$0xff] %vm31, %v1537
  %1547 = vst.msk [vmem:[#allocation3 + $0x38] sm:$0xff] %vm31, %v1539
  %v1548 = vld [vmem:[%s5] sm:$0x3]
  %1550 = vrot.lane.b32.xlu0 %v102, 59
  %v1551 = vpop.permute.xlu0 %1550
  %vm1553 = vcmask 523264
  %v1554 = vsel %vm1553, 0.0, %v1551
  %v1556 = vlaneseq
  %v1557 = vshrl.u32 %v1556, 7
  %v1558 = vsub.s32 0, %v1557
  %v1559 = vrot.slane %v1548, %v1558
  %v1560 = vlaneseq
  %v1561 = vshrl.u32 %v1560, 7
  %v1562 = vsub.s32 1, %v1561
  %v1563 = vrot.slane %v1548, %v1562
  %v1566 = vadd.f32 %v1559, 0.0
  %v1567 = vadd.f32 %v1563, %v1554
  %v1568 = vld [vmem:[%s4] sm:$0xff]
  %v1569 = vld [vmem:[%s4 + $0x8] sm:$0xff]
  %v1570 = vld [vmem:[%s4 + $0x10] sm:$0xff]
  %v1571 = vld [vmem:[%s4 + $0x18] sm:$0xff]
  %v1572 = vld [vmem:[%s4 + $0x20] sm:$0xff]
  %v1573 = vld [vmem:[%s4 + $0x28] sm:$0xff]
  %v1574 = vld [vmem:[%s4 + $0x30] sm:$0xff]
  %v1575 = vld [vmem:[%s4 + $0x38] sm:$0xff]
  %v1576 = vld [vmem:[%s4 + $0x40] sm:$0xff]
  %v1577 = vld [vmem:[%s4 + $0x48] sm:$0xff]
  %v1578 = vld [vmem:[%s4 + $0x50] sm:$0xff]
  %v1579 = vld [vmem:[%s4 + $0x58] sm:$0xff]
  %v1580 = vld [vmem:[%s4 + $0x60] sm:$0xff]
  %v1581 = vld [vmem:[%s4 + $0x68] sm:$0xff]
  %v1582 = vld [vmem:[%s4 + $0x70] sm:$0xff]
  %v1583 = vld [vmem:[%s4 + $0x78] sm:$0xff]
  %v1584 = vld [vmem:[%s4 + $0x80] sm:$0xff]
  %v1585 = vld [vmem:[%s4 + $0x88] sm:$0xff]
  %v1586 = vld [vmem:[%s4 + $0x90] sm:$0xff]
  %v1587 = vld [vmem:[%s4 + $0x98] sm:$0xff]
  %1588 = vrot.lane.b32.xlu0 %v28, 112
  %v1589 = vpop.permute.xlu0 %1588
  %v1591 = vsel %vm155, %v1589, %v1589
  %v1592 = vsel %vm1347, %v1591, 0.0
  %v1593 = vsel %vm1553, %v1592, 0.0
  %vm1594 = vcmask 654336
  %v1596 = vsel %vm1594, %v1593, 0
  %1598 = vmatprep.subr.mxu0 %v1569
  %1599 = vmatpush1.msra.mxu0 %v1568
  %1600 = vmatprep.subr.mxu0 %v1571
  %1601 = vmatpush1.msra.mxu0 %v1570
  %1602 = vmatprep.subr.mxu0 %v1573
  %1603 = vmatpush1.msra.mxu0 %v1572
  %1604 = vmatprep.subr.mxu0 %v1575
  %1605 = vmatpush1.msra.mxu0 %v1574
  %1606 = vmatprep.subr.mxu0 %v1577
  %1607 = vmatpush1.msra.mxu0 %v1576
  %1608 = vmatprep.subr.mxu0 %v1579
  %1609 = vmatpush1.msra.mxu0 %v1578
  %1610 = vmatprep.subr.mxu0 %v1581
  %1611 = vmatpush1.msra.mxu0 %v1580
  %1612 = vmatprep.subr.mxu0 %v1583
  %1613 = vmatpush1.msra.mxu0 %v1582
  %1614 = vmatprep.subr.mxu0 %v1585
  %1615 = vmatpush1.msra.mxu0 %v1584
  %1616 = vmatprep.subr.mxu0 %v1587
  %1617 = vmatpush1.msra.mxu0 %v1586
  %1618 = vmatprep.subr.mxu0 0.0
  %1619 = vmatpush1.msra.mxu0 0.0
  %1620 = vmatprep.subr.mxu0 0.0
  %1621 = vmatpush1.msra.mxu0 0.0
  %1622 = vmatprep.subr.mxu0 0.0
  %1623 = vmatpush1.msra.mxu0 0.0
  %1624 = vmatprep.subr.mxu0 0.0
  %1625 = vmatpush1.msra.mxu0 0.0
  %1626 = vmatprep.subr.mxu0 0.0
  %1627 = vmatpush1.msra.mxu0 0.0
  %1628 = vmatprep.subr.mxu0 0.0
  %1629 = vmatpush1.msra.mxu0 0.0
  %1630 = vmatprep.subr.mxu0 0.0
  %1631 = vmatpush1.msra.mxu0 0.0
  %1632 = vmatprep.subr.mxu0 0.0
  %1633 = vmatpush1.msra.mxu0 0.0
  %1634 = vmatprep.subr.mxu0 0.0
  %1635 = vmatpush1.msra.mxu0 0.0
  %1636 = vmatprep.subr.mxu0 0.0
  %1637 = vmatpush1.msra.mxu0 0.0
  %1638 = vmatprep.subr.mxu0 0.0
  %1639 = vmatpush1.msra.mxu0 0.0
  %1640 = vmatprep.subr.mxu0 0.0
  %1641 = vmatpush1.msra.mxu0 0.0
  %1642 = vmatprep.subr.mxu0 0.0
  %1643 = vmatpush1.msra.mxu0 0.0
  %1644 = vmatprep.subr.mxu0 0.0
  %1645 = vmatpush1.msra.mxu0 0.0
  %1646 = vmatprep.subr.mxu0 0.0
  %1647 = vmatpush1.msra.mxu0 0.0
  %1648 = vmatprep.subr.mxu0 0.0
  %1649 = vmatpush1.msra.mxu0 0.0
  %1650 = vmatprep.subr.mxu0 0.0
  %1651 = vmatpush1.msra.mxu0 0.0
  %1652 = vmatprep.subr.mxu0 0.0
  %1653 = vmatpush1.msra.mxu0 0.0
  %1654 = vmatprep.subr.mxu0 0.0
  %1655 = vmatpush1.msra.mxu0 0.0
  %1656 = vmatprep.subr.mxu0 0.0
  %1657 = vmatpush1.msra.mxu0 0.0
  %1658 = vmatprep.subr.mxu0 0.0
  %1659 = vmatpush1.msra.mxu0 0.0
  %1660 = vmatprep.subr.mxu0 0.0
  %1661 = vmatpush1.msra.mxu0 0.0
  %1662 = vmatprep.mubr.f32.mxu0 0.0
  %1663 = vmatmul.mubr.f32.gmra.mrb[0].mxu0 %v1596
  %v1664 = vpop.f32.mrb[0].mxu0
  %v1665 = vadd.f32 %v1566, %v1664
  %v1666 = vpop.f32.mrb[0].mxu0
  %1667 = vdwg.mxu0
  %v1668 = vld [vmem:[#allocation2] sm:$0xff]
  %v1669 = vadd.f32 %v1668, %v1665
  %v1670 = vxor.u32 %v1669, 2147483648
  %v1671 = vmul.f32 %v1670, 1.442695
  %v1672 = vpow.pop %v1671
  %v1673 = vadd.f32 %v1672, 1.0
  %v1674 = vrcp.pop %v1673
  %v1675 = vmul.f32 1.0, %v1674
  %1677 = vrot.lane.b32.xlu0 %v1665, 96
  %v1678 = vpop.permute.xlu0 %1677
  %v1680 = vmul.f32 %v1675, %v1678
  %1682 = vrot.lane.b32.xlu0 %v1680, 32
  %v1683 = vpop.permute.xlu0 %1682
  %v1685 = vadd.f32 %v1668, %v1683
  %v1686 = vtanh.pop %v1685
  %v1687 = vsub.f32 1.0, %v1675
  %1689 = vrot.lane.b32.xlu0 %v1686, 112
  %v1690 = vpop.permute.xlu0 %1689
  %v1692 = vmul.f32 %v1687, %v1690
  %v1693 = vmul.f32 %v1675, %v28
  %v1694 = vadd.f32 %v1692, %v1693
  %vm1695 = vcmp.gt.f32.partialorder %v28, 0.0
  %v1696 = vsel %vm1695, 1, 0
  %1697 = vset.pattern.permute.xlu0 64
  %1698 = vperm.xlu0 %1697, %v1696
  %v1699 = vpop.permute.xlu0 %1698
  %vm1700 = vcmp.eq.s32.totalorder %v1699, 1
  %v1701 = vsel %vm1700, %v1694, 0.0
  %v1702 = vsel %vm1700, %v1694, %v28
  %1704 = vrot.lane.b32.xlu0 %v1702, 112
  %v1705 = vpop.permute.xlu0 %1704
  %1708 = vrot.lane.b32.xlu0 %v1701, 32
  %v1709 = vpop.permute.xlu0 %1708
  %v1711 = vsel %vm31, %v1705, %v1589
  %v1712 = vsel %vm155, %v1711, %v1589
  %v1713 = vsel %vm1347, %v1712, %v1709
  %v1714 = vsel %vm1553, %v1713, 0.0
  %v1716 = vsel %vm1594, %v1714, 0
  %1718 = vmatprep.subr.mxu0 %v1569
  %1719 = vmatpush1.msra.mxu0 %v1568
  %1720 = vmatprep.subr.mxu0 %v1571
  %1721 = vmatpush1.msra.mxu0 %v1570
  %1722 = vmatprep.subr.mxu0 %v1573
  %1723 = vmatpush1.msra.mxu0 %v1572
  %1724 = vmatprep.subr.mxu0 %v1575
  %1725 = vmatpush1.msra.mxu0 %v1574
  %1726 = vmatprep.subr.mxu0 %v1577
  %1727 = vmatpush1.msra.mxu0 %v1576
  %1728 = vmatprep.subr.mxu0 %v1579
  %1729 = vmatpush1.msra.mxu0 %v1578
  %1730 = vmatprep.subr.mxu0 %v1581
  %1731 = vmatpush1.msra.mxu0 %v1580
  %1732 = vmatprep.subr.mxu0 %v1583
  %1733 = vmatpush1.msra.mxu0 %v1582
  %1734 = vmatprep.subr.mxu0 %v1585
  %1735 = vmatpush1.msra.mxu0 %v1584
  %1736 = vmatprep.subr.mxu0 %v1587
  %1737 = vmatpush1.msra.mxu0 %v1586
  %1738 = vmatprep.subr.mxu0 0.0
  %1739 = vmatpush1.msra.mxu0 0.0
  %1740 = vmatprep.subr.mxu0 0.0
  %1741 = vmatpush1.msra.mxu0 0.0
  %1742 = vmatprep.subr.mxu0 0.0
  %1743 = vmatpush1.msra.mxu0 0.0
  %1744 = vmatprep.subr.mxu0 0.0
  %1745 = vmatpush1.msra.mxu0 0.0
  %1746 = vmatprep.subr.mxu0 0.0
  %1747 = vmatpush1.msra.mxu0 0.0
  %1748 = vmatprep.subr.mxu0 0.0
  %1749 = vmatpush1.msra.mxu0 0.0
  %1750 = vmatprep.subr.mxu0 0.0
  %1751 = vmatpush1.msra.mxu0 0.0
  %1752 = vmatprep.subr.mxu0 0.0
  %1753 = vmatpush1.msra.mxu0 0.0
  %1754 = vmatprep.subr.mxu0 0.0
  %1755 = vmatpush1.msra.mxu0 0.0
  %1756 = vmatprep.subr.mxu0 0.0
  %1757 = vmatpush1.msra.mxu0 0.0
  %1758 = vmatprep.subr.mxu0 0.0
  %1759 = vmatpush1.msra.mxu0 0.0
  %1760 = vmatprep.subr.mxu0 0.0
  %1761 = vmatpush1.msra.mxu0 0.0
  %1762 = vmatprep.subr.mxu0 0.0
  %1763 = vmatpush1.msra.mxu0 0.0
  %1764 = vmatprep.subr.mxu0 0.0
  %1765 = vmatpush1.msra.mxu0 0.0
  %1766 = vmatprep.subr.mxu0 0.0
  %1767 = vmatpush1.msra.mxu0 0.0
  %1768 = vmatprep.subr.mxu0 0.0
  %1769 = vmatpush1.msra.mxu0 0.0
  %1770 = vmatprep.subr.mxu0 0.0
  %1771 = vmatpush1.msra.mxu0 0.0
  %1772 = vmatprep.subr.mxu0 0.0
  %1773 = vmatpush1.msra.mxu0 0.0
  %1774 = vmatprep.subr.mxu0 0.0
  %1775 = vmatpush1.msra.mxu0 0.0
  %1776 = vmatprep.subr.mxu0 0.0
  %1777 = vmatpush1.msra.mxu0 0.0
  %1778 = vmatprep.subr.mxu0 0.0
  %1779 = vmatpush1.msra.mxu0 0.0
  %1780 = vmatprep.subr.mxu0 0.0
  %1781 = vmatpush1.msra.mxu0 0.0
  %1782 = vmatprep.mubr.f32.mxu0 0.0
  %1783 = vmatmul.mubr.f32.gmra.mrb[0].mxu0 %v1716
  %v1784 = vpop.f32.mrb[0].mxu0
  %v1785 = vadd.f32 %v1566, %v1784
  %v1786 = vpop.f32.mrb[0].mxu0
  %v1787 = vadd.f32 %v1567, %v1786
  %1788 = vdwg.mxu0
  %v1789 = vld [vmem:[#allocation2 + $0x8] sm:$0xff]
  %v1790 = vadd.f32 %v1789, %v1785
  %v1791 = vxor.u32 %v1790, 2147483648
  %v1792 = vmul.f32 %v1791, 1.442695
  %v1793 = vpow.pop %v1792
  %v1794 = vadd.f32 %v1793, 1.0
  %v1795 = vrcp.pop %v1794
  %v1796 = vmul.f32 1.0, %v1795
  %1798 = vrot.lane.b32.xlu0 %v1785, 96
  %v1799 = vpop.permute.xlu0 %1798
  %v1801 = vmul.f32 %v1796, %v1799
  %1803 = vrot.lane.b32.xlu0 %v1801, 32
  %v1804 = vpop.permute.xlu0 %1803
  %v1806 = vadd.f32 %v1789, %v1804
  %v1807 = vtanh.pop %v1806
  %v1808 = vsub.f32 1.0, %v1796
  %1810 = vrot.lane.b32.xlu0 %v1807, 112
  %v1811 = vpop.permute.xlu0 %1810
  %v1813 = vmul.f32 %v1808, %v1811
  %v1814 = vmul.f32 %v1796, %v1702
  %v1815 = vadd.f32 %v1813, %v1814
  %vm1816 = vcmp.gt.f32.partialorder %v28, 1.0
  %v1817 = vsel %vm1816, 1, 0
  %1818 = vset.pattern.permute.xlu0 64
  %1819 = vperm.xlu0 %1818, %v1817
  %v1820 = vpop.permute.xlu0 %1819
  %vm1821 = vcmp.eq.s32.totalorder %v1820, 1
  %v1822 = vsel %vm1821, %v1815, 0.0
  %v1823 = vsel %vm1821, %v1815, %v1702
  %v1824 = vadd.f32 %v1787, %v1799
  %v1825 = vxor.u32 %v1824, 2147483648
  %v1826 = vmul.f32 %v1825, 1.442695
  %v1827 = vpow.pop %v1826
  %v1828 = vadd.f32 %v1827, 1.0
  %v1829 = vrcp.pop %v1828
  %v1830 = vmul.f32 1.0, %v1829
  %1831 = vrot.lane.b32.xlu0 %v1785, 64
  %v1832 = vpop.permute.xlu0 %1831
  %v1834 = vmul.f32 %v1830, %v1832
  %1836 = vrot.lane.b32.xlu0 %v1834, 32
  %v1837 = vpop.permute.xlu0 %1836
  %v1839 = vadd.f32 %v1787, %v1837
  %v1840 = vtanh.pop %v1839
  %v1841 = vsub.f32 1.0, %v1830
  %1843 = vrot.lane.b32.xlu0 %v1840, 112
  %v1844 = vpop.permute.xlu0 %1843
  %v1846 = vmul.f32 %v1841, %v1844
  %v1847 = vmul.f32 %v1830, %v28
  %v1848 = vadd.f32 %v1846, %v1847
  %v1849 = vsel %vm1700, %v1848, 0.0
  %v1850 = vsel %vm1700, %v1848, %v28
  %1852 = vrot.lane.b32.xlu0 %v1849, 96
  %v1853 = vpop.permute.xlu0 %1852
  %1855 = vst.msk [vmem:[#allocation4] sm:$0xff] %vm31, %v1853
  %v1856 = vld [vmem:[#allocation3] sm:$0xff]
  %v1857 = vmul.f32 %v1856, %v1853
  %1859 = vrot.lane.b32.xlu0 %v1823, 112
  %v1860 = vpop.permute.xlu0 %1859
  %1863 = vrot.lane.b32.xlu0 %v1850, 112
  %v1864 = vpop.permute.xlu0 %1863
  %1867 = vrot.lane.b32.xlu0 %v1822, 32
  %v1868 = vpop.permute.xlu0 %1867
  %1871 = vrot.lane.b32.xlu0 %v1857, 64
  %v1872 = vpop.permute.xlu0 %1871
  %v1874 = vsel %vm31, %v1860, %v1864
  %v1875 = vsel %vm155, %v1874, %v1589
  %v1876 = vsel %vm1347, %v1875, %v1868
  %v1877 = vsel %vm1553, %v1876, %v1872
  %v1879 = vsel %vm1594, %v1877, 0
  %1881 = vmatprep.subr.mxu0 %v1569
  %1882 = vmatpush1.msra.mxu0 %v1568
  %1883 = vmatprep.subr.mxu0 %v1571
  %1884 = vmatpush1.msra.mxu0 %v1570
  %1885 = vmatprep.subr.mxu0 %v1573
  %1886 = vmatpush1.msra.mxu0 %v1572
  %1887 = vmatprep.subr.mxu0 %v1575
  %1888 = vmatpush1.msra.mxu0 %v1574
  %1889 = vmatprep.subr.mxu0 %v1577
  %1890 = vmatpush1.msra.mxu0 %v1576
  %1891 = vmatprep.subr.mxu0 %v1579
  %1892 = vmatpush1.msra.mxu0 %v1578
  %1893 = vmatprep.subr.mxu0 %v1581
  %1894 = vmatpush1.msra.mxu0 %v1580
  %1895 = vmatprep.subr.mxu0 %v1583
  %1896 = vmatpush1.msra.mxu0 %v1582
  %1897 = vmatprep.subr.mxu0 %v1585
  %1898 = vmatpush1.msra.mxu0 %v1584
  %1899 = vmatprep.subr.mxu0 %v1587
  %1900 = vmatpush1.msra.mxu0 %v1586
  %1901 = vmatprep.subr.mxu0 0.0
  %1902 = vmatpush1.msra.mxu0 0.0
  %1903 = vmatprep.subr.mxu0 0.0
  %1904 = vmatpush1.msra.mxu0 0.0
  %1905 = vmatprep.subr.mxu0 0.0
  %1906 = vmatpush1.msra.mxu0 0.0
  %1907 = vmatprep.subr.mxu0 0.0
  %1908 = vmatpush1.msra.mxu0 0.0
  %1909 = vmatprep.subr.mxu0 0.0
  %1910 = vmatpush1.msra.mxu0 0.0
  %1911 = vmatprep.subr.mxu0 0.0
  %1912 = vmatpush1.msra.mxu0 0.0
  %1913 = vmatprep.subr.mxu0 0.0
  %1914 = vmatpush1.msra.mxu0 0.0
  %1915 = vmatprep.subr.mxu0 0.0
  %1916 = vmatpush1.msra.mxu0 0.0
  %1917 = vmatprep.subr.mxu0 0.0
  %1918 = vmatpush1.msra.mxu0 0.0
  %1919 = vmatprep.subr.mxu0 0.0
  %1920 = vmatpush1.msra.mxu0 0.0
  %1921 = vmatprep.subr.mxu0 0.0
  %1922 = vmatpush1.msra.mxu0 0.0
  %1923 = vmatprep.subr.mxu0 0.0
  %1924 = vmatpush1.msra.mxu0 0.0
  %1925 = vmatprep.subr.mxu0 0.0
  %1926 = vmatpush1.msra.mxu0 0.0
  %1927 = vmatprep.subr.mxu0 0.0
  %1928 = vmatpush1.msra.mxu0 0.0
  %1929 = vmatprep.subr.mxu0 0.0
  %1930 = vmatpush1.msra.mxu0 0.0
  %1931 = vmatprep.subr.mxu0 0.0
  %1932 = vmatpush1.msra.mxu0 0.0
  %1933 = vmatprep.subr.mxu0 0.0
  %1934 = vmatpush1.msra.mxu0 0.0
  %1935 = vmatprep.subr.mxu0 0.0
  %1936 = vmatpush1.msra.mxu0 0.0
  %1937 = vmatprep.subr.mxu0 0.0
  %1938 = vmatpush1.msra.mxu0 0.0
  %1939 = vmatprep.subr.mxu0 0.0
  %1940 = vmatpush1.msra.mxu0 0.0
  %1941 = vmatprep.subr.mxu0 0.0
  %1942 = vmatpush1.msra.mxu0 0.0
  %1943 = vmatprep.subr.mxu0 0.0
  %1944 = vmatpush1.msra.mxu0 0.0
  %1945 = vmatprep.mubr.f32.mxu0 0.0
  %1946 = vmatmul.mubr.f32.gmra.mrb[0].mxu0 %v1879
  %v1947 = vpop.f32.mrb[0].mxu0
  %v1948 = vadd.f32 %v1566, %v1947
  %v1949 = vpop.f32.mrb[0].mxu0
  %v1950 = vadd.f32 %v1567, %v1949
  %1951 = vdwg.mxu0
  %v1952 = vld [vmem:[#allocation2 + $0x10] sm:$0xff]
  %v1953 = vadd.f32 %v1952, %v1948
  %v1954 = vxor.u32 %v1953, 2147483648
  %v1955 = vmul.f32 %v1954, 1.442695
  %v1956 = vpow.pop %v1955
  %v1957 = vadd.f32 %v1956, 1.0
  %v1958 = vrcp.pop %v1957
  %v1959 = vmul.f32 1.0, %v1958
  %1961 = vrot.lane.b32.xlu0 %v1948, 96
  %v1962 = vpop.permute.xlu0 %1961
  %v1964 = vmul.f32 %v1959, %v1962
  %1966 = vrot.lane.b32.xlu0 %v1964, 32
  %v1967 = vpop.permute.xlu0 %1966
  %v1969 = vadd.f32 %v1952, %v1967
  %v1970 = vtanh.pop %v1969
  %v1971 = vsub.f32 1.0, %v1959
  %1973 = vrot.lane.b32.xlu0 %v1970, 112
  %v1974 = vpop.permute.xlu0 %1973
  %v1976 = vmul.f32 %v1971, %v1974
  %v1977 = vmul.f32 %v1959, %v1823
  %v1978 = vadd.f32 %v1976, %v1977
  %vm1979 = vcmp.gt.f32.partialorder %v28, 2.0
  %v1980 = vsel %vm1979, 1, 0
  %1981 = vset.pattern.permute.xlu0 64
  %1982 = vperm.xlu0 %1981, %v1980
  %v1983 = vpop.permute.xlu0 %1982
  %vm1984 = vcmp.eq.s32.totalorder %v1983, 1
  %v1985 = vsel %vm1984, %v1978, 0.0
  %v1986 = vsel %vm1984, %v1978, %v1823
  %v1987 = vadd.f32 %v1950, %v1962
  %v1988 = vxor.u32 %v1987, 2147483648
  %v1989 = vmul.f32 %v1988, 1.442695
  %v1990 = vpow.pop %v1989
  %v1991 = vadd.f32 %v1990, 1.0
  %v1992 = vrcp.pop %v1991
  %v1993 = vmul.f32 1.0, %v1992
  %1994 = vrot.lane.b32.xlu0 %v1948, 64
  %v1995 = vpop.permute.xlu0 %1994
  %v1997 = vmul.f32 %v1993, %v1995
  %1999 = vrot.lane.b32.xlu0 %v1997, 32
  %v2000 = vpop.permute.xlu0 %1999
  %v2002 = vadd.f32 %v1950, %v2000
  %v2003 = vtanh.pop %v2002
  %v2004 = vsub.f32 1.0, %v1993
  %2006 = vrot.lane.b32.xlu0 %v2003, 112
  %v2007 = vpop.permute.xlu0 %2006
  %v2009 = vmul.f32 %v2004, %v2007
  %v2010 = vmul.f32 %v1993, %v1850
  %v2011 = vadd.f32 %v2009, %v2010
  %v2012 = vsel %vm1821, %v2011, 0.0
  %v2013 = vsel %vm1821, %v2011, %v1850
  %2015 = vrot.lane.b32.xlu0 %v2012, 96
  %v2016 = vpop.permute.xlu0 %2015
  %2018 = vst.msk [vmem:[#allocation4 + $0x8] sm:$0xff] %vm31, %v2016
  %v2019 = vld [vmem:[#allocation3 + $0x8] sm:$0xff]
  %v2020 = vmul.f32 %v2019, %v2016
  %2022 = vrot.lane.b32.xlu0 %v1950, 64
  %v2023 = vpop.permute.xlu0 %2022
  %v2025 = vmul.f32 %v1993, %v2023
  %2027 = vrot.lane.b32.xlu0 %v2025, 32
  %v2028 = vpop.permute.xlu0 %2027
  %v2030 = vadd.f32 %v1950, %v2028
  %v2031 = vtanh.pop %v2030
  %2033 = vrot.lane.b32.xlu0 %v2031, 112
  %v2034 = vpop.permute.xlu0 %2033
  %v2036 = vmul.f32 %v2004, %v2034
  %2037 = vrot.lane.b32.xlu0 %v28, 32
  %v2038 = vpop.permute.xlu0 %2037
  %v2040 = vmul.f32 %v1993, %v2038
  %v2041 = vadd.f32 %v2036, %v2040
  %v2042 = vsel %vm1700, %v2041, %v2038
  %v2043 = vsel %vm1700, %v2041, 0.0
  %2045 = vrot.lane.b32.xlu0 %v2043, 48
  %v2046 = vpop.permute.xlu0 %2045
  %2048 = vst.msk [vmem:[#allocation5] sm:$0xff] %vm31, %v2046
  %2050 = vrot.lane.b32.xlu0 %v1986, 112
  %v2051 = vpop.permute.xlu0 %2050
  %2054 = vrot.lane.b32.xlu0 %v2013, 112
  %v2055 = vpop.permute.xlu0 %2054
  %2058 = vrot.lane.b32.xlu0 %v2042, 80
  %v2059 = vpop.permute.xlu0 %2058
  %2062 = vrot.lane.b32.xlu0 %v1985, 32
  %v2063 = vpop.permute.xlu0 %2062
  %2066 = vrot.lane.b32.xlu0 %v2020, 64
  %v2067 = vpop.permute.xlu0 %2066
  %v2069 = vsel %vm31, %v2051, %v2055
  %v2070 = vsel %vm155, %v2069, %v2059
  %v2071 = vsel %vm1347, %v2070, %v2063
  %v2072 = vsel %vm1553, %v2071, %v2067
  %v2074 = vsel %vm1594, %v2072, 0
  %2076 = vmatprep.subr.mxu0 %v1569
  %2077 = vmatpush1.msra.mxu0 %v1568
  %2078 = vmatprep.subr.mxu0 %v1571
  %2079 = vmatpush1.msra.mxu0 %v1570
  %2080 = vmatprep.subr.mxu0 %v1573
  %2081 = vmatpush1.msra.mxu0 %v1572
  %2082 = vmatprep.subr.mxu0 %v1575
  %2083 = vmatpush1.msra.mxu0 %v1574
  %2084 = vmatprep.subr.mxu0 %v1577
  %2085 = vmatpush1.msra.mxu0 %v1576
  %2086 = vmatprep.subr.mxu0 %v1579
  %2087 = vmatpush1.msra.mxu0 %v1578
  %2088 = vmatprep.subr.mxu0 %v1581
  %2089 = vmatpush1.msra.mxu0 %v1580
  %2090 = vmatprep.subr.mxu0 %v1583
  %2091 = vmatpush1.msra.mxu0 %v1582
  %2092 = vmatprep.subr.mxu0 %v1585
  %2093 = vmatpush1.msra.mxu0 %v1584
  %2094 = vmatprep.subr.mxu0 %v1587
  %2095 = vmatpush1.msra.mxu0 %v1586
  %2096 = vmatprep.subr.mxu0 0.0
  %2097 = vmatpush1.msra.mxu0 0.0
  %2098 = vmatprep.subr.mxu0 0.0
  %2099 = vmatpush1.msra.mxu0 0.0
  %2100 = vmatprep.subr.mxu0 0.0
  %2101 = vmatpush1.msra.mxu0 0.0
  %2102 = vmatprep.subr.mxu0 0.0
  %2103 = vmatpush1.msra.mxu0 0.0
  %2104 = vmatprep.subr.mxu0 0.0
  %2105 = vmatpush1.msra.mxu0 0.0
  %2106 = vmatprep.subr.mxu0 0.0
  %2107 = vmatpush1.msra.mxu0 0.0
  %2108 = vmatprep.subr.mxu0 0.0
  %2109 = vmatpush1.msra.mxu0 0.0
  %2110 = vmatprep.subr.mxu0 0.0
  %2111 = vmatpush1.msra.mxu0 0.0
  %2112 = vmatprep.subr.mxu0 0.0
  %2113 = vmatpush1.msra.mxu0 0.0
  %2114 = vmatprep.subr.mxu0 0.0
  %2115 = vmatpush1.msra.mxu0 0.0
  %2116 = vmatprep.subr.mxu0 0.0
  %2117 = vmatpush1.msra.mxu0 0.0
  %2118 = vmatprep.subr.mxu0 0.0
  %2119 = vmatpush1.msra.mxu0 0.0
  %2120 = vmatprep.subr.mxu0 0.0
  %2121 = vmatpush1.msra.mxu0 0.0
  %2122 = vmatprep.subr.mxu0 0.0
  %2123 = vmatpush1.msra.mxu0 0.0
  %2124 = vmatprep.subr.mxu0 0.0
  %2125 = vmatpush1.msra.mxu0 0.0
  %2126 = vmatprep.subr.mxu0 0.0
  %2127 = vmatpush1.msra.mxu0 0.0
  %2128 = vmatprep.subr.mxu0 0.0
  %2129 = vmatpush1.msra.mxu0 0.0
  %2130 = vmatprep.subr.mxu0 0.0
  %2131 = vmatpush1.msra.mxu0 0.0
  %2132 = vmatprep.subr.mxu0 0.0
  %2133 = vmatpush1.msra.mxu0 0.0
  %2134 = vmatprep.subr.mxu0 0.0
  %2135 = vmatpush1.msra.mxu0 0.0
  %2136 = vmatprep.subr.mxu0 0.0
  %2137 = vmatpush1.msra.mxu0 0.0
  %2138 = vmatprep.subr.mxu0 0.0
  %2139 = vmatpush1.msra.mxu0 0.0
  %2140 = vmatprep.mubr.f32.mxu0 0.0
  %2141 = vmatmul.mubr.f32.gmra.mrb[0].mxu0 %v2074
  %v2142 = vpop.f32.mrb[0].mxu0
  %v2143 = vadd.f32 %v1566, %v2142
  %v2144 = vpop.f32.mrb[0].mxu0
  %v2145 = vadd.f32 %v1567, %v2144
  %2146 = vdwg.mxu0
  %v2147 = vld [vmem:[#allocation2 + $0x18] sm:$0xff]
  %v2148 = vadd.f32 %v2147, %v2143
  %v2149 = vxor.u32 %v2148, 2147483648
  %v2150 = vmul.f32 %v2149, 1.442695
  %v2151 = vpow.pop %v2150
  %v2152 = vadd.f32 %v2151, 1.0
  %v2153 = vrcp.pop %v2152
  %v2154 = vmul.f32 1.0, %v2153
  %2156 = vrot.lane.b32.xlu0 %v2143, 96
  %v2157 = vpop.permute.xlu0 %2156
  %v2159 = vmul.f32 %v2154, %v2157
  %2161 = vrot.lane.b32.xlu0 %v2159, 32
  %v2162 = vpop.permute.xlu0 %2161
  %v2164 = vadd.f32 %v2147, %v2162
  %v2165 = vtanh.pop %v2164
  %v2166 = vsub.f32 1.0, %v2154
  %2168 = vrot.lane.b32.xlu0 %v2165, 112
  %v2169 = vpop.permute.xlu0 %2168
  %v2171 = vmul.f32 %v2166, %v2169
  %v2172 = vmul.f32 %v2154, %v1986
  %v2173 = vadd.f32 %v2171, %v2172
  %vm2174 = vcmp.gt.f32.partialorder %v28, 3.0
  %v2175 = vsel %vm2174, 1, 0
  %2176 = vset.pattern.permute.xlu0 64
  %2177 = vperm.xlu0 %2176, %v2175
  %v2178 = vpop.permute.xlu0 %2177
  %vm2179 = vcmp.eq.s32.totalorder %v2178, 1
  %v2180 = vsel %vm2179, %v2173, 0.0
  %v2181 = vsel %vm2179, %v2173, %v1986
  %v2182 = vadd.f32 %v2145, %v2157
  %v2183 = vxor.u32 %v2182, 2147483648
  %v2184 = vmul.f32 %v2183, 1.442695
  %v2185 = vpow.pop %v2184
  %v2186 = vadd.f32 %v2185, 1.0
  %v2187 = vrcp.pop %v2186
  %v2188 = vmul.f32 1.0, %v2187
  %2189 = vrot.lane.b32.xlu0 %v2143, 64
  %v2190 = vpop.permute.xlu0 %2189
  %v2192 = vmul.f32 %v2188, %v2190
  %2194 = vrot.lane.b32.xlu0 %v2192, 32
  %v2195 = vpop.permute.xlu0 %2194
  %v2197 = vadd.f32 %v2145, %v2195
  %v2198 = vtanh.pop %v2197
  %v2199 = vsub.f32 1.0, %v2188
  %2201 = vrot.lane.b32.xlu0 %v2198, 112
  %v2202 = vpop.permute.xlu0 %2201
  %v2204 = vmul.f32 %v2199, %v2202
  %v2205 = vmul.f32 %v2188, %v2013
  %v2206 = vadd.f32 %v2204, %v2205
  %v2207 = vsel %vm1984, %v2206, 0.0
  %v2208 = vsel %vm1984, %v2206, %v2013
  %2210 = vrot.lane.b32.xlu0 %v2207, 96
  %v2211 = vpop.permute.xlu0 %2210
  %2213 = vst.msk [vmem:[#allocation4 + $0x10] sm:$0xff] %vm31, %v2211
  %v2214 = vld [vmem:[#allocation3 + $0x10] sm:$0xff]
  %v2215 = vmul.f32 %v2214, %v2211
  %2217 = vrot.lane.b32.xlu0 %v2145, 64
  %v2218 = vpop.permute.xlu0 %2217
  %v2220 = vmul.f32 %v2188, %v2218
  %2222 = vrot.lane.b32.xlu0 %v2220, 32
  %v2223 = vpop.permute.xlu0 %2222
  %v2225 = vadd.f32 %v2145, %v2223
  %v2226 = vtanh.pop %v2225
  %2228 = vrot.lane.b32.xlu0 %v2226, 112
  %v2229 = vpop.permute.xlu0 %2228
  %v2231 = vmul.f32 %v2199, %v2229
  %v2232 = vmul.f32 %v2188, %v2042
  %v2233 = vadd.f32 %v2231, %v2232
  %v2234 = vsel %vm1821, %v2233, %v2042
  %v2235 = vsel %vm1821, %v2233, 0.0
  %2237 = vrot.lane.b32.xlu0 %v2235, 48
  %v2238 = vpop.permute.xlu0 %2237
  %2240 = vst.msk [vmem:[#allocation5 + $0x8] sm:$0xff] %vm31, %v2238
  %2242 = vrot.lane.b32.xlu0 %v2181, 112
  %v2243 = vpop.permute.xlu0 %2242
  %2246 = vrot.lane.b32.xlu0 %v2208, 112
  %v2247 = vpop.permute.xlu0 %2246
  %2250 = vrot.lane.b32.xlu0 %v2234, 80
  %v2251 = vpop.permute.xlu0 %2250
  %2254 = vrot.lane.b32.xlu0 %v2180, 32
  %v2255 = vpop.permute.xlu0 %2254
  %2258 = vrot.lane.b32.xlu0 %v2215, 64
  %v2259 = vpop.permute.xlu0 %2258
  %v2261 = vsel %vm31, %v2243, %v2247
  %v2262 = vsel %vm155, %v2261, %v2251
  %v2263 = vsel %vm1347, %v2262, %v2255
  %v2264 = vsel %vm1553, %v2263, %v2259
  %v2266 = vsel %vm1594, %v2264, 0
  %2268 = vmatprep.subr.mxu0 %v1569
  %2269 = vmatpush1.msra.mxu0 %v1568
  %2270 = vmatprep.subr.mxu0 %v1571
  %2271 = vmatpush1.msra.mxu0 %v1570
  %2272 = vmatprep.subr.mxu0 %v1573
  %2273 = vmatpush1.msra.mxu0 %v1572
  %2274 = vmatprep.subr.mxu0 %v1575
  %2275 = vmatpush1.msra.mxu0 %v1574
  %2276 = vmatprep.subr.mxu0 %v1577
  %2277 = vmatpush1.msra.mxu0 %v1576
  %2278 = vmatprep.subr.mxu0 %v1579
  %2279 = vmatpush1.msra.mxu0 %v1578
  %2280 = vmatprep.subr.mxu0 %v1581
  %2281 = vmatpush1.msra.mxu0 %v1580
  %2282 = vmatprep.subr.mxu0 %v1583
  %2283 = vmatpush1.msra.mxu0 %v1582
  %2284 = vmatprep.subr.mxu0 %v1585
  %2285 = vmatpush1.msra.mxu0 %v1584
  %2286 = vmatprep.subr.mxu0 %v1587
  %2287 = vmatpush1.msra.mxu0 %v1586
  %2288 = vmatprep.subr.mxu0 0.0
  %2289 = vmatpush1.msra.mxu0 0.0
  %2290 = vmatprep.subr.mxu0 0.0
  %2291 = vmatpush1.msra.mxu0 0.0
  %2292 = vmatprep.subr.mxu0 0.0
  %2293 = vmatpush1.msra.mxu0 0.0
  %2294 = vmatprep.subr.mxu0 0.0
  %2295 = vmatpush1.msra.mxu0 0.0
  %2296 = vmatprep.subr.mxu0 0.0
  %2297 = vmatpush1.msra.mxu0 0.0
  %2298 = vmatprep.subr.mxu0 0.0
  %2299 = vmatpush1.msra.mxu0 0.0
  %2300 = vmatprep.subr.mxu0 0.0
  %2301 = vmatpush1.msra.mxu0 0.0
  %2302 = vmatprep.subr.mxu0 0.0
  %2303 = vmatpush1.msra.mxu0 0.0
  %2304 = vmatprep.subr.mxu0 0.0
  %2305 = vmatpush1.msra.mxu0 0.0
  %2306 = vmatprep.subr.mxu0 0.0
  %2307 = vmatpush1.msra.mxu0 0.0
  %2308 = vmatprep.subr.mxu0 0.0
  %2309 = vmatpush1.msra.mxu0 0.0
  %2310 = vmatprep.subr.mxu0 0.0
  %2311 = vmatpush1.msra.mxu0 0.0
  %2312 = vmatprep.subr.mxu0 0.0
  %2313 = vmatpush1.msra.mxu0 0.0
  %2314 = vmatprep.subr.mxu0 0.0
  %2315 = vmatpush1.msra.mxu0 0.0
  %2316 = vmatprep.subr.mxu0 0.0
  %2317 = vmatpush1.msra.mxu0 0.0
  %2318 = vmatprep.subr.mxu0 0.0
  %2319 = vmatpush1.msra.mxu0 0.0
  %2320 = vmatprep.subr.mxu0 0.0
  %2321 = vmatpush1.msra.mxu0 0.0
  %2322 = vmatprep.subr.mxu0 0.0
  %2323 = vmatpush1.msra.mxu0 0.0
  %2324 = vmatprep.subr.mxu0 0.0
  %2325 = vmatpush1.msra.mxu0 0.0
  %2326 = vmatprep.subr.mxu0 0.0
  %2327 = vmatpush1.msra.mxu0 0.0
  %2328 = vmatprep.subr.mxu0 0.0
  %2329 = vmatpush1.msra.mxu0 0.0
  %2330 = vmatprep.subr.mxu0 0.0
  %2331 = vmatpush1.msra.mxu0 0.0
  %2332 = vmatprep.mubr.f32.mxu0 0.0
  %2333 = vmatmul.mubr.f32.gmra.mrb[0].mxu0 %v2266
  %v2334 = vpop.f32.mrb[0].mxu0
  %v2335 = vadd.f32 %v1566, %v2334
  %v2336 = vpop.f32.mrb[0].mxu0
  %v2337 = vadd.f32 %v1567, %v2336
  %2338 = vdwg.mxu0
  %v2339 = vld [vmem:[#allocation2 + $0x20] sm:$0xff]
  %v2340 = vadd.f32 %v2339, %v2335
  %v2341 = vxor.u32 %v2340, 2147483648
  %v2342 = vmul.f32 %v2341, 1.442695
  %v2343 = vpow.pop %v2342
  %v2344 = vadd.f32 %v2343, 1.0
  %v2345 = vrcp.pop %v2344
  %v2346 = vmul.f32 1.0, %v2345
  %2348 = vrot.lane.b32.xlu0 %v2335, 96
  %v2349 = vpop.permute.xlu0 %2348
  %v2351 = vmul.f32 %v2346, %v2349
  %2353 = vrot.lane.b32.xlu0 %v2351, 32
  %v2354 = vpop.permute.xlu0 %2353
  %v2356 = vadd.f32 %v2339, %v2354
  %v2357 = vtanh.pop %v2356
  %v2358 = vsub.f32 1.0, %v2346
  %2360 = vrot.lane.b32.xlu0 %v2357, 112
  %v2361 = vpop.permute.xlu0 %2360
  %v2363 = vmul.f32 %v2358, %v2361
  %v2364 = vmul.f32 %v2346, %v2181
  %v2365 = vadd.f32 %v2363, %v2364
  %vm2366 = vcmp.gt.f32.partialorder %v28, 4.0
  %v2367 = vsel %vm2366, 1, 0
  %2368 = vset.pattern.permute.xlu0 64
  %2369 = vperm.xlu0 %2368, %v2367
  %v2370 = vpop.permute.xlu0 %2369
  %vm2371 = vcmp.eq.s32.totalorder %v2370, 1
  %v2372 = vsel %vm2371, %v2365, 0.0
  %v2373 = vsel %vm2371, %v2365, %v2181
  %v2374 = vadd.f32 %v2337, %v2349
  %v2375 = vxor.u32 %v2374, 2147483648
  %v2376 = vmul.f32 %v2375, 1.442695
  %v2377 = vpow.pop %v2376
  %v2378 = vadd.f32 %v2377, 1.0
  %v2379 = vrcp.pop %v2378
  %v2380 = vmul.f32 1.0, %v2379
  %2381 = vrot.lane.b32.xlu0 %v2335, 64
  %v2382 = vpop.permute.xlu0 %2381
  %v2384 = vmul.f32 %v2380, %v2382
  %2386 = vrot.lane.b32.xlu0 %v2384, 32
  %v2387 = vpop.permute.xlu0 %2386
  %v2389 = vadd.f32 %v2337, %v2387
  %v2390 = vtanh.pop %v2389
  %v2391 = vsub.f32 1.0, %v2380
  %2393 = vrot.lane.b32.xlu0 %v2390, 112
  %v2394 = vpop.permute.xlu0 %2393
  %v2396 = vmul.f32 %v2391, %v2394
  %v2397 = vmul.f32 %v2380, %v2208
  %v2398 = vadd.f32 %v2396, %v2397
  %v2399 = vsel %vm2179, %v2398, 0.0
  %v2400 = vsel %vm2179, %v2398, %v2208
  %2402 = vrot.lane.b32.xlu0 %v2399, 96
  %v2403 = vpop.permute.xlu0 %2402
  %2405 = vst.msk [vmem:[#allocation4 + $0x18] sm:$0xff] %vm31, %v2403
  %v2406 = vld [vmem:[#allocation3 + $0x18] sm:$0xff]
  %v2407 = vmul.f32 %v2406, %v2403
  %2409 = vrot.lane.b32.xlu0 %v2337, 64
  %v2410 = vpop.permute.xlu0 %2409
  %v2412 = vmul.f32 %v2380, %v2410
  %2414 = vrot.lane.b32.xlu0 %v2412, 32
  %v2415 = vpop.permute.xlu0 %2414
  %v2417 = vadd.f32 %v2337, %v2415
  %v2418 = vtanh.pop %v2417
  %2420 = vrot.lane.b32.xlu0 %v2418, 112
  %v2421 = vpop.permute.xlu0 %2420
  %v2423 = vmul.f32 %v2391, %v2421
  %v2424 = vmul.f32 %v2380, %v2234
  %v2425 = vadd.f32 %v2423, %v2424
  %v2426 = vsel %vm1984, %v2425, %v2234
  %v2427 = vsel %vm1984, %v2425, 0.0
  %2429 = vrot.lane.b32.xlu0 %v2427, 48
  %v2430 = vpop.permute.xlu0 %2429
  %2432 = vst.msk [vmem:[#allocation5 + $0x10] sm:$0xff] %vm31, %v2430
  %2434 = vrot.lane.b32.xlu0 %v2373, 112
  %v2435 = vpop.permute.xlu0 %2434
  %2438 = vrot.lane.b32.xlu0 %v2400, 112
  %v2439 = vpop.permute.xlu0 %2438
  %2442 = vrot.lane.b32.xlu0 %v2426, 80
  %v2443 = vpop.permute.xlu0 %2442
  %2446 = vrot.lane.b32.xlu0 %v2372, 32
  %v2447 = vpop.permute.xlu0 %2446
  %2450 = vrot.lane.b32.xlu0 %v2407, 64
  %v2451 = vpop.permute.xlu0 %2450
  %v2453 = vsel %vm31, %v2435, %v2439
  %v2454 = vsel %vm155, %v2453, %v2443
  %v2455 = vsel %vm1347, %v2454, %v2447
  %v2456 = vsel %vm1553, %v2455, %v2451
  %v2458 = vsel %vm1594, %v2456, 0
  %2460 = vmatprep.subr.mxu0 %v1569
  %2461 = vmatpush1.msra.mxu0 %v1568
  %2462 = vmatprep.subr.mxu0 %v1571
  %2463 = vmatpush1.msra.mxu0 %v1570
  %2464 = vmatprep.subr.mxu0 %v1573
  %2465 = vmatpush1.msra.mxu0 %v1572
  %2466 = vmatprep.subr.mxu0 %v1575
  %2467 = vmatpush1.msra.mxu0 %v1574
  %2468 = vmatprep.subr.mxu0 %v1577
  %2469 = vmatpush1.msra.mxu0 %v1576
  %2470 = vmatprep.subr.mxu0 %v1579
  %2471 = vmatpush1.msra.mxu0 %v1578
  %2472 = vmatprep.subr.mxu0 %v1581
  %2473 = vmatpush1.msra.mxu0 %v1580
  %2474 = vmatprep.subr.mxu0 %v1583
  %2475 = vmatpush1.msra.mxu0 %v1582
  %2476 = vmatprep.subr.mxu0 %v1585
  %2477 = vmatpush1.msra.mxu0 %v1584
  %2478 = vmatprep.subr.mxu0 %v1587
  %2479 = vmatpush1.msra.mxu0 %v1586
  %2480 = vmatprep.subr.mxu0 0.0
  %2481 = vmatpush1.msra.mxu0 0.0
  %2482 = vmatprep.subr.mxu0 0.0
  %2483 = vmatpush1.msra.mxu0 0.0
  %2484 = vmatprep.subr.mxu0 0.0
  %2485 = vmatpush1.msra.mxu0 0.0
  %2486 = vmatprep.subr.mxu0 0.0
  %2487 = vmatpush1.msra.mxu0 0.0
  %2488 = vmatprep.subr.mxu0 0.0
  %2489 = vmatpush1.msra.mxu0 0.0
  %2490 = vmatprep.subr.mxu0 0.0
  %2491 = vmatpush1.msra.mxu0 0.0
  %2492 = vmatprep.subr.mxu0 0.0
  %2493 = vmatpush1.msra.mxu0 0.0
  %2494 = vmatprep.subr.mxu0 0.0
  %2495 = vmatpush1.msra.mxu0 0.0
  %2496 = vmatprep.subr.mxu0 0.0
  %2497 = vmatpush1.msra.mxu0 0.0
  %2498 = vmatprep.subr.mxu0 0.0
  %2499 = vmatpush1.msra.mxu0 0.0
  %2500 = vmatprep.subr.mxu0 0.0
  %2501 = vmatpush1.msra.mxu0 0.0
  %2502 = vmatprep.subr.mxu0 0.0
  %2503 = vmatpush1.msra.mxu0 0.0
  %2504 = vmatprep.subr.mxu0 0.0
  %2505 = vmatpush1.msra.mxu0 0.0
  %2506 = vmatprep.subr.mxu0 0.0
  %2507 = vmatpush1.msra.mxu0 0.0
  %2508 = vmatprep.subr.mxu0 0.0
  %2509 = vmatpush1.msra.mxu0 0.0
  %2510 = vmatprep.subr.mxu0 0.0
  %2511 = vmatpush1.msra.mxu0 0.0
  %2512 = vmatprep.subr.mxu0 0.0
  %2513 = vmatpush1.msra.mxu0 0.0
  %2514 = vmatprep.subr.mxu0 0.0
  %2515 = vmatpush1.msra.mxu0 0.0
  %2516 = vmatprep.subr.mxu0 0.0
  %2517 = vmatpush1.msra.mxu0 0.0
  %2518 = vmatprep.subr.mxu0 0.0
  %2519 = vmatpush1.msra.mxu0 0.0
  %2520 = vmatprep.subr.mxu0 0.0
  %2521 = vmatpush1.msra.mxu0 0.0
  %2522 = vmatprep.subr.mxu0 0.0
  %2523 = vmatpush1.msra.mxu0 0.0
  %2524 = vmatprep.mubr.f32.mxu0 0.0
  %2525 = vmatmul.mubr.f32.gmra.mrb[0].mxu0 %v2458
  %v2526 = vpop.f32.mrb[0].mxu0
  %v2527 = vadd.f32 %v1566, %v2526
  %v2528 = vpop.f32.mrb[0].mxu0
  %v2529 = vadd.f32 %v1567, %v2528
  %2530 = vdwg.mxu0
  %v2531 = vld [vmem:[#allocation2 + $0x28] sm:$0xff]
  %v2532 = vadd.f32 %v2531, %v2527
  %v2533 = vxor.u32 %v2532, 2147483648
  %v2534 = vmul.f32 %v2533, 1.442695
  %v2535 = vpow.pop %v2534
  %v2536 = vadd.f32 %v2535, 1.0
  %v2537 = vrcp.pop %v2536
  %v2538 = vmul.f32 1.0, %v2537
  %2540 = vrot.lane.b32.xlu0 %v2527, 96
  %v2541 = vpop.permute.xlu0 %2540
  %v2543 = vmul.f32 %v2538, %v2541
  %2545 = vrot.lane.b32.xlu0 %v2543, 32
  %v2546 = vpop.permute.xlu0 %2545
  %v2548 = vadd.f32 %v2531, %v2546
  %v2549 = vtanh.pop %v2548
  %v2550 = vsub.f32 1.0, %v2538
  %2552 = vrot.lane.b32.xlu0 %v2549, 112
  %v2553 = vpop.permute.xlu0 %2552
  %v2555 = vmul.f32 %v2550, %v2553
  %v2556 = vmul.f32 %v2538, %v2373
  %v2557 = vadd.f32 %v2555, %v2556
  %vm2558 = vcmp.gt.f32.partialorder %v28, 5.0
  %v2559 = vsel %vm2558, 1, 0
  %2560 = vset.pattern.permute.xlu0 64
  %2561 = vperm.xlu0 %2560, %v2559
  %v2562 = vpop.permute.xlu0 %2561
  %vm2563 = vcmp.eq.s32.totalorder %v2562, 1
  %v2564 = vsel %vm2563, %v2557, 0.0
  %v2565 = vsel %vm2563, %v2557, %v2373
  %v2566 = vadd.f32 %v2529, %v2541
  %v2567 = vxor.u32 %v2566, 2147483648
  %v2568 = vmul.f32 %v2567, 1.442695
  %v2569 = vpow.pop %v2568
  %v2570 = vadd.f32 %v2569, 1.0
  %v2571 = vrcp.pop %v2570
  %v2572 = vmul.f32 1.0, %v2571
  %2573 = vrot.lane.b32.xlu0 %v2527, 64
  %v2574 = vpop.permute.xlu0 %2573
  %v2576 = vmul.f32 %v2572, %v2574
  %2578 = vrot.lane.b32.xlu0 %v2576, 32
  %v2579 = vpop.permute.xlu0 %2578
  %v2581 = vadd.f32 %v2529, %v2579
  %v2582 = vtanh.pop %v2581
  %v2583 = vsub.f32 1.0, %v2572
  %2585 = vrot.lane.b32.xlu0 %v2582, 112
  %v2586 = vpop.permute.xlu0 %2585
  %v2588 = vmul.f32 %v2583, %v2586
  %v2589 = vmul.f32 %v2572, %v2400
  %v2590 = vadd.f32 %v2588, %v2589
  %v2591 = vsel %vm2371, %v2590, 0.0
  %v2592 = vsel %vm2371, %v2590, %v2400
  %2594 = vrot.lane.b32.xlu0 %v2591, 96
  %v2595 = vpop.permute.xlu0 %2594
  %2597 = vst.msk [vmem:[#allocation4 + $0x20] sm:$0xff] %vm31, %v2595
  %v2598 = vld [vmem:[#allocation3 + $0x20] sm:$0xff]
  %v2599 = vmul.f32 %v2598, %v2595
  %2601 = vrot.lane.b32.xlu0 %v2529, 64
  %v2602 = vpop.permute.xlu0 %2601
  %v2604 = vmul.f32 %v2572, %v2602
  %2606 = vrot.lane.b32.xlu0 %v2604, 32
  %v2607 = vpop.permute.xlu0 %2606
  %v2609 = vadd.f32 %v2529, %v2607
  %v2610 = vtanh.pop %v2609
  %2612 = vrot.lane.b32.xlu0 %v2610, 112
  %v2613 = vpop.permute.xlu0 %2612
  %v2615 = vmul.f32 %v2583, %v2613
  %v2616 = vmul.f32 %v2572, %v2426
  %v2617 = vadd.f32 %v2615, %v2616
  %v2618 = vsel %vm2179, %v2617, %v2426
  %v2619 = vsel %vm2179, %v2617, 0.0
  %2621 = vrot.lane.b32.xlu0 %v2619, 48
  %v2622 = vpop.permute.xlu0 %2621
  %2624 = vst.msk [vmem:[#allocation5 + $0x18] sm:$0xff] %vm31, %v2622
  %2626 = vrot.lane.b32.xlu0 %v2565, 112
  %v2627 = vpop.permute.xlu0 %2626
  %2630 = vrot.lane.b32.xlu0 %v2592, 112
  %v2631 = vpop.permute.xlu0 %2630
  %2634 = vrot.lane.b32.xlu0 %v2618, 80
  %v2635 = vpop.permute.xlu0 %2634
  %2638 = vrot.lane.b32.xlu0 %v2564, 32
  %v2639 = vpop.permute.xlu0 %2638
  %2642 = vrot.lane.b32.xlu0 %v2599, 64
  %v2643 = vpop.permute.xlu0 %2642
  %v2645 = vsel %vm31, %v2627, %v2631
  %v2646 = vsel %vm155, %v2645, %v2635
  %v2647 = vsel %vm1347, %v2646, %v2639
  %v2648 = vsel %vm1553, %v2647, %v2643
  %v2650 = vsel %vm1594, %v2648, 0
  %2652 = vmatprep.subr.mxu0 %v1569
  %2653 = vmatpush1.msra.mxu0 %v1568
  %2654 = vmatprep.subr.mxu0 %v1571
  %2655 = vmatpush1.msra.mxu0 %v1570
  %2656 = vmatprep.subr.mxu0 %v1573
  %2657 = vmatpush1.msra.mxu0 %v1572
  %2658 = vmatprep.subr.mxu0 %v1575
  %2659 = vmatpush1.msra.mxu0 %v1574
  %2660 = vmatprep.subr.mxu0 %v1577
  %2661 = vmatpush1.msra.mxu0 %v1576
  %2662 = vmatprep.subr.mxu0 %v1579
  %2663 = vmatpush1.msra.mxu0 %v1578
  %2664 = vmatprep.subr.mxu0 %v1581
  %2665 = vmatpush1.msra.mxu0 %v1580
  %2666 = vmatprep.subr.mxu0 %v1583
  %2667 = vmatpush1.msra.mxu0 %v1582
  %2668 = vmatprep.subr.mxu0 %v1585
  %2669 = vmatpush1.msra.mxu0 %v1584
  %2670 = vmatprep.subr.mxu0 %v1587
  %2671 = vmatpush1.msra.mxu0 %v1586
  %2672 = vmatprep.subr.mxu0 0.0
  %2673 = vmatpush1.msra.mxu0 0.0
  %2674 = vmatprep.subr.mxu0 0.0
  %2675 = vmatpush1.msra.mxu0 0.0
  %2676 = vmatprep.subr.mxu0 0.0
  %2677 = vmatpush1.msra.mxu0 0.0
  %2678 = vmatprep.subr.mxu0 0.0
  %2679 = vmatpush1.msra.mxu0 0.0
  %2680 = vmatprep.subr.mxu0 0.0
  %2681 = vmatpush1.msra.mxu0 0.0
  %2682 = vmatprep.subr.mxu0 0.0
  %2683 = vmatpush1.msra.mxu0 0.0
  %2684 = vmatprep.subr.mxu0 0.0
  %2685 = vmatpush1.msra.mxu0 0.0
  %2686 = vmatprep.subr.mxu0 0.0
  %2687 = vmatpush1.msra.mxu0 0.0
  %2688 = vmatprep.subr.mxu0 0.0
  %2689 = vmatpush1.msra.mxu0 0.0
  %2690 = vmatprep.subr.mxu0 0.0
  %2691 = vmatpush1.msra.mxu0 0.0
  %2692 = vmatprep.subr.mxu0 0.0
  %2693 = vmatpush1.msra.mxu0 0.0
  %2694 = vmatprep.subr.mxu0 0.0
  %2695 = vmatpush1.msra.mxu0 0.0
  %2696 = vmatprep.subr.mxu0 0.0
  %2697 = vmatpush1.msra.mxu0 0.0
  %2698 = vmatprep.subr.mxu0 0.0
  %2699 = vmatpush1.msra.mxu0 0.0
  %2700 = vmatprep.subr.mxu0 0.0
  %2701 = vmatpush1.msra.mxu0 0.0
  %2702 = vmatprep.subr.mxu0 0.0
  %2703 = vmatpush1.msra.mxu0 0.0
  %2704 = vmatprep.subr.mxu0 0.0
  %2705 = vmatpush1.msra.mxu0 0.0
  %2706 = vmatprep.subr.mxu0 0.0
  %2707 = vmatpush1.msra.mxu0 0.0
  %2708 = vmatprep.subr.mxu0 0.0
  %2709 = vmatpush1.msra.mxu0 0.0
  %2710 = vmatprep.subr.mxu0 0.0
  %2711 = vmatpush1.msra.mxu0 0.0
  %2712 = vmatprep.subr.mxu0 0.0
  %2713 = vmatpush1.msra.mxu0 0.0
  %2714 = vmatprep.subr.mxu0 0.0
  %2715 = vmatpush1.msra.mxu0 0.0
  %2716 = vmatprep.mubr.f32.mxu0 0.0
  %2717 = vmatmul.mubr.f32.gmra.mrb[0].mxu0 %v2650
  %v2718 = vpop.f32.mrb[0].mxu0
  %v2719 = vadd.f32 %v1566, %v2718
  %v2720 = vpop.f32.mrb[0].mxu0
  %v2721 = vadd.f32 %v1567, %v2720
  %2722 = vdwg.mxu0
  %v2723 = vld [vmem:[#allocation2 + $0x30] sm:$0xff]
  %v2724 = vadd.f32 %v2723, %v2719
  %v2725 = vxor.u32 %v2724, 2147483648
  %v2726 = vmul.f32 %v2725, 1.442695
  %v2727 = vpow.pop %v2726
  %v2728 = vadd.f32 %v2727, 1.0
  %v2729 = vrcp.pop %v2728
  %v2730 = vmul.f32 1.0, %v2729
  %2732 = vrot.lane.b32.xlu0 %v2719, 96
  %v2733 = vpop.permute.xlu0 %2732
  %v2735 = vmul.f32 %v2730, %v2733
  %2737 = vrot.lane.b32.xlu0 %v2735, 32
  %v2738 = vpop.permute.xlu0 %2737
  %v2740 = vadd.f32 %v2723, %v2738
  %v2741 = vtanh.pop %v2740
  %v2742 = vsub.f32 1.0, %v2730
  %2744 = vrot.lane.b32.xlu0 %v2741, 112
  %v2745 = vpop.permute.xlu0 %2744
  %v2747 = vmul.f32 %v2742, %v2745
  %v2748 = vmul.f32 %v2730, %v2565
  %v2749 = vadd.f32 %v2747, %v2748
  %vm2750 = vcmp.gt.f32.partialorder %v28, 6.0
  %v2751 = vsel %vm2750, 1, 0
  %2752 = vset.pattern.permute.xlu0 64
  %2753 = vperm.xlu0 %2752, %v2751
  %v2754 = vpop.permute.xlu0 %2753
  %vm2755 = vcmp.eq.s32.totalorder %v2754, 1
  %v2756 = vsel %vm2755, %v2749, 0.0
  %v2757 = vsel %vm2755, %v2749, %v2565
  %v2758 = vadd.f32 %v2721, %v2733
  %v2759 = vxor.u32 %v2758, 2147483648
  %v2760 = vmul.f32 %v2759, 1.442695
  %v2761 = vpow.pop %v2760
  %v2762 = vadd.f32 %v2761, 1.0
  %v2763 = vrcp.pop %v2762
  %v2764 = vmul.f32 1.0, %v2763
  %2765 = vrot.lane.b32.xlu0 %v2719, 64
  %v2766 = vpop.permute.xlu0 %2765
  %v2768 = vmul.f32 %v2764, %v2766
  %2770 = vrot.lane.b32.xlu0 %v2768, 32
  %v2771 = vpop.permute.xlu0 %2770
  %v2773 = vadd.f32 %v2721, %v2771
  %v2774 = vtanh.pop %v2773
  %v2775 = vsub.f32 1.0, %v2764
  %2777 = vrot.lane.b32.xlu0 %v2774, 112
  %v2778 = vpop.permute.xlu0 %2777
  %v2780 = vmul.f32 %v2775, %v2778
  %v2781 = vmul.f32 %v2764, %v2592
  %v2782 = vadd.f32 %v2780, %v2781
  %v2783 = vsel %vm2563, %v2782, 0.0
  %v2784 = vsel %vm2563, %v2782, %v2592
  %2786 = vrot.lane.b32.xlu0 %v2783, 96
  %v2787 = vpop.permute.xlu0 %2786
  %2789 = vst.msk [vmem:[#allocation4 + $0x28] sm:$0xff] %vm31, %v2787
  %v2790 = vld [vmem:[#allocation3 + $0x28] sm:$0xff]
  %v2791 = vmul.f32 %v2790, %v2787
  %2793 = vrot.lane.b32.xlu0 %v2721, 64
  %v2794 = vpop.permute.xlu0 %2793
  %v2796 = vmul.f32 %v2764, %v2794
  %2798 = vrot.lane.b32.xlu0 %v2796, 32
  %v2799 = vpop.permute.xlu0 %2798
  %v2801 = vadd.f32 %v2721, %v2799
  %v2802 = vtanh.pop %v2801
  %2804 = vrot.lane.b32.xlu0 %v2802, 112
  %v2805 = vpop.permute.xlu0 %2804
  %v2807 = vmul.f32 %v2775, %v2805
  %v2808 = vmul.f32 %v2764, %v2618
  %v2809 = vadd.f32 %v2807, %v2808
  %v2810 = vsel %vm2371, %v2809, %v2618
  %v2811 = vsel %vm2371, %v2809, 0.0
  %2813 = vrot.lane.b32.xlu0 %v2811, 48
  %v2814 = vpop.permute.xlu0 %2813
  %2816 = vst.msk [vmem:[#allocation5 + $0x20] sm:$0xff] %vm31, %v2814
  %2818 = vrot.lane.b32.xlu0 %v2757, 112
  %v2819 = vpop.permute.xlu0 %2818
  %2822 = vrot.lane.b32.xlu0 %v2784, 112
  %v2823 = vpop.permute.xlu0 %2822
  %2826 = vrot.lane.b32.xlu0 %v2810, 80
  %v2827 = vpop.permute.xlu0 %2826
  %2830 = vrot.lane.b32.xlu0 %v2756, 32
  %v2831 = vpop.permute.xlu0 %2830
  %2834 = vrot.lane.b32.xlu0 %v2791, 64
  %v2835 = vpop.permute.xlu0 %2834
  %v2837 = vsel %vm31, %v2819, %v2823
  %v2838 = vsel %vm155, %v2837, %v2827
  %v2839 = vsel %vm1347, %v2838, %v2831
  %v2840 = vsel %vm1553, %v2839, %v2835
  %v2842 = vsel %vm1594, %v2840, 0
  %2844 = vmatprep.subr.mxu0 %v1569
  %2845 = vmatpush1.msra.mxu0 %v1568
  %2846 = vmatprep.subr.mxu0 %v1571
  %2847 = vmatpush1.msra.mxu0 %v1570
  %2848 = vmatprep.subr.mxu0 %v1573
  %2849 = vmatpush1.msra.mxu0 %v1572
  %2850 = vmatprep.subr.mxu0 %v1575
  %2851 = vmatpush1.msra.mxu0 %v1574
  %2852 = vmatprep.subr.mxu0 %v1577
  %2853 = vmatpush1.msra.mxu0 %v1576
  %2854 = vmatprep.subr.mxu0 %v1579
  %2855 = vmatpush1.msra.mxu0 %v1578
  %2856 = vmatprep.subr.mxu0 %v1581
  %2857 = vmatpush1.msra.mxu0 %v1580
  %2858 = vmatprep.subr.mxu0 %v1583
  %2859 = vmatpush1.msra.mxu0 %v1582
  %2860 = vmatprep.subr.mxu0 %v1585
  %2861 = vmatpush1.msra.mxu0 %v1584
  %2862 = vmatprep.subr.mxu0 %v1587
  %2863 = vmatpush1.msra.mxu0 %v1586
  %2864 = vmatprep.subr.mxu0 0.0
  %2865 = vmatpush1.msra.mxu0 0.0
  %2866 = vmatprep.subr.mxu0 0.0
  %2867 = vmatpush1.msra.mxu0 0.0
  %2868 = vmatprep.subr.mxu0 0.0
  %2869 = vmatpush1.msra.mxu0 0.0
  %2870 = vmatprep.subr.mxu0 0.0
  %2871 = vmatpush1.msra.mxu0 0.0
  %2872 = vmatprep.subr.mxu0 0.0
  %2873 = vmatpush1.msra.mxu0 0.0
  %2874 = vmatprep.subr.mxu0 0.0
  %2875 = vmatpush1.msra.mxu0 0.0
  %2876 = vmatprep.subr.mxu0 0.0
  %2877 = vmatpush1.msra.mxu0 0.0
  %2878 = vmatprep.subr.mxu0 0.0
  %2879 = vmatpush1.msra.mxu0 0.0
  %2880 = vmatprep.subr.mxu0 0.0
  %2881 = vmatpush1.msra.mxu0 0.0
  %2882 = vmatprep.subr.mxu0 0.0
  %2883 = vmatpush1.msra.mxu0 0.0
  %2884 = vmatprep.subr.mxu0 0.0
  %2885 = vmatpush1.msra.mxu0 0.0
  %2886 = vmatprep.subr.mxu0 0.0
  %2887 = vmatpush1.msra.mxu0 0.0
  %2888 = vmatprep.subr.mxu0 0.0
  %2889 = vmatpush1.msra.mxu0 0.0
  %2890 = vmatprep.subr.mxu0 0.0
  %2891 = vmatpush1.msra.mxu0 0.0
  %2892 = vmatprep.subr.mxu0 0.0
  %2893 = vmatpush1.msra.mxu0 0.0
  %2894 = vmatprep.subr.mxu0 0.0
  %2895 = vmatpush1.msra.mxu0 0.0
  %2896 = vmatprep.subr.mxu0 0.0
  %2897 = vmatpush1.msra.mxu0 0.0
  %2898 = vmatprep.subr.mxu0 0.0
  %2899 = vmatpush1.msra.mxu0 0.0
  %2900 = vmatprep.subr.mxu0 0.0
  %2901 = vmatpush1.msra.mxu0 0.0
  %2902 = vmatprep.subr.mxu0 0.0
  %2903 = vmatpush1.msra.mxu0 0.0
  %2904 = vmatprep.subr.mxu0 0.0
  %2905 = vmatpush1.msra.mxu0 0.0
  %2906 = vmatprep.subr.mxu0 0.0
  %2907 = vmatpush1.msra.mxu0 0.0
  %2908 = vmatprep.mubr.f32.mxu0 0.0
  %2909 = vmatmul.mubr.f32.gmra.mrb[0].mxu0 %v2842
  %v2910 = vpop.f32.mrb[0].mxu0
  %v2911 = vadd.f32 %v1566, %v2910
  %v2912 = vpop.f32.mrb[0].mxu0
  %v2913 = vadd.f32 %v1567, %v2912
  %2914 = vdwg.mxu0
  %v2915 = vld [vmem:[#allocation2 + $0x38] sm:$0xff]
  %v2916 = vadd.f32 %v2915, %v2911
  %v2917 = vxor.u32 %v2916, 2147483648
  %v2918 = vmul.f32 %v2917, 1.442695
  %v2919 = vpow.pop %v2918
  %v2920 = vadd.f32 %v2919, 1.0
  %v2921 = vrcp.pop %v2920
  %v2922 = vmul.f32 1.0, %v2921
  %2924 = vrot.lane.b32.xlu0 %v2911, 96
  %v2925 = vpop.permute.xlu0 %2924
  %v2927 = vmul.f32 %v2922, %v2925
  %2929 = vrot.lane.b32.xlu0 %v2927, 32
  %v2930 = vpop.permute.xlu0 %2929
  %v2932 = vadd.f32 %v2915, %v2930
  %v2933 = vtanh.pop %v2932
  %v2934 = vsub.f32 1.0, %v2922
  %2936 = vrot.lane.b32.xlu0 %v2933, 112
  %v2937 = vpop.permute.xlu0 %2936
  %v2939 = vmul.f32 %v2934, %v2937
  %v2940 = vmul.f32 %v2922, %v2757
  %v2941 = vadd.f32 %v2939, %v2940
  %vm2942 = vcmp.gt.f32.partialorder %v28, 7.0
  %v2943 = vsel %vm2942, 1, 0
  %2944 = vset.pattern.permute.xlu0 64
  %2945 = vperm.xlu0 %2944, %v2943
  %v2946 = vpop.permute.xlu0 %2945
  %vm2947 = vcmp.eq.s32.totalorder %v2946, 1
  %v2948 = vsel %vm2947, %v2941, 0.0
  %v2949 = vsel %vm2947, %v2941, %v2757
  %v2950 = vadd.f32 %v2913, %v2925
  %v2951 = vxor.u32 %v2950, 2147483648
  %v2952 = vmul.f32 %v2951, 1.442695
  %v2953 = vpow.pop %v2952
  %v2954 = vadd.f32 %v2953, 1.0
  %v2955 = vrcp.pop %v2954
  %v2956 = vmul.f32 1.0, %v2955
  %2957 = vrot.lane.b32.xlu0 %v2911, 64
  %v2958 = vpop.permute.xlu0 %2957
  %v2960 = vmul.f32 %v2956, %v2958
  %2962 = vrot.lane.b32.xlu0 %v2960, 32
  %v2963 = vpop.permute.xlu0 %2962
  %v2965 = vadd.f32 %v2913, %v2963
  %v2966 = vtanh.pop %v2965
  %v2967 = vsub.f32 1.0, %v2956
  %2969 = vrot.lane.b32.xlu0 %v2966, 112
  %v2970 = vpop.permute.xlu0 %2969
  %v2972 = vmul.f32 %v2967, %v2970
  %v2973 = vmul.f32 %v2956, %v2784
  %v2974 = vadd.f32 %v2972, %v2973
  %v2975 = vsel %vm2755, %v2974, 0.0
  %v2976 = vsel %vm2755, %v2974, %v2784
  %2978 = vrot.lane.b32.xlu0 %v2975, 96
  %v2979 = vpop.permute.xlu0 %2978
  %2981 = vst.msk [vmem:[#allocation4 + $0x30] sm:$0xff] %vm31, %v2979
  %v2982 = vld [vmem:[#allocation3 + $0x30] sm:$0xff]
  %v2983 = vmul.f32 %v2982, %v2979
  %2985 = vrot.lane.b32.xlu0 %v2913, 64
  %v2986 = vpop.permute.xlu0 %2985
  %v2988 = vmul.f32 %v2956, %v2986
  %2990 = vrot.lane.b32.xlu0 %v2988, 32
  %v2991 = vpop.permute.xlu0 %2990
  %v2993 = vadd.f32 %v2913, %v2991
  %v2994 = vtanh.pop %v2993
  %2996 = vrot.lane.b32.xlu0 %v2994, 112
  %v2997 = vpop.permute.xlu0 %2996
  %v2999 = vmul.f32 %v2967, %v2997
  %v3000 = vmul.f32 %v2956, %v2810
  %v3001 = vadd.f32 %v2999, %v3000
  %v3002 = vsel %vm2563, %v3001, %v2810
  %v3003 = vsel %vm2563, %v3001, 0.0
  %3005 = vrot.lane.b32.xlu0 %v3003, 48
  %v3006 = vpop.permute.xlu0 %3005
  %3008 = vst.msk [vmem:[#allocation5 + $0x28] sm:$0xff] %vm31, %v3006
  %3010 = vrot.lane.b32.xlu0 %v2949, 112
  %v3011 = vpop.permute.xlu0 %3010
  %3014 = vrot.lane.b32.xlu0 %v2976, 112
  %v3015 = vpop.permute.xlu0 %3014
  %3018 = vrot.lane.b32.xlu0 %v3002, 80
  %v3019 = vpop.permute.xlu0 %3018
  %3022 = vrot.lane.b32.xlu0 %v2948, 32
  %v3023 = vpop.permute.xlu0 %3022
  %3026 = vrot.lane.b32.xlu0 %v2983, 64
  %v3027 = vpop.permute.xlu0 %3026
  %v3029 = vsel %vm31, %v3011, %v3015
  %v3030 = vsel %vm155, %v3029, %v3019
  %v3031 = vsel %vm1347, %v3030, %v3023
  %v3032 = vsel %vm1553, %v3031, %v3027
  %v3034 = vsel %vm1594, %v3032, 0
  %3036 = vmatprep.subr.mxu0 %v1569
  %3037 = vmatpush1.msra.mxu0 %v1568
  %3038 = vmatprep.subr.mxu0 %v1571
  %3039 = vmatpush1.msra.mxu0 %v1570
  %3040 = vmatprep.subr.mxu0 %v1573
  %3041 = vmatpush1.msra.mxu0 %v1572
  %3042 = vmatprep.subr.mxu0 %v1575
  %3043 = vmatpush1.msra.mxu0 %v1574
  %3044 = vmatprep.subr.mxu0 %v1577
  %3045 = vmatpush1.msra.mxu0 %v1576
  %3046 = vmatprep.subr.mxu0 %v1579
  %3047 = vmatpush1.msra.mxu0 %v1578
  %3048 = vmatprep.subr.mxu0 %v1581
  %3049 = vmatpush1.msra.mxu0 %v1580
  %3050 = vmatprep.subr.mxu0 %v1583
  %3051 = vmatpush1.msra.mxu0 %v1582
  %3052 = vmatprep.subr.mxu0 %v1585
  %3053 = vmatpush1.msra.mxu0 %v1584
  %3054 = vmatprep.subr.mxu0 %v1587
  %3055 = vmatpush1.msra.mxu0 %v1586
  %3056 = vmatprep.subr.mxu0 0.0
  %3057 = vmatpush1.msra.mxu0 0.0
  %3058 = vmatprep.subr.mxu0 0.0
  %3059 = vmatpush1.msra.mxu0 0.0
  %3060 = vmatprep.subr.mxu0 0.0
  %3061 = vmatpush1.msra.mxu0 0.0
  %3062 = vmatprep.subr.mxu0 0.0
  %3063 = vmatpush1.msra.mxu0 0.0
  %3064 = vmatprep.subr.mxu0 0.0
  %3065 = vmatpush1.msra.mxu0 0.0
  %3066 = vmatprep.subr.mxu0 0.0
  %3067 = vmatpush1.msra.mxu0 0.0
  %3068 = vmatprep.subr.mxu0 0.0
  %3069 = vmatpush1.msra.mxu0 0.0
  %3070 = vmatprep.subr.mxu0 0.0
  %3071 = vmatpush1.msra.mxu0 0.0
  %3072 = vmatprep.subr.mxu0 0.0
  %3073 = vmatpush1.msra.mxu0 0.0
  %3074 = vmatprep.subr.mxu0 0.0
  %3075 = vmatpush1.msra.mxu0 0.0
  %3076 = vmatprep.subr.mxu0 0.0
  %3077 = vmatpush1.msra.mxu0 0.0
  %3078 = vmatprep.subr.mxu0 0.0
  %3079 = vmatpush1.msra.mxu0 0.0
  %3080 = vmatprep.subr.mxu0 0.0
  %3081 = vmatpush1.msra.mxu0 0.0
  %3082 = vmatprep.subr.mxu0 0.0
  %3083 = vmatpush1.msra.mxu0 0.0
  %3084 = vmatprep.subr.mxu0 0.0
  %3085 = vmatpush1.msra.mxu0 0.0
  %3086 = vmatprep.subr.mxu0 0.0
  %3087 = vmatpush1.msra.mxu0 0.0
  %3088 = vmatprep.subr.mxu0 0.0
  %3089 = vmatpush1.msra.mxu0 0.0
  %3090 = vmatprep.subr.mxu0 0.0
  %3091 = vmatpush1.msra.mxu0 0.0
  %3092 = vmatprep.subr.mxu0 0.0
  %3093 = vmatpush1.msra.mxu0 0.0
  %3094 = vmatprep.subr.mxu0 0.0
  %3095 = vmatpush1.msra.mxu0 0.0
  %3096 = vmatprep.subr.mxu0 0.0
  %3097 = vmatpush1.msra.mxu0 0.0
  %3098 = vmatprep.subr.mxu0 0.0
  %3099 = vmatpush1.msra.mxu0 0.0
  %3100 = vmatprep.mubr.f32.mxu0 0.0
  %3101 = vmatmul.mubr.f32.gmra.mrb[0].mxu0 %v3034
  %v3102 = vpop.f32.mrb[0].mxu0
  %v3103 = vadd.f32 %v1566, %v3102
  %v3104 = vpop.f32.mrb[0].mxu0
  %v3105 = vadd.f32 %v1567, %v3104
  %3106 = vdwg.mxu0
  %3108 = vrot.lane.b32.xlu0 %v3103, 96
  %v3109 = vpop.permute.xlu0 %3108
  %v3111 = vadd.f32 %v3105, %v3109
  %v3112 = vxor.u32 %v3111, 2147483648
  %v3113 = vmul.f32 %v3112, 1.442695
  %v3114 = vpow.pop %v3113
  %v3115 = vadd.f32 %v3114, 1.0
  %v3116 = vrcp.pop %v3115
  %v3117 = vmul.f32 1.0, %v3116
  %3118 = vrot.lane.b32.xlu0 %v3103, 64
  %v3119 = vpop.permute.xlu0 %3118
  %v3121 = vmul.f32 %v3117, %v3119
  %3123 = vrot.lane.b32.xlu0 %v3121, 32
  %v3124 = vpop.permute.xlu0 %3123
  %v3126 = vadd.f32 %v3105, %v3124
  %v3127 = vtanh.pop %v3126
  %v3128 = vsub.f32 1.0, %v3117
  %3130 = vrot.lane.b32.xlu0 %v3127, 112
  %v3131 = vpop.permute.xlu0 %3130
  %v3133 = vmul.f32 %v3128, %v3131
  %v3134 = vmul.f32 %v3117, %v2976
  %v3135 = vadd.f32 %v3133, %v3134
  %v3136 = vsel %vm2947, %v3135, 0.0
  %v3137 = vsel %vm2947, %v3135, %v2976
  %3139 = vrot.lane.b32.xlu0 %v3136, 96
  %v3140 = vpop.permute.xlu0 %3139
  %3142 = vst.msk [vmem:[#allocation4 + $0x38] sm:$0xff] %vm31, %v3140
  %v3143 = vld [vmem:[#allocation3 + $0x38] sm:$0xff]
  %v3144 = vmul.f32 %v3143, %v3140
  %3146 = vrot.lane.b32.xlu0 %v3105, 64
  %v3147 = vpop.permute.xlu0 %3146
  %v3149 = vmul.f32 %v3117, %v3147
  %3151 = vrot.lane.b32.xlu0 %v3149, 32
  %v3152 = vpop.permute.xlu0 %3151
  %v3154 = vadd.f32 %v3105, %v3152
  %v3155 = vtanh.pop %v3154
  %3157 = vrot.lane.b32.xlu0 %v3155, 112
  %v3158 = vpop.permute.xlu0 %3157
  %v3160 = vmul.f32 %v3128, %v3158
  %v3161 = vmul.f32 %v3117, %v3002
  %v3162 = vadd.f32 %v3160, %v3161
  %v3163 = vsel %vm2755, %v3162, %v3002
  %v3164 = vsel %vm2755, %v3162, 0.0
  %3166 = vrot.lane.b32.xlu0 %v3164, 48
  %v3167 = vpop.permute.xlu0 %3166
  %3169 = vst.msk [vmem:[#allocation5 + $0x30] sm:$0xff] %vm31, %v3167
  %3171 = vrot.lane.b32.xlu0 %v3137, 112
  %v3172 = vpop.permute.xlu0 %3171
  %3175 = vrot.lane.b32.xlu0 %v3163, 80
  %v3176 = vpop.permute.xlu0 %3175
  %3179 = vrot.lane.b32.xlu0 %v3144, 64
  %v3180 = vpop.permute.xlu0 %3179
  %v3182 = vsel %vm31, %v3011, %v3172
  %v3183 = vsel %vm155, %v3182, %v3176
  %v3184 = vsel %vm1347, %v3183, %v3023
  %v3185 = vsel %vm1553, %v3184, %v3180
  %v3187 = vsel %vm1594, %v3185, 0
  %3189 = vmatprep.subr.mxu0 %v1569
  %3190 = vmatpush1.msra.mxu0 %v1568
  %3191 = vmatprep.subr.mxu0 %v1571
  %3192 = vmatpush1.msra.mxu0 %v1570
  %3193 = vmatprep.subr.mxu0 %v1573
  %3194 = vmatpush1.msra.mxu0 %v1572
  %3195 = vmatprep.subr.mxu0 %v1575
  %3196 = vmatpush1.msra.mxu0 %v1574
  %3197 = vmatprep.subr.mxu0 %v1577
  %3198 = vmatpush1.msra.mxu0 %v1576
  %3199 = vmatprep.subr.mxu0 %v1579
  %3200 = vmatpush1.msra.mxu0 %v1578
  %3201 = vmatprep.subr.mxu0 %v1581
  %3202 = vmatpush1.msra.mxu0 %v1580
  %3203 = vmatprep.subr.mxu0 %v1583
  %3204 = vmatpush1.msra.mxu0 %v1582
  %3205 = vmatprep.subr.mxu0 %v1585
  %3206 = vmatpush1.msra.mxu0 %v1584
  %3207 = vmatprep.subr.mxu0 %v1587
  %3208 = vmatpush1.msra.mxu0 %v1586
  %3209 = vmatprep.subr.mxu0 0.0
  %3210 = vmatpush1.msra.mxu0 0.0
  %3211 = vmatprep.subr.mxu0 0.0
  %3212 = vmatpush1.msra.mxu0 0.0
  %3213 = vmatprep.subr.mxu0 0.0
  %3214 = vmatpush1.msra.mxu0 0.0
  %3215 = vmatprep.subr.mxu0 0.0
  %3216 = vmatpush1.msra.mxu0 0.0
  %3217 = vmatprep.subr.mxu0 0.0
  %3218 = vmatpush1.msra.mxu0 0.0
  %3219 = vmatprep.subr.mxu0 0.0
  %3220 = vmatpush1.msra.mxu0 0.0
  %3221 = vmatprep.subr.mxu0 0.0
  %3222 = vmatpush1.msra.mxu0 0.0
  %3223 = vmatprep.subr.mxu0 0.0
  %3224 = vmatpush1.msra.mxu0 0.0
  %3225 = vmatprep.subr.mxu0 0.0
  %3226 = vmatpush1.msra.mxu0 0.0
  %3227 = vmatprep.subr.mxu0 0.0
  %3228 = vmatpush1.msra.mxu0 0.0
  %3229 = vmatprep.subr.mxu0 0.0
  %3230 = vmatpush1.msra.mxu0 0.0
  %3231 = vmatprep.subr.mxu0 0.0
  %3232 = vmatpush1.msra.mxu0 0.0
  %3233 = vmatprep.subr.mxu0 0.0
  %3234 = vmatpush1.msra.mxu0 0.0
  %3235 = vmatprep.subr.mxu0 0.0
  %3236 = vmatpush1.msra.mxu0 0.0
  %3237 = vmatprep.subr.mxu0 0.0
  %3238 = vmatpush1.msra.mxu0 0.0
  %3239 = vmatprep.subr.mxu0 0.0
  %3240 = vmatpush1.msra.mxu0 0.0
  %3241 = vmatprep.subr.mxu0 0.0
  %3242 = vmatpush1.msra.mxu0 0.0
  %3243 = vmatprep.subr.mxu0 0.0
  %3244 = vmatpush1.msra.mxu0 0.0
  %3245 = vmatprep.subr.mxu0 0.0
  %3246 = vmatpush1.msra.mxu0 0.0
  %3247 = vmatprep.subr.mxu0 0.0
  %3248 = vmatpush1.msra.mxu0 0.0
  %3249 = vmatprep.subr.mxu0 0.0
  %3250 = vmatpush1.msra.mxu0 0.0
  %3251 = vmatprep.subr.mxu0 0.0
  %3252 = vmatpush1.msra.mxu0 0.0
  %3253 = vmatprep.mubr.f32.mxu0 0.0
  %3254 = vmatmul.mubr.f32.gmra.mrb[0].mxu0 %v3187
  %v3255 = vpop.f32.mrb[0].mxu0
  %v3256 = vadd.f32 %v1566, %v3255
  %v3257 = vpop.f32.mrb[0].mxu0
  %v3258 = vadd.f32 %v1567, %v3257
  %3259 = vdwg.mxu0
  %3261 = vrot.lane.b32.xlu0 %v3256, 96
  %v3262 = vpop.permute.xlu0 %3261
  %v3264 = vadd.f32 %v3258, %v3262
  %v3265 = vxor.u32 %v3264, 2147483648
  %v3266 = vmul.f32 %v3265, 1.442695
  %v3267 = vpow.pop %v3266
  %v3268 = vadd.f32 %v3267, 1.0
  %v3269 = vrcp.pop %v3268
  %v3270 = vmul.f32 1.0, %v3269
  %3272 = vrot.lane.b32.xlu0 %v3258, 64
  %v3273 = vpop.permute.xlu0 %3272
  %v3275 = vmul.f32 %v3270, %v3273
  %3277 = vrot.lane.b32.xlu0 %v3275, 32
  %v3278 = vpop.permute.xlu0 %3277
  %v3280 = vadd.f32 %v3258, %v3278
  %v3281 = vtanh.pop %v3280
  %v3282 = vsub.f32 1.0, %v3270
  %3284 = vrot.lane.b32.xlu0 %v3281, 112
  %v3285 = vpop.permute.xlu0 %3284
  %v3287 = vmul.f32 %v3282, %v3285
  %v3288 = vmul.f32 %v3270, %v3163
  %v3289 = vadd.f32 %v3287, %v3288
  %v3290 = vsel %vm2947, %v3289, 0.0
  %3292 = vrot.lane.b32.xlu0 %v3290, 48
  %v3293 = vpop.permute.xlu0 %3292
  %3295 = vst.msk [vmem:[#allocation5 + $0x38] sm:$0xff] %vm31, %v3293
  %v3296 = vld [vmem:[#allocation4] sm:$0xff]
  %v3297 = vld [vmem:[#allocation4 + $0x8] sm:$0xff]
  %v3298 = vld [vmem:[#allocation4 + $0x10] sm:$0xff]
  %v3299 = vld [vmem:[#allocation4 + $0x18] sm:$0xff]
  %v3300 = vld [vmem:[#allocation4 + $0x20] sm:$0xff]
  %v3301 = vld [vmem:[#allocation4 + $0x28] sm:$0xff]
  %v3302 = vld [vmem:[#allocation4 + $0x30] sm:$0xff]
  %v3303 = vld [vmem:[#allocation4 + $0x38] sm:$0xff]
  %v3304 = vld [vmem:[#allocation5] sm:$0xff]
  %v3305 = vld [vmem:[#allocation5 + $0x8] sm:$0xff]
  %v3306 = vld [vmem:[#allocation5 + $0x10] sm:$0xff]
  %v3307 = vld [vmem:[#allocation5 + $0x18] sm:$0xff]
  %v3308 = vld [vmem:[#allocation5 + $0x20] sm:$0xff]
  %v3309 = vld [vmem:[#allocation5 + $0x28] sm:$0xff]
  %v3310 = vld [vmem:[#allocation5 + $0x30] sm:$0xff]
  %v3311 = vld [vmem:[#allocation5 + $0x38] sm:$0xff]
  %3320 = vrot.lane.b32.xlu0 %v3304, 16
  %v3321 = vpop.permute.xlu0 %3320
  %3322 = vrot.lane.b32.xlu0 %v3305, 16
  %v3323 = vpop.permute.xlu0 %3322
  %3324 = vrot.lane.b32.xlu0 %v3306, 16
  %v3325 = vpop.permute.xlu0 %3324
  %3326 = vrot.lane.b32.xlu0 %v3307, 16
  %v3327 = vpop.permute.xlu0 %3326
  %3328 = vrot.lane.b32.xlu0 %v3308, 16
  %v3329 = vpop.permute.xlu0 %3328
  %3330 = vrot.lane.b32.xlu0 %v3309, 16
  %v3331 = vpop.permute.xlu0 %3330
  %3332 = vrot.lane.b32.xlu0 %v3310, 16
  %v3333 = vpop.permute.xlu0 %3332
  %3334 = vrot.lane.b32.xlu0 %v3311, 16
  %v3335 = vpop.permute.xlu0 %3334
  %v3344 = vsel %vm31, %v3296, %v3321
  %v3345 = vsel %vm31, %v3297, %v3323
  %v3346 = vsel %vm31, %v3298, %v3325
  %v3347 = vsel %vm31, %v3299, %v3327
  %v3348 = vsel %vm31, %v3300, %v3329
  %v3349 = vsel %vm31, %v3301, %v3331
  %v3350 = vsel %vm31, %v3302, %v3333
  %v3351 = vsel %vm31, %v3303, %v3335
  %v3352 = vld [vmem:[%s6 + $0x10] sm:$0xff]
  %v3353 = vld [vmem:[%s6 + $0x18] sm:$0xff]
  %v3354 = vld [vmem:[%s6 + $0x20] sm:$0xff]
  %v3355 = vld [vmem:[%s6 + $0x28] sm:$0xff]
  %v3356 = vld [vmem:[%s6 + $0x30] sm:$0x1]
  %v3357 = vlaneseq
  %v3358 = vshrl.u32 %v3357, 7
  %v3359 = vsub.s32 0, %v3358
  %v3360 = vrot.slane %v3356, %v3359
  %3365 = vrot.lane.b32.xlu0 %v3352, 75
  %v3366 = vpop.permute.xlu0 %3365
  %3367 = vrot.lane.b32.xlu0 %v3353, 75
  %v3368 = vpop.permute.xlu0 %3367
  %3369 = vrot.lane.b32.xlu0 %v3354, 75
  %v3370 = vpop.permute.xlu0 %3369
  %3371 = vrot.lane.b32.xlu0 %v3355, 75
  %v3372 = vpop.permute.xlu0 %3371
  %3378 = vrot.lane.b32.xlu0 %v3360, 75
  %v3379 = vpop.permute.xlu0 %3378
  %v3382 = vsel %vm155, %v3344, 0
  %v3385 = vsel %vm155, %v3345, 0
  %v3388 = vsel %vm155, %v3346, 0
  %v3391 = vsel %vm155, %v3347, 0
  %v3394 = vsel %vm155, %v3348, 0
  %v3397 = vsel %vm155, %v3349, 0
  %v3400 = vsel %vm155, %v3350, 0
  %v3403 = vsel %vm155, %v3351, 0
  %3405 = vmatprep.subr.mxu0 0.0
  %3406 = vmatpush1.msra.mxu0 %v3366
  %3407 = vmatprep.subr.mxu0 0.0
  %3408 = vmatpush1.msra.mxu0 %v3368
  %3409 = vmatprep.subr.mxu0 0.0
  %3410 = vmatpush1.msra.mxu0 %v3370
  %3411 = vmatprep.subr.mxu0 0.0
  %3412 = vmatpush1.msra.mxu0 %v3372
  %3413 = vmatprep.subr.mxu0 0.0
  %3414 = vmatpush1.msra.mxu0 0.0
  %3415 = vmatprep.subr.mxu0 0.0
  %3416 = vmatpush1.msra.mxu0 0.0
  %3417 = vmatprep.subr.mxu0 0.0
  %3418 = vmatpush1.msra.mxu0 0.0
  %3419 = vmatprep.subr.mxu0 0.0
  %3420 = vmatpush1.msra.mxu0 0.0
  %3421 = vmatprep.subr.mxu0 0.0
  %3422 = vmatpush1.msra.mxu0 0.0
  %3423 = vmatprep.subr.mxu0 0.0
  %3424 = vmatpush1.msra.mxu0 0.0
  %3425 = vmatprep.subr.mxu0 0.0
  %3426 = vmatpush1.msra.mxu0 0.0
  %3427 = vmatprep.subr.mxu0 0.0
  %3428 = vmatpush1.msra.mxu0 0.0
  %3429 = vmatprep.subr.mxu0 0.0
  %3430 = vmatpush1.msra.mxu0 0.0
  %3431 = vmatprep.subr.mxu0 0.0
  %3432 = vmatpush1.msra.mxu0 0.0
  %3433 = vmatprep.subr.mxu0 0.0
  %3434 = vmatpush1.msra.mxu0 0.0
  %3435 = vmatprep.subr.mxu0 0.0
  %3436 = vmatpush1.msra.mxu0 0.0
  %3437 = vmatprep.subr.mxu0 0.0
  %3438 = vmatpush1.msra.mxu0 0.0
  %3439 = vmatprep.subr.mxu0 0.0
  %3440 = vmatpush1.msra.mxu0 0.0
  %3441 = vmatprep.subr.mxu0 0.0
  %3442 = vmatpush1.msra.mxu0 0.0
  %3443 = vmatprep.subr.mxu0 0.0
  %3444 = vmatpush1.msra.mxu0 0.0
  %3445 = vmatprep.subr.mxu0 0.0
  %3446 = vmatpush1.msra.mxu0 0.0
  %3447 = vmatprep.subr.mxu0 0.0
  %3448 = vmatpush1.msra.mxu0 0.0
  %3449 = vmatprep.subr.mxu0 0.0
  %3450 = vmatpush1.msra.mxu0 0.0
  %3451 = vmatprep.subr.mxu0 0.0
  %3452 = vmatpush1.msra.mxu0 0.0
  %3453 = vmatprep.subr.mxu0 0.0
  %3454 = vmatpush1.msra.mxu0 0.0
  %3455 = vmatprep.subr.mxu0 0.0
  %3456 = vmatpush1.msra.mxu0 0.0
  %3457 = vmatprep.subr.mxu0 0.0
  %3458 = vmatpush1.msra.mxu0 0.0
  %3459 = vmatprep.subr.mxu0 0.0
  %3460 = vmatpush1.msra.mxu0 0.0
  %3461 = vmatprep.subr.mxu0 0.0
  %3462 = vmatpush1.msra.mxu0 0.0
  %3463 = vmatprep.subr.mxu0 0.0
  %3464 = vmatpush1.msra.mxu0 0.0
  %3465 = vmatprep.subr.mxu0 0.0
  %3466 = vmatpush1.msra.mxu0 0.0
  %3467 = vmatprep.subr.mxu0 0.0
  %3468 = vmatpush1.msra.mxu0 0.0
  %3469 = vmatprep.mubr.f32.mxu0 0.0
  %3470 = vmatmul.mubr.f32.gmra.mrb[0].mxu0 %v3382
  %v3471 = vpop.f32.mrb[0].mxu0
  %v3472 = vadd.f32 %v3379, %v3471
  %v3473 = vpop.f32.mrb[0].mxu0
  %3474 = vmatprep.mubr.f32.mxu0 0.0
  %3475 = vmatmul.mubr.f32.gmra.mrb[0].mxu0 %v3385
  %v3476 = vpop.f32.mrb[0].mxu0
  %v3477 = vadd.f32 %v3379, %v3476
  %v3478 = vpop.f32.mrb[0].mxu0
  %3479 = vmatprep.mubr.f32.mxu0 0.0
  %3480 = vmatmul.mubr.f32.gmra.mrb[0].mxu0 %v3388
  %v3481 = vpop.f32.mrb[0].mxu0
  %v3482 = vadd.f32 %v3379, %v3481
  %v3483 = vpop.f32.mrb[0].mxu0
  %3484 = vmatprep.mubr.f32.mxu0 0.0
  %3485 = vmatmul.mubr.f32.gmra.mrb[0].mxu0 %v3391
  %v3486 = vpop.f32.mrb[0].mxu0
  %v3487 = vadd.f32 %v3379, %v3486
  %v3488 = vpop.f32.mrb[0].mxu0
  %3489 = vmatprep.mubr.f32.mxu0 0.0
  %3490 = vmatmul.mubr.f32.gmra.mrb[0].mxu0 %v3394
  %v3491 = vpop.f32.mrb[0].mxu0
  %v3492 = vadd.f32 %v3379, %v3491
  %v3493 = vpop.f32.mrb[0].mxu0
  %3494 = vmatprep.mubr.f32.mxu0 0.0
  %3495 = vmatmul.mubr.f32.gmra.mrb[0].mxu0 %v3397
  %v3496 = vpop.f32.mrb[0].mxu0
  %v3497 = vadd.f32 %v3379, %v3496
  %v3498 = vpop.f32.mrb[0].mxu0
  %3499 = vmatprep.mubr.f32.mxu0 0.0
  %3500 = vmatmul.mubr.f32.gmra.mrb[0].mxu0 %v3400
  %v3501 = vpop.f32.mrb[0].mxu0
  %v3502 = vadd.f32 %v3379, %v3501
  %v3503 = vpop.f32.mrb[0].mxu0
  %3504 = vmatprep.mubr.f32.mxu0 0.0
  %3505 = vmatmul.mubr.f32.gmra.mrb[0].mxu0 %v3403
  %v3506 = vpop.f32.mrb[0].mxu0
  %v3507 = vadd.f32 %v3379, %v3506
  %v3508 = vpop.f32.mrb[0].mxu0
  %3509 = vdwg.mxu0
  %v3510 = vxor.u32 %v3472, 2147483648
  %v3511 = vxor.u32 %v3477, 2147483648
  %v3512 = vxor.u32 %v3482, 2147483648
  %v3513 = vxor.u32 %v3487, 2147483648
  %v3514 = vxor.u32 %v3492, 2147483648
  %v3515 = vxor.u32 %v3497, 2147483648
  %v3516 = vxor.u32 %v3502, 2147483648
  %v3517 = vxor.u32 %v3507, 2147483648
  %v3518 = vmul.f32 %v3510, 1.442695
  %v3519 = vpow.pop %v3518
  %v3520 = vmul.f32 %v3511, 1.442695
  %v3521 = vpow.pop %v3520
  %v3522 = vmul.f32 %v3512, 1.442695
  %v3523 = vpow.pop %v3522
  %v3524 = vmul.f32 %v3513, 1.442695
  %v3525 = vpow.pop %v3524
  %v3526 = vmul.f32 %v3514, 1.442695
  %v3527 = vpow.pop %v3526
  %v3528 = vmul.f32 %v3515, 1.442695
  %v3529 = vpow.pop %v3528
  %v3530 = vmul.f32 %v3516, 1.442695
  %v3531 = vpow.pop %v3530
  %v3532 = vmul.f32 %v3517, 1.442695
  %v3533 = vpow.pop %v3532
  %v3534 = vadd.f32 %v3519, 1.0
  %v3535 = vadd.f32 %v3521, 1.0
  %v3536 = vadd.f32 %v3523, 1.0
  %v3537 = vadd.f32 %v3525, 1.0
  %v3538 = vadd.f32 %v3527, 1.0
  %v3539 = vadd.f32 %v3529, 1.0
  %v3540 = vadd.f32 %v3531, 1.0
  %v3541 = vadd.f32 %v3533, 1.0
  %v3542 = vrcp.pop %v3534
  %v3543 = vmul.f32 1.0, %v3542
  %v3544 = vrcp.pop %v3535
  %v3545 = vmul.f32 1.0, %v3544
  %v3546 = vrcp.pop %v3536
  %v3547 = vmul.f32 1.0, %v3546
  %v3548 = vrcp.pop %v3537
  %v3549 = vmul.f32 1.0, %v3548
  %v3550 = vrcp.pop %v3538
  %v3551 = vmul.f32 1.0, %v3550
  %v3552 = vrcp.pop %v3539
  %v3553 = vmul.f32 1.0, %v3552
  %v3554 = vrcp.pop %v3540
  %v3555 = vmul.f32 1.0, %v3554
  %v3556 = vrcp.pop %v3541
  %v3557 = vmul.f32 1.0, %v3556
  %vm3558 = vcmp.ge.s32.totalorder %v112, 5
  %vm3559 = vcmp.lt.s32.totalorder %v112, 8
  %vm3560 = vmand %vm3558, %vm3559
  %v3561 = vsel %vm3560, %v3472, -inf
  %v3562 = vsel %vm3560, %v3477, -inf
  %v3563 = vsel %vm3560, %v3482, -inf
  %v3564 = vsel %vm3560, %v3487, -inf
  %v3565 = vsel %vm3560, %v3492, -inf
  %v3566 = vsel %vm3560, %v3497, -inf
  %v3567 = vsel %vm3560, %v3502, -inf
  %v3568 = vsel %vm3560, %v3507, -inf
  %vm3569 = vcmask 80896
  %v3570 = vsel %vm3569, %v3561, -inf
  %3571 = vmax.xlane.f32.xlu0 %v3570
  %v3572 = vpop.xlane.xlu0 %3571
  %v3573 = vsel %vm3569, %v3562, -inf
  %3574 = vmax.xlane.f32.xlu0 %v3573
  %v3575 = vpop.xlane.xlu0 %3574
  %v3576 = vsel %vm3569, %v3563, -inf
  %3577 = vmax.xlane.f32.xlu0 %v3576
  %v3578 = vpop.xlane.xlu0 %3577
  %v3579 = vsel %vm3569, %v3564, -inf
  %3580 = vmax.xlane.f32.xlu0 %v3579
  %v3581 = vpop.xlane.xlu0 %3580
  %v3582 = vsel %vm3569, %v3565, -inf
  %3583 = vmax.xlane.f32.xlu0 %v3582
  %v3584 = vpop.xlane.xlu0 %3583
  %v3585 = vsel %vm3569, %v3566, -inf
  %3586 = vmax.xlane.f32.xlu0 %v3585
  %v3587 = vpop.xlane.xlu0 %3586
  %v3588 = vsel %vm3569, %v3567, -inf
  %3589 = vmax.xlane.f32.xlu0 %v3588
  %v3590 = vpop.xlane.xlu0 %3589
  %v3591 = vsel %vm3569, %v3568, -inf
  %3592 = vmax.xlane.f32.xlu0 %v3591
  %v3593 = vpop.xlane.xlu0 %3592
  %v3594 = vsub.f32 %v3472, %v3572
  %v3595 = vsub.f32 %v3477, %v3575
  %v3596 = vsub.f32 %v3482, %v3578
  %v3597 = vsub.f32 %v3487, %v3581
  %v3598 = vsub.f32 %v3492, %v3584
  %v3599 = vsub.f32 %v3497, %v3587
  %v3600 = vsub.f32 %v3502, %v3590
  %v3601 = vsub.f32 %v3507, %v3593
  %v3602 = vmul.f32 %v3594, 1.442695
  %v3603 = vpow.pop %v3602
  %v3604 = vmul.f32 %v3595, 1.442695
  %v3605 = vpow.pop %v3604
  %v3606 = vmul.f32 %v3596, 1.442695
  %v3607 = vpow.pop %v3606
  %v3608 = vmul.f32 %v3597, 1.442695
  %v3609 = vpow.pop %v3608
  %v3610 = vmul.f32 %v3598, 1.442695
  %v3611 = vpow.pop %v3610
  %v3612 = vmul.f32 %v3599, 1.442695
  %v3613 = vpow.pop %v3612
  %v3614 = vmul.f32 %v3600, 1.442695
  %v3615 = vpow.pop %v3614
  %v3616 = vmul.f32 %v3601, 1.442695
  %v3617 = vpow.pop %v3616
  %v3618 = vsel %vm3560, %v3603, 0.0
  %v3619 = vsel %vm3560, %v3605, 0.0
  %v3620 = vsel %vm3560, %v3607, 0.0
  %v3621 = vsel %vm3560, %v3609, 0.0
  %v3622 = vsel %vm3560, %v3611, 0.0
  %v3623 = vsel %vm3560, %v3613, 0.0
  %v3624 = vsel %vm3560, %v3615, 0.0
  %v3625 = vsel %vm3560, %v3617, 0.0
  %v3626 = vsel %vm3569, %v3618, 0.0
  %3627 = vadd.xlane.f32.xlu0 %v3626
  %v3628 = vpop.xlane.xlu0 %3627
  %v3629 = vsel %vm3569, %v3619, 0.0
  %3630 = vadd.xlane.f32.xlu0 %v3629
  %v3631 = vpop.xlane.xlu0 %3630
  %v3632 = vsel %vm3569, %v3620, 0.0
  %3633 = vadd.xlane.f32.xlu0 %v3632
  %v3634 = vpop.xlane.xlu0 %3633
  %v3635 = vsel %vm3569, %v3621, 0.0
  %3636 = vadd.xlane.f32.xlu0 %v3635
  %v3637 = vpop.xlane.xlu0 %3636
  %v3638 = vsel %vm3569, %v3622, 0.0
  %3639 = vadd.xlane.f32.xlu0 %v3638
  %v3640 = vpop.xlane.xlu0 %3639
  %v3641 = vsel %vm3569, %v3623, 0.0
  %3642 = vadd.xlane.f32.xlu0 %v3641
  %v3643 = vpop.xlane.xlu0 %3642
  %v3644 = vsel %vm3569, %v3624, 0.0
  %3645 = vadd.xlane.f32.xlu0 %v3644
  %v3646 = vpop.xlane.xlu0 %3645
  %v3647 = vsel %vm3569, %v3625, 0.0
  %3648 = vadd.xlane.f32.xlu0 %v3647
  %v3649 = vpop.xlane.xlu0 %3648
  %v3650 = vrcp.pop %v3628
  %v3651 = vmul.f32 %v3603, %v3650
  %v3652 = vrcp.pop %v3631
  %v3653 = vmul.f32 %v3605, %v3652
  %v3654 = vrcp.pop %v3634
  %v3655 = vmul.f32 %v3607, %v3654
  %v3656 = vrcp.pop %v3637
  %v3657 = vmul.f32 %v3609, %v3656
  %v3658 = vrcp.pop %v3640
  %v3659 = vmul.f32 %v3611, %v3658
  %v3660 = vrcp.pop %v3643
  %v3661 = vmul.f32 %v3613, %v3660
  %v3662 = vrcp.pop %v3646
  %v3663 = vmul.f32 %v3615, %v3662
  %v3664 = vrcp.pop %v3649
  %v3665 = vmul.f32 %v3617, %v3664
  %v3666 = vsel %vm3560, %v3651, %v3543
  %v3667 = vsel %vm3560, %v3653, %v3545
  %v3668 = vsel %vm3560, %v3655, %v3547
  %v3669 = vsel %vm3560, %v3657, %v3549
  %v3670 = vsel %vm3560, %v3659, %v3551
  %v3671 = vsel %vm3560, %v3661, %v3553
  %v3672 = vsel %vm3560, %v3663, %v3555
  %v3673 = vsel %vm3560, %v3665, %v3557
  %v3674 = vld [vmem:[%s0] sm:$0xff]
  %v3675 = vld [vmem:[%s0 + $0x8] sm:$0xff]
  %v3676 = vld [vmem:[%s0 + $0x10] sm:$0xff]
  %v3677 = vld [vmem:[%s0 + $0x18] sm:$0xff]
  %v3678 = vld [vmem:[%s0 + $0x20] sm:$0xff]
  %v3679 = vld [vmem:[%s0 + $0x28] sm:$0xff]
  %v3680 = vld [vmem:[%s0 + $0x30] sm:$0xff]
  %v3681 = vld [vmem:[%s0 + $0x38] sm:$0xff]
  %3683 = vset.pattern.permute.xlu0 20
  %3684 = vperm.xlu0 %3683, %v3674
  %v3685 = vpop.permute.xlu0 %3684
  %3688 = vset.pattern.permute.xlu0 20
  %3689 = vperm.xlu0 %3688, %v3675
  %v3690 = vpop.permute.xlu0 %3689
  %3693 = vset.pattern.permute.xlu0 20
  %3694 = vperm.xlu0 %3693, %v3676
  %v3695 = vpop.permute.xlu0 %3694
  %3698 = vset.pattern.permute.xlu0 20
  %3699 = vperm.xlu0 %3698, %v3677
  %v3700 = vpop.permute.xlu0 %3699
  %3703 = vset.pattern.permute.xlu0 20
  %3704 = vperm.xlu0 %3703, %v3678
  %v3705 = vpop.permute.xlu0 %3704
  %3708 = vset.pattern.permute.xlu0 20
  %3709 = vperm.xlu0 %3708, %v3679
  %v3710 = vpop.permute.xlu0 %3709
  %3713 = vset.pattern.permute.xlu0 20
  %3714 = vperm.xlu0 %3713, %v3680
  %v3715 = vpop.permute.xlu0 %3714
  %3718 = vset.pattern.permute.xlu0 20
  %3719 = vperm.xlu0 %3718, %v3681
  %v3720 = vpop.permute.xlu0 %3719
  %v3722 = vsel %vm285, %v3685, 0.0
  %v3723 = vsel %vm285, %v3690, 0.0
  %v3724 = vsel %vm285, %v3695, 0.0
  %v3725 = vsel %vm285, %v3700, 0.0
  %v3726 = vsel %vm285, %v3705, 0.0
  %v3727 = vsel %vm285, %v3710, 0.0
  %v3728 = vsel %vm285, %v3715, 0.0
  %v3729 = vsel %vm285, %v3720, 0.0
  %v3730 = vadd.f32 %v3666, %v3722
  %v3731 = vadd.f32 %v3667, %v3723
  %v3732 = vadd.f32 %v3668, %v3724
  %v3733 = vadd.f32 %v3669, %v3725
  %v3734 = vadd.f32 %v3670, %v3726
  %v3735 = vadd.f32 %v3671, %v3727
  %v3736 = vadd.f32 %v3672, %v3728
  %v3737 = vadd.f32 %v3673, %v3729
  %3738 = vst.msk [vmem:[%s8] sm:$0xff] %vm3569, %v3730
  %3739 = vst.msk [vmem:[%s8 + $0x8] sm:$0xff] %vm3569, %v3731
  %3740 = vst.msk [vmem:[%s8 + $0x10] sm:$0xff] %vm3569, %v3732
  %3741 = vst.msk [vmem:[%s8 + $0x18] sm:$0xff] %vm3569, %v3733
  %3742 = vst.msk [vmem:[%s8 + $0x20] sm:$0xff] %vm3569, %v3734
  %3743 = vst.msk [vmem:[%s8 + $0x28] sm:$0xff] %vm3569, %v3735
  %3744 = vst.msk [vmem:[%s8 + $0x30] sm:$0xff] %vm3569, %v3736
  %3745 = vst.msk [vmem:[%s8 + $0x38] sm:$0xff] %vm3569, %v3737
  // Predicated region
  $region30: #{decoder_forward.1} parent=0 // pred_check
    _
  $region31: #{decoder_forward.1} parent=0 // pred_check_branch
    %3747 = sbr.rel (0) target = $region33
  $region32: #{decoder_forward.1} parent=0 // pred_region
    _
  $region33: #{decoder_forward.1} parent=0 // pred_fallthru
    _
  // Predicated region
  $region34: #{decoder_forward.1} parent=0 // pred_check
    _
  $region35: #{decoder_forward.1} parent=0 // pred_check_branch
    %3749 = sbr.rel (0) target = $region37
  $region36: #{decoder_forward.1} parent=0 // pred_region
    _
  $region37: #{decoder_forward.1} parent=0 // pred_fallthru
    _
  // Predicated region
  $region38: #{decoder_forward.1} parent=0 // pred_check
    _
  $region39: #{decoder_forward.1} parent=0 // pred_check_branch
    %3751 = sbr.rel (0) target = $region41
  $region40: #{decoder_forward.1} parent=0 // pred_region
    _
  $region41: #{decoder_forward.1} parent=0 // pred_fallthru
    _
  // Predicated region
  $region42: #{decoder_forward.1} parent=0 // pred_check
    _
  $region43: #{decoder_forward.1} parent=0 // pred_check_branch
    %3753 = sbr.rel (0) target = $region45
  $region44: #{decoder_forward.1} parent=0 // pred_region
    _
  $region45: #{decoder_forward.1} parent=0 // pred_fallthru
    _

</llo_original>
